<compile_context>
chip_gen: v5e
topology: v5e:2x2
jax: 0.10.0
libtpu: 0.0.40
codegen_flags: <defaults>
</compile_context>

<pallas_src>
import jax
import jax.numpy as jnp
from jax.experimental import pallas as pl
from jax.experimental.pallas import tpu as pltpu


BATCH_BLOCK = 8  # one f32 sublane tile of padded batch rows per grid step


# -----------------------------------------------------------------------------
# Fused kernel factory: stacked GRU (fused-gate matmuls, unrolled time loop)
# followed by the classifier MLP, all in one kernel / one VMEM residency.
# PyTorch gate order in the packed weights is [r, z, n].
# -----------------------------------------------------------------------------
def _make_fused_kernel(T, BB, H, n_layers, n_clf):
    H2 = 2 * H
    H3 = 3 * H

    def kernel(*refs):
        # refs: x, (wih, whh, brow, bhhn) * n_layers, (w_i, b_i) * n_clf, out
        x_ref = refs[0]                                   # (T, BB, C), time-major
        layer_refs = [refs[1 + 4 * l: 5 + 4 * l] for l in range(n_layers)]
        clf_off = 1 + 4 * n_layers
        clf_refs = refs[clf_off: clf_off + 2 * n_clf]
        out_ref = refs[-1]                                # (BB, n_classes)

        def sigmoid(v):                                   # exact: 1 EUP tanh + FMA
            return 0.5 * jnp.tanh(0.5 * v) + 0.5

        # ---- Hoisted once: weight loads and bias broadcasts --------------------
        wih = [layer_refs[l][0][...] for l in range(n_layers)]   # (In_l, 3H)
        whh = [layer_refs[l][1][...] for l in range(n_layers)]   # (H,    3H)
        brow = [jnp.broadcast_to(layer_refs[l][2][...], (BB, H3))
                for l in range(n_layers)]                        # [b_r+b_hr|b_z+b_hz|b_in]
        bhhn = [jnp.broadcast_to(layer_refs[l][3][...], (BB, H))
                for l in range(n_layers)]                        # b_hn (inside r*(...))

        hs = [jnp.zeros((BB, H), jnp.float32) for _ in range(n_layers)]

        # ---- Fully unrolled time loop, all layers interleaved ------------------
        # T is small & static; a Python loop gives the scheduler full visibility.
        # Layer-0 gi depends only on x_ref[t], so it sits off the serial h-chain.
        for t in range(T):
            for l in range(n_layers):
                x_in = x_ref[t] if l == 0 else hs[l - 1]
                h_prev = hs[l]
                gi = jnp.dot(x_in, wih[l],
                             preferred_element_type=jnp.float32) + brow[l]   # (BB,3H)
                gh = jnp.dot(h_prev, whh[l],
                             preferred_element_type=jnp.float32)             # (BB,3H)
                rz = sigmoid(gi[:, :H2] + gh[:, :H2])                        # r|z lanes
                r = rz[:, :H]
                z = rz[:, H:H2]
                n = jnp.tanh(gi[:, H2:H3] + r * (gh[:, H2:H3] + bhhn[l]))
                hs[l] = n + z * (h_prev - n)                # == (1-z)*n + z*h_prev

        # ---- Classifier MLP on h_n[-1] (logits only) ---------------------------
        h = hs[-1]
        for i in range(n_clf):
            w = clf_refs[2 * i][...]                      # (in_i, out_i)
            b = clf_refs[2 * i + 1][...]                  # (1, out_i)
            h = jnp.dot(h, w, preferred_element_type=jnp.float32) + b
            if i < n_clf - 1:
                h = jnp.maximum(h, 0.0)                   # ReLU on hidden layers only
        out_ref[...] = h

    return kernel


# -----------------------------------------------------------------------------
# One-time parameter preparation (runs eagerly at init, NOT inside jit).
# -----------------------------------------------------------------------------
def prepare_gru_layer(w_ih, w_hh, b_ih, b_hh):
    """PyTorch-packed GRU weights -> lane-fused (In,3H)/(H,3H), biases folded."""
    H = w_hh.shape[1]
    wih = w_ih.T                                           # (In, 3H), columns [r|z|n]
    whh = w_hh.T                                           # (H,  3H)
    brow = jnp.concatenate([b_ih[:2 * H] + b_hh[:2 * H],   # folded r,z biases
                            b_ih[2 * H:]]).reshape(1, 3 * H)  # input-side n bias
    bhhn = b_hh[2 * H:].reshape(1, H)                      # hidden-side n bias
    return wih, whh, brow, bhhn


def prepare_classifier_params(weights, biases):
    """weights[i]: (out_i, in_i) -> (in_i, out_i); biases[i]: (out_i,) -> (1, out_i)."""
    return [(w.T, b.reshape(1, -1)) for w, b in zip(weights, biases)]


# -----------------------------------------------------------------------------
# Full assembly forward (GRU path): x (B, C, T) -> single fused pallas_call.
# -----------------------------------------------------------------------------
def rnn_dense_assembly_forward(x_bct, gru_prepped, clf_prepped):
    B, C, T = x_bct.shape
    H = gru_prepped[0][1].shape[0]                          # whh is (H, 3H)
    n_layers = len(gru_prepped)
    n_clf = len(clf_prepped)
    n_classes = clf_prepped[-1][0].shape[1]

    BB = BATCH_BLOCK
    B_pad = ((B + BB - 1) // BB) * BB

    # permute(0, 2, 1) -> batch_first (B, T, C) semantics; we feed the kernel the
    # time-major (T, B_pad, C) layout so every per-t read is a whole-tile index.
    x_tbc = jnp.transpose(x_bct, (2, 0, 1)).astype(jnp.float32)
    if B_pad != B:
        x_tbc = jnp.pad(x_tbc, ((0, 0), (0, B_pad - B), (0, 0)))

    args = [x_tbc]
    in_specs = [pl.BlockSpec((T, BB, C), lambda i: (0, i, 0))]
    for (wihp, whhp, browp, bhhnp) in gru_prepped:
        args += [wihp, whhp, browp, bhhnp]
        in_specs += [pl.BlockSpec(wihp.shape, lambda i: (0, 0)),
                     pl.BlockSpec(whhp.shape, lambda i: (0, 0)),
                     pl.BlockSpec(browp.shape, lambda i: (0, 0)),
                     pl.BlockSpec(bhhnp.shape, lambda i: (0, 0))]
    for (w, b) in clf_prepped:
        args += [w, b]
        in_specs += [pl.BlockSpec(w.shape, lambda i: (0, 0)),
                     pl.BlockSpec(b.shape, lambda i: (0, 0))]

    # Advisory cost estimate so XLA can schedule around the (few-us) custom call.
    flops = 0
    for (wihp, whhp, _, _) in gru_prepped:
        flops += 2 * T * B_pad * (wihp.shape[0] * wihp.shape[1]
                                  + whhp.shape[0] * whhp.shape[1])
    for (w, _) in clf_prepped:
        flops += 2 * B_pad * w.shape[0] * w.shape[1]
    param_bytes = sum(int(a.size) * 4 for a in args[1:])
    bytes_accessed = int(x_tbc.size) * 4 + B_pad * n_classes * 4 + param_bytes
    cost = pl.CostEstimate(flops=int(flops),
                           transcendentals=int(T * n_layers * B_pad * 3 * H),
                           bytes_accessed=int(bytes_accessed))

    out = pl.pallas_call(
        _make_fused_kernel(T, BB, H, n_layers, n_clf),
        out_shape=jax.ShapeDtypeStruct((B_pad, n_classes), jnp.float32),
        grid=(B_pad // BB,),
        in_specs=in_specs,
        out_specs=pl.BlockSpec((BB, n_classes), lambda i: (i, 0)),
        compiler_params=pltpu.CompilerParams(dimension_semantics=("parallel",)),
        cost_estimate=cost,
    )(*args)
    return out[:B]


# -----------------------------------------------------------------------------
# Deterministic parameter initialization (PyTorch-style uniform(-1/sqrt(H), 1/sqrt(H)))
# -----------------------------------------------------------------------------
def init_gru_params(key, input_size, hidden_size, num_layers):
    params = []
    k = 1.0 / jnp.sqrt(hidden_size)
    for layer in range(num_layers):
        in_sz = input_size if layer == 0 else hidden_size
        key, k1, k2, k3, k4 = jax.random.split(key, 5)
        w_ih = jax.random.uniform(k1, (3 * hidden_size, in_sz), jnp.float32, -k, k)
        w_hh = jax.random.uniform(k2, (3 * hidden_size, hidden_size), jnp.float32, -k, k)
        b_ih = jax.random.uniform(k3, (3 * hidden_size,), jnp.float32, -k, k)
        b_hh = jax.random.uniform(k4, (3 * hidden_size,), jnp.float32, -k, k)
        params.append((w_ih, w_hh, b_ih, b_hh))
    return params, key


def init_classifier_params(key, n_input_features, units_per_layer, n_classes):
    dims = [n_input_features] + list(units_per_layer) + [n_classes]
    weights, biases = [], []
    for i in range(len(dims) - 1):
        fan_in, fan_out = dims[i], dims[i + 1]
        bound = 1.0 / jnp.sqrt(fan_in)
        key, k1, k2 = jax.random.split(key, 3)
        weights.append(jax.random.uniform(k1, (fan_out, fan_in), jnp.float32, -bound, bound))
        biases.append(jax.random.uniform(k2, (fan_out,), jnp.float32, -bound, bound))
    return weights, biases, key


# -----------------------------------------------------------------------------
# Pure-JAX reference (PyTorch GRU + Linear/ReLU semantics) for correctness check.
# -----------------------------------------------------------------------------
def reference_forward(x_bct, gru_params, clf_w, clf_b):
    x = jnp.transpose(x_bct, (0, 2, 1)).astype(jnp.float32)   # (B, T, C), batch_first
    B, T, _ = x.shape
    seq = x
    h = None
    for (w_ih, w_hh, b_ih, b_hh) in gru_params:
        H = w_hh.shape[1]
        h = jnp.zeros((B, H), jnp.float32)
        outs = []
        for t in range(T):
            x_t = seq[:, t, :]
            gi = x_t @ w_ih.T + b_ih
            gh = h @ w_hh.T + b_hh
            i_r, i_z, i_n = gi[:, :H], gi[:, H:2 * H], gi[:, 2 * H:]
            h_r, h_z, h_n = gh[:, :H], gh[:, H:2 * H], gh[:, 2 * H:]
            r = jax.nn.sigmoid(i_r + h_r)
            z = jax.nn.sigmoid(i_z + h_z)
            n = jnp.tanh(i_n + r * h_n)
            h = (1.0 - z) * n + z * h
            outs.append(h)
        seq = jnp.stack(outs, axis=1)
    out = h                                                    # h_n[-1]
    for i, (w, b) in enumerate(zip(clf_w, clf_b)):
        out = out @ w.T + b
        if i < len(clf_w) - 1:
            out = jnp.maximum(out, 0.0)
    return out


if __name__ == "__main__":
    # Model config
    B, C, T = 2, 4, 16            # batch, input channels, sequence length
    hidden_size = 32
    n_seq_encoder_layers = 2
    units_per_layer = [32, 16]
    n_classes = 5
    layer_type = "gru"
    assert layer_type == "gru"    # TODO(synk): 'lstm' path not implemented

    key = jax.random.PRNGKey(0)
    key, xkey = jax.random.split(key)
    x = jax.random.normal(xkey, (B, C, T), jnp.float32)        # PyTorch layout (B, C, T)

    gru_params, key = init_gru_params(key, C, hidden_size, n_seq_encoder_layers)
    clf_w, clf_b, key = init_classifier_params(key, hidden_size, units_per_layer, n_classes)

    # One-time parameter prep (gate fusion, transposes, bias folding) — outside jit.
    gru_prepped = [prepare_gru_layer(*p) for p in gru_params]
    clf_prepped = prepare_classifier_params(clf_w, clf_b)

    fwd = jax.jit(rnn_dense_assembly_forward)
    logits = fwd(x, gru_prepped, clf_prepped)
    jax.block_until_ready(logits)

    assert logits.shape == (B, n_classes), logits.shape
    assert bool(jnp.all(jnp.isfinite(logits)))

    # Correctness vs. pure-JAX PyTorch-semantics reference.
    ref = reference_forward(x, gru_params, clf_w, clf_b)
    assert jnp.allclose(logits, ref, rtol=1e-4, atol=1e-4), (logits, ref)

    print("KERNEL_OK")
</pallas_src>

<mosaic_0001>
module attributes {stable_mosaic.version = 11 : i64} {
  func.func @kernel(%arg0: i32, %arg1: memref<16x8x4xf32, #tpu.memory_space<vmem>>, %arg2: memref<4x96xf32, #tpu.memory_space<vmem>>, %arg3: memref<32x96xf32, #tpu.memory_space<vmem>>, %arg4: memref<1x96xf32, #tpu.memory_space<vmem>>, %arg5: memref<1x32xf32, #tpu.memory_space<vmem>>, %arg6: memref<32x96xf32, #tpu.memory_space<vmem>>, %arg7: memref<32x96xf32, #tpu.memory_space<vmem>>, %arg8: memref<1x96xf32, #tpu.memory_space<vmem>>, %arg9: memref<1x32xf32, #tpu.memory_space<vmem>>, %arg10: memref<32x32xf32, #tpu.memory_space<vmem>>, %arg11: memref<1x32xf32, #tpu.memory_space<vmem>>, %arg12: memref<32x16xf32, #tpu.memory_space<vmem>>, %arg13: memref<1x16xf32, #tpu.memory_space<vmem>>, %arg14: memref<16x5xf32, #tpu.memory_space<vmem>>, %arg15: memref<1x5xf32, #tpu.memory_space<vmem>>, %arg16: memref<8x5xf32, #tpu.memory_space<vmem>>) attributes {dimension_semantics = [#tpu.dimension_semantics<parallel>], iteration_bounds = array<i64: 1>, scalar_prefetch = 0 : i64, scratch_operands = 0 : i64, tpu.core_type = #tpu.core_type<tc>, window_params = [{transform_indices = @transform_0, window_bounds = array<i64: 16, 8, 4>}, {pipeline_mode = #tpu.pipeline_mode<synchronous>, transform_indices = @transform_1, window_bounds = array<i64: 4, 96>}, {pipeline_mode = #tpu.pipeline_mode<synchronous>, transform_indices = @transform_2, window_bounds = array<i64: 32, 96>}, {pipeline_mode = #tpu.pipeline_mode<synchronous>, transform_indices = @transform_3, window_bounds = array<i64: 1, 96>}, {pipeline_mode = #tpu.pipeline_mode<synchronous>, transform_indices = @transform_4, window_bounds = array<i64: 1, 32>}, {pipeline_mode = #tpu.pipeline_mode<synchronous>, transform_indices = @transform_5, window_bounds = array<i64: 32, 96>}, {pipeline_mode = #tpu.pipeline_mode<synchronous>, transform_indices = @transform_6, window_bounds = array<i64: 32, 96>}, {pipeline_mode = #tpu.pipeline_mode<synchronous>, transform_indices = @transform_7, window_bounds = array<i64: 1, 96>}, {pipeline_mode = #tpu.pipeline_mode<synchronous>, transform_indices = @transform_8, window_bounds = array<i64: 1, 32>}, {pipeline_mode = #tpu.pipeline_mode<synchronous>, transform_indices = @transform_9, window_bounds = array<i64: 32, 32>}, {pipeline_mode = #tpu.pipeline_mode<synchronous>, transform_indices = @transform_10, window_bounds = array<i64: 1, 32>}, {pipeline_mode = #tpu.pipeline_mode<synchronous>, transform_indices = @transform_11, window_bounds = array<i64: 32, 16>}, {pipeline_mode = #tpu.pipeline_mode<synchronous>, transform_indices = @transform_12, window_bounds = array<i64: 1, 16>}, {pipeline_mode = #tpu.pipeline_mode<synchronous>, transform_indices = @transform_13, window_bounds = array<i64: 16, 5>}, {pipeline_mode = #tpu.pipeline_mode<synchronous>, transform_indices = @transform_14, window_bounds = array<i64: 1, 5>}, {transform_indices = @transform_15, window_bounds = array<i64: 8, 5>}]} {
    %c0 = arith.constant 0 : index
    %c0_0 = arith.constant 0 : index
    %0 = vector.load %arg2[%c0, %c0_0] : memref<4x96xf32, #tpu.memory_space<vmem>>, vector<4x96xf32>
    %c0_1 = arith.constant 0 : index
    %c0_2 = arith.constant 0 : index
    %1 = vector.load %arg6[%c0_1, %c0_2] : memref<32x96xf32, #tpu.memory_space<vmem>>, vector<32x96xf32>
    %c0_3 = arith.constant 0 : index
    %c0_4 = arith.constant 0 : index
    %2 = vector.load %arg3[%c0_3, %c0_4] : memref<32x96xf32, #tpu.memory_space<vmem>>, vector<32x96xf32>
    %c0_5 = arith.constant 0 : index
    %c0_6 = arith.constant 0 : index
    %3 = vector.load %arg7[%c0_5, %c0_6] : memref<32x96xf32, #tpu.memory_space<vmem>>, vector<32x96xf32>
    %c0_7 = arith.constant 0 : index
    %c0_8 = arith.constant 0 : index
    %4 = vector.load %arg4[%c0_7, %c0_8] : memref<1x96xf32, #tpu.memory_space<vmem>>, vector<1x96xf32>
    %5 = vector.shape_cast %4 : vector<1x96xf32> to vector<1x96xf32>
    %6 = vector.broadcast %5 : vector<1x96xf32> to vector<8x96xf32>
    %c0_9 = arith.constant 0 : index
    %c0_10 = arith.constant 0 : index
    %7 = vector.load %arg8[%c0_9, %c0_10] : memref<1x96xf32, #tpu.memory_space<vmem>>, vector<1x96xf32>
    %8 = vector.shape_cast %7 : vector<1x96xf32> to vector<1x96xf32>
    %9 = vector.broadcast %8 : vector<1x96xf32> to vector<8x96xf32>
    %c0_11 = arith.constant 0 : index
    %c0_12 = arith.constant 0 : index
    %10 = vector.load %arg5[%c0_11, %c0_12] : memref<1x32xf32, #tpu.memory_space<vmem>>, vector<1x32xf32>
    %11 = vector.shape_cast %10 : vector<1x32xf32> to vector<1x32xf32>
    %12 = vector.broadcast %11 : vector<1x32xf32> to vector<8x32xf32>
    %c0_13 = arith.constant 0 : index
    %c0_14 = arith.constant 0 : index
    %13 = vector.load %arg9[%c0_13, %c0_14] : memref<1x32xf32, #tpu.memory_space<vmem>>, vector<1x32xf32>
    %14 = vector.shape_cast %13 : vector<1x32xf32> to vector<1x32xf32>
    %15 = vector.broadcast %14 : vector<1x32xf32> to vector<8x32xf32>
    %cst = arith.constant 0.000000e+00 : f32
    %16 = vector.broadcast %cst : f32 to vector<8x32xf32>
    %cst_15 = arith.constant 0.000000e+00 : f32
    %17 = vector.broadcast %cst_15 : f32 to vector<8x32xf32>
    %c0_16 = arith.constant 0 : index
    %c0_17 = arith.constant 0 : index
    %c0_18 = arith.constant 0 : index
    %18 = vector.load %arg1[%c0_16, %c0_17, %c0_18] : memref<16x8x4xf32, #tpu.memory_space<vmem>>, vector<1x8x4xf32>
    %19 = vector.shape_cast %18 : vector<1x8x4xf32> to vector<8x4xf32>
    %cst_19 = arith.constant dense<0.000000e+00> : vector<8x96xf32>
    %20 = tpu.matmul %19, %0, %cst_19 {dimension_numbers = #tpu.dot_dimension_numbers<[1], [0], [0], [1], [0, 0, 1, 1], [], []>} : vector<8x4xf32>, vector<4x96xf32>, vector<8x96xf32> -> vector<8x96xf32>
    %21 = arith.addf %20, %6 : vector<8x96xf32>
    %cst_20 = arith.constant dense<0.000000e+00> : vector<8x96xf32>
    %22 = tpu.matmul %16, %2, %cst_20 {dimension_numbers = #tpu.dot_dimension_numbers<[1], [0], [0], [1], [0, 0, 1, 1], [], []>} : vector<8x32xf32>, vector<32x96xf32>, vector<8x96xf32> -> vector<8x96xf32>
    %23 = vector.extract_strided_slice %21 {offsets = [0, 0], sizes = [8, 64], strides = [1, 1]} : vector<8x96xf32> to vector<8x64xf32>
    %24 = vector.extract_strided_slice %22 {offsets = [0, 0], sizes = [8, 64], strides = [1, 1]} : vector<8x96xf32> to vector<8x64xf32>
    %25 = arith.addf %23, %24 : vector<8x64xf32>
    %cst_21 = arith.constant 5.000000e-01 : f32
    %26 = vector.broadcast %cst_21 : f32 to vector<8x64xf32>
    %27 = arith.mulf %26, %25 : vector<8x64xf32>
    %28 = math.tanh %27 : vector<8x64xf32>
    %cst_22 = arith.constant 5.000000e-01 : f32
    %29 = vector.broadcast %cst_22 : f32 to vector<8x64xf32>
    %30 = arith.mulf %29, %28 : vector<8x64xf32>
    %cst_23 = arith.constant 5.000000e-01 : f32
    %31 = vector.broadcast %cst_23 : f32 to vector<8x64xf32>
    %32 = arith.addf %30, %31 : vector<8x64xf32>
    %33 = vector.extract_strided_slice %32 {offsets = [0, 0], sizes = [8, 32], strides = [1, 1]} : vector<8x64xf32> to vector<8x32xf32>
    %34 = vector.extract_strided_slice %32 {offsets = [0, 32], sizes = [8, 32], strides = [1, 1]} : vector<8x64xf32> to vector<8x32xf32>
    %35 = vector.extract_strided_slice %21 {offsets = [0, 64], sizes = [8, 32], strides = [1, 1]} : vector<8x96xf32> to vector<8x32xf32>
    %36 = vector.extract_strided_slice %22 {offsets = [0, 64], sizes = [8, 32], strides = [1, 1]} : vector<8x96xf32> to vector<8x32xf32>
    %37 = arith.addf %36, %12 : vector<8x32xf32>
    %38 = arith.mulf %33, %37 : vector<8x32xf32>
    %39 = arith.addf %35, %38 : vector<8x32xf32>
    %40 = math.tanh %39 : vector<8x32xf32>
    %41 = arith.subf %16, %40 : vector<8x32xf32>
    %42 = arith.mulf %34, %41 : vector<8x32xf32>
    %43 = arith.addf %40, %42 : vector<8x32xf32>
    %cst_24 = arith.constant dense<0.000000e+00> : vector<8x96xf32>
    %44 = tpu.matmul %43, %1, %cst_24 {dimension_numbers = #tpu.dot_dimension_numbers<[1], [0], [0], [1], [0, 0, 1, 1], [], []>} : vector<8x32xf32>, vector<32x96xf32>, vector<8x96xf32> -> vector<8x96xf32>
    %45 = arith.addf %44, %9 : vector<8x96xf32>
    %cst_25 = arith.constant dense<0.000000e+00> : vector<8x96xf32>
    %46 = tpu.matmul %17, %3, %cst_25 {dimension_numbers = #tpu.dot_dimension_numbers<[1], [0], [0], [1], [0, 0, 1, 1], [], []>} : vector<8x32xf32>, vector<32x96xf32>, vector<8x96xf32> -> vector<8x96xf32>
    %47 = vector.extract_strided_slice %45 {offsets = [0, 0], sizes = [8, 64], strides = [1, 1]} : vector<8x96xf32> to vector<8x64xf32>
    %48 = vector.extract_strided_slice %46 {offsets = [0, 0], sizes = [8, 64], strides = [1, 1]} : vector<8x96xf32> to vector<8x64xf32>
    %49 = arith.addf %47, %48 : vector<8x64xf32>
    %cst_26 = arith.constant 5.000000e-01 : f32
    %50 = vector.broadcast %cst_26 : f32 to vector<8x64xf32>
    %51 = arith.mulf %50, %49 : vector<8x64xf32>
    %52 = math.tanh %51 : vector<8x64xf32>
    %cst_27 = arith.constant 5.000000e-01 : f32
    %53 = vector.broadcast %cst_27 : f32 to vector<8x64xf32>
    %54 = arith.mulf %53, %52 : vector<8x64xf32>
    %cst_28 = arith.constant 5.000000e-01 : f32
    %55 = vector.broadcast %cst_28 : f32 to vector<8x64xf32>
    %56 = arith.addf %54, %55 : vector<8x64xf32>
    %57 = vector.extract_strided_slice %56 {offsets = [0, 0], sizes = [8, 32], strides = [1, 1]} : vector<8x64xf32> to vector<8x32xf32>
    %58 = vector.extract_strided_slice %56 {offsets = [0, 32], sizes = [8, 32], strides = [1, 1]} : vector<8x64xf32> to vector<8x32xf32>
    %59 = vector.extract_strided_slice %45 {offsets = [0, 64], sizes = [8, 32], strides = [1, 1]} : vector<8x96xf32> to vector<8x32xf32>
    %60 = vector.extract_strided_slice %46 {offsets = [0, 64], sizes = [8, 32], strides = [1, 1]} : vector<8x96xf32> to vector<8x32xf32>
    %61 = arith.addf %60, %15 : vector<8x32xf32>
    %62 = arith.mulf %57, %61 : vector<8x32xf32>
    %63 = arith.addf %59, %62 : vector<8x32xf32>
    %64 = math.tanh %63 : vector<8x32xf32>
    %65 = arith.subf %17, %64 : vector<8x32xf32>
    %66 = arith.mulf %58, %65 : vector<8x32xf32>
    %67 = arith.addf %64, %66 : vector<8x32xf32>
    %c1 = arith.constant 1 : index
    %c0_29 = arith.constant 0 : index
    %c0_30 = arith.constant 0 : index
    %68 = vector.load %arg1[%c1, %c0_29, %c0_30] : memref<16x8x4xf32, #tpu.memory_space<vmem>>, vector<1x8x4xf32>
    %69 = vector.shape_cast %68 : vector<1x8x4xf32> to vector<8x4xf32>
    %cst_31 = arith.constant dense<0.000000e+00> : vector<8x96xf32>
    %70 = tpu.matmul %69, %0, %cst_31 {dimension_numbers = #tpu.dot_dimension_numbers<[1], [0], [0], [1], [0, 0, 1, 1], [], []>} : vector<8x4xf32>, vector<4x96xf32>, vector<8x96xf32> -> vector<8x96xf32>
    %71 = arith.addf %70, %6 : vector<8x96xf32>
    %cst_32 = arith.constant dense<0.000000e+00> : vector<8x96xf32>
    %72 = tpu.matmul %43, %2, %cst_32 {dimension_numbers = #tpu.dot_dimension_numbers<[1], [0], [0], [1], [0, 0, 1, 1], [], []>} : vector<8x32xf32>, vector<32x96xf32>, vector<8x96xf32> -> vector<8x96xf32>
    %73 = vector.extract_strided_slice %71 {offsets = [0, 0], sizes = [8, 64], strides = [1, 1]} : vector<8x96xf32> to vector<8x64xf32>
    %74 = vector.extract_strided_slice %72 {offsets = [0, 0], sizes = [8, 64], strides = [1, 1]} : vector<8x96xf32> to vector<8x64xf32>
    %75 = arith.addf %73, %74 : vector<8x64xf32>
    %cst_33 = arith.constant 5.000000e-01 : f32
    %76 = vector.broadcast %cst_33 : f32 to vector<8x64xf32>
    %77 = arith.mulf %76, %75 : vector<8x64xf32>
    %78 = math.tanh %77 : vector<8x64xf32>
    %cst_34 = arith.constant 5.000000e-01 : f32
    %79 = vector.broadcast %cst_34 : f32 to vector<8x64xf32>
    %80 = arith.mulf %79, %78 : vector<8x64xf32>
    %cst_35 = arith.constant 5.000000e-01 : f32
    %81 = vector.broadcast %cst_35 : f32 to vector<8x64xf32>
    %82 = arith.addf %80, %81 : vector<8x64xf32>
    %83 = vector.extract_strided_slice %82 {offsets = [0, 0], sizes = [8, 32], strides = [1, 1]} : vector<8x64xf32> to vector<8x32xf32>
    %84 = vector.extract_strided_slice %82 {offsets = [0, 32], sizes = [8, 32], strides = [1, 1]} : vector<8x64xf32> to vector<8x32xf32>
    %85 = vector.extract_strided_slice %71 {offsets = [0, 64], sizes = [8, 32], strides = [1, 1]} : vector<8x96xf32> to vector<8x32xf32>
    %86 = vector.extract_strided_slice %72 {offsets = [0, 64], sizes = [8, 32], strides = [1, 1]} : vector<8x96xf32> to vector<8x32xf32>
    %87 = arith.addf %86, %12 : vector<8x32xf32>
    %88 = arith.mulf %83, %87 : vector<8x32xf32>
    %89 = arith.addf %85, %88 : vector<8x32xf32>
    %90 = math.tanh %89 : vector<8x32xf32>
    %91 = arith.subf %43, %90 : vector<8x32xf32>
    %92 = arith.mulf %84, %91 : vector<8x32xf32>
    %93 = arith.addf %90, %92 : vector<8x32xf32>
    %cst_36 = arith.constant dense<0.000000e+00> : vector<8x96xf32>
    %94 = tpu.matmul %93, %1, %cst_36 {dimension_numbers = #tpu.dot_dimension_numbers<[1], [0], [0], [1], [0, 0, 1, 1], [], []>} : vector<8x32xf32>, vector<32x96xf32>, vector<8x96xf32> -> vector<8x96xf32>
    %95 = arith.addf %94, %9 : vector<8x96xf32>
    %cst_37 = arith.constant dense<0.000000e+00> : vector<8x96xf32>
    %96 = tpu.matmul %67, %3, %cst_37 {dimension_numbers = #tpu.dot_dimension_numbers<[1], [0], [0], [1], [0, 0, 1, 1], [], []>} : vector<8x32xf32>, vector<32x96xf32>, vector<8x96xf32> -> vector<8x96xf32>
    %97 = vector.extract_strided_slice %95 {offsets = [0, 0], sizes = [8, 64], strides = [1, 1]} : vector<8x96xf32> to vector<8x64xf32>
    %98 = vector.extract_strided_slice %96 {offsets = [0, 0], sizes = [8, 64], strides = [1, 1]} : vector<8x96xf32> to vector<8x64xf32>
    %99 = arith.addf %97, %98 : vector<8x64xf32>
    %cst_38 = arith.constant 5.000000e-01 : f32
    %100 = vector.broadcast %cst_38 : f32 to vector<8x64xf32>
    %101 = arith.mulf %100, %99 : vector<8x64xf32>
    %102 = math.tanh %101 : vector<8x64xf32>
    %cst_39 = arith.constant 5.000000e-01 : f32
    %103 = vector.broadcast %cst_39 : f32 to vector<8x64xf32>
    %104 = arith.mulf %103, %102 : vector<8x64xf32>
    %cst_40 = arith.constant 5.000000e-01 : f32
    %105 = vector.broadcast %cst_40 : f32 to vector<8x64xf32>
    %106 = arith.addf %104, %105 : vector<8x64xf32>
    %107 = vector.extract_strided_slice %106 {offsets = [0, 0], sizes = [8, 32], strides = [1, 1]} : vector<8x64xf32> to vector<8x32xf32>
    %108 = vector.extract_strided_slice %106 {offsets = [0, 32], sizes = [8, 32], strides = [1, 1]} : vector<8x64xf32> to vector<8x32xf32>
    %109 = vector.extract_strided_slice %95 {offsets = [0, 64], sizes = [8, 32], strides = [1, 1]} : vector<8x96xf32> to vector<8x32xf32>
    %110 = vector.extract_strided_slice %96 {offsets = [0, 64], sizes = [8, 32], strides = [1, 1]} : vector<8x96xf32> to vector<8x32xf32>
    %111 = arith.addf %110, %15 : vector<8x32xf32>
    %112 = arith.mulf %107, %111 : vector<8x32xf32>
    %113 = arith.addf %109, %112 : vector<8x32xf32>
    %114 = math.tanh %113 : vector<8x32xf32>
    %115 = arith.subf %67, %114 : vector<8x32xf32>
    %116 = arith.mulf %108, %115 : vector<8x32xf32>
    %117 = arith.addf %114, %116 : vector<8x32xf32>
    %c2 = arith.constant 2 : index
    %c0_41 = arith.constant 0 : index
    %c0_42 = arith.constant 0 : index
    %118 = vector.load %arg1[%c2, %c0_41, %c0_42] : memref<16x8x4xf32, #tpu.memory_space<vmem>>, vector<1x8x4xf32>
    %119 = vector.shape_cast %118 : vector<1x8x4xf32> to vector<8x4xf32>
    %cst_43 = arith.constant dense<0.000000e+00> : vector<8x96xf32>
    %120 = tpu.matmul %119, %0, %cst_43 {dimension_numbers = #tpu.dot_dimension_numbers<[1], [0], [0], [1], [0, 0, 1, 1], [], []>} : vector<8x4xf32>, vector<4x96xf32>, vector<8x96xf32> -> vector<8x96xf32>
    %121 = arith.addf %120, %6 : vector<8x96xf32>
    %cst_44 = arith.constant dense<0.000000e+00> : vector<8x96xf32>
    %122 = tpu.matmul %93, %2, %cst_44 {dimension_numbers = #tpu.dot_dimension_numbers<[1], [0], [0], [1], [0, 0, 1, 1], [], []>} : vector<8x32xf32>, vector<32x96xf32>, vector<8x96xf32> -> vector<8x96xf32>
    %123 = vector.extract_strided_slice %121 {offsets = [0, 0], sizes = [8, 64], strides = [1, 1]} : vector<8x96xf32> to vector<8x64xf32>
    %124 = vector.extract_strided_slice %122 {offsets = [0, 0], sizes = [8, 64], strides = [1, 1]} : vector<8x96xf32> to vector<8x64xf32>
    %125 = arith.addf %123, %124 : vector<8x64xf32>
    %cst_45 = arith.constant 5.000000e-01 : f32
    %126 = vector.broadcast %cst_45 : f32 to vector<8x64xf32>
    %127 = arith.mulf %126, %125 : vector<8x64xf32>
    %128 = math.tanh %127 : vector<8x64xf32>
    %cst_46 = arith.constant 5.000000e-01 : f32
    %129 = vector.broadcast %cst_46 : f32 to vector<8x64xf32>
    %130 = arith.mulf %129, %128 : vector<8x64xf32>
    %cst_47 = arith.constant 5.000000e-01 : f32
    %131 = vector.broadcast %cst_47 : f32 to vector<8x64xf32>
    %132 = arith.addf %130, %131 : vector<8x64xf32>
    %133 = vector.extract_strided_slice %132 {offsets = [0, 0], sizes = [8, 32], strides = [1, 1]} : vector<8x64xf32> to vector<8x32xf32>
    %134 = vector.extract_strided_slice %132 {offsets = [0, 32], sizes = [8, 32], strides = [1, 1]} : vector<8x64xf32> to vector<8x32xf32>
    %135 = vector.extract_strided_slice %121 {offsets = [0, 64], sizes = [8, 32], strides = [1, 1]} : vector<8x96xf32> to vector<8x32xf32>
    %136 = vector.extract_strided_slice %122 {offsets = [0, 64], sizes = [8, 32], strides = [1, 1]} : vector<8x96xf32> to vector<8x32xf32>
    %137 = arith.addf %136, %12 : vector<8x32xf32>
    %138 = arith.mulf %133, %137 : vector<8x32xf32>
    %139 = arith.addf %135, %138 : vector<8x32xf32>
    %140 = math.tanh %139 : vector<8x32xf32>
    %141 = arith.subf %93, %140 : vector<8x32xf32>
    %142 = arith.mulf %134, %141 : vector<8x32xf32>
    %143 = arith.addf %140, %142 : vector<8x32xf32>
    %cst_48 = arith.constant dense<0.000000e+00> : vector<8x96xf32>
    %144 = tpu.matmul %143, %1, %cst_48 {dimension_numbers = #tpu.dot_dimension_numbers<[1], [0], [0], [1], [0, 0, 1, 1], [], []>} : vector<8x32xf32>, vector<32x96xf32>, vector<8x96xf32> -> vector<8x96xf32>
    %145 = arith.addf %144, %9 : vector<8x96xf32>
    %cst_49 = arith.constant dense<0.000000e+00> : vector<8x96xf32>
    %146 = tpu.matmul %117, %3, %cst_49 {dimension_numbers = #tpu.dot_dimension_numbers<[1], [0], [0], [1], [0, 0, 1, 1], [], []>} : vector<8x32xf32>, vector<32x96xf32>, vector<8x96xf32> -> vector<8x96xf32>
    %147 = vector.extract_strided_slice %145 {offsets = [0, 0], sizes = [8, 64], strides = [1, 1]} : vector<8x96xf32> to vector<8x64xf32>
    %148 = vector.extract_strided_slice %146 {offsets = [0, 0], sizes = [8, 64], strides = [1, 1]} : vector<8x96xf32> to vector<8x64xf32>
    %149 = arith.addf %147, %148 : vector<8x64xf32>
    %cst_50 = arith.constant 5.000000e-01 : f32
    %150 = vector.broadcast %cst_50 : f32 to vector<8x64xf32>
    %151 = arith.mulf %150, %149 : vector<8x64xf32>
    %152 = math.tanh %151 : vector<8x64xf32>
    %cst_51 = arith.constant 5.000000e-01 : f32
    %153 = vector.broadcast %cst_51 : f32 to vector<8x64xf32>
    %154 = arith.mulf %153, %152 : vector<8x64xf32>
    %cst_52 = arith.constant 5.000000e-01 : f32
    %155 = vector.broadcast %cst_52 : f32 to vector<8x64xf32>
    %156 = arith.addf %154, %155 : vector<8x64xf32>
    %157 = vector.extract_strided_slice %156 {offsets = [0, 0], sizes = [8, 32], strides = [1, 1]} : vector<8x64xf32> to vector<8x32xf32>
    %158 = vector.extract_strided_slice %156 {offsets = [0, 32], sizes = [8, 32], strides = [1, 1]} : vector<8x64xf32> to vector<8x32xf32>
    %159 = vector.extract_strided_slice %145 {offsets = [0, 64], sizes = [8, 32], strides = [1, 1]} : vector<8x96xf32> to vector<8x32xf32>
    %160 = vector.extract_strided_slice %146 {offsets = [0, 64], sizes = [8, 32], strides = [1, 1]} : vector<8x96xf32> to vector<8x32xf32>
    %161 = arith.addf %160, %15 : vector<8x32xf32>
    %162 = arith.mulf %157, %161 : vector<8x32xf32>
    %163 = arith.addf %159, %162 : vector<8x32xf32>
    %164 = math.tanh %163 : vector<8x32xf32>
    %165 = arith.subf %117, %164 : vector<8x32xf32>
    %166 = arith.mulf %158, %165 : vector<8x32xf32>
    %167 = arith.addf %164, %166 : vector<8x32xf32>
    %c3 = arith.constant 3 : index
    %c0_53 = arith.constant 0 : index
    %c0_54 = arith.constant 0 : index
    %168 = vector.load %arg1[%c3, %c0_53, %c0_54] : memref<16x8x4xf32, #tpu.memory_space<vmem>>, vector<1x8x4xf32>
    %169 = vector.shape_cast %168 : vector<1x8x4xf32> to vector<8x4xf32>
    %cst_55 = arith.constant dense<0.000000e+00> : vector<8x96xf32>
    %170 = tpu.matmul %169, %0, %cst_55 {dimension_numbers = #tpu.dot_dimension_numbers<[1], [0], [0], [1], [0, 0, 1, 1], [], []>} : vector<8x4xf32>, vector<4x96xf32>, vector<8x96xf32> -> vector<8x96xf32>
    %171 = arith.addf %170, %6 : vector<8x96xf32>
    %cst_56 = arith.constant dense<0.000000e+00> : vector<8x96xf32>
    %172 = tpu.matmul %143, %2, %cst_56 {dimension_numbers = #tpu.dot_dimension_numbers<[1], [0], [0], [1], [0, 0, 1, 1], [], []>} : vector<8x32xf32>, vector<32x96xf32>, vector<8x96xf32> -> vector<8x96xf32>
    %173 = vector.extract_strided_slice %171 {offsets = [0, 0], sizes = [8, 64], strides = [1, 1]} : vector<8x96xf32> to vector<8x64xf32>
    %174 = vector.extract_strided_slice %172 {offsets = [0, 0], sizes = [8, 64], strides = [1, 1]} : vector<8x96xf32> to vector<8x64xf32>
    %175 = arith.addf %173, %174 : vector<8x64xf32>
    %cst_57 = arith.constant 5.000000e-01 : f32
    %176 = vector.broadcast %cst_57 : f32 to vector<8x64xf32>
    %177 = arith.mulf %176, %175 : vector<8x64xf32>
    %178 = math.tanh %177 : vector<8x64xf32>
    %cst_58 = arith.constant 5.000000e-01 : f32
    %179 = vector.broadcast %cst_58 : f32 to vector<8x64xf32>
    %180 = arith.mulf %179, %178 : vector<8x64xf32>
    %cst_59 = arith.constant 5.000000e-01 : f32
    %181 = vector.broadcast %cst_59 : f32 to vector<8x64xf32>
    %182 = arith.addf %180, %181 : vector<8x64xf32>
    %183 = vector.extract_strided_slice %182 {offsets = [0, 0], sizes = [8, 32], strides = [1, 1]} : vector<8x64xf32> to vector<8x32xf32>
    %184 = vector.extract_strided_slice %182 {offsets = [0, 32], sizes = [8, 32], strides = [1, 1]} : vector<8x64xf32> to vector<8x32xf32>
    %185 = vector.extract_strided_slice %171 {offsets = [0, 64], sizes = [8, 32], strides = [1, 1]} : vector<8x96xf32> to vector<8x32xf32>
    %186 = vector.extract_strided_slice %172 {offsets = [0, 64], sizes = [8, 32], strides = [1, 1]} : vector<8x96xf32> to vector<8x32xf32>
    %187 = arith.addf %186, %12 : vector<8x32xf32>
    %188 = arith.mulf %183, %187 : vector<8x32xf32>
    %189 = arith.addf %185, %188 : vector<8x32xf32>
    %190 = math.tanh %189 : vector<8x32xf32>
    %191 = arith.subf %143, %190 : vector<8x32xf32>
    %192 = arith.mulf %184, %191 : vector<8x32xf32>
    %193 = arith.addf %190, %192 : vector<8x32xf32>
    %cst_60 = arith.constant dense<0.000000e+00> : vector<8x96xf32>
    %194 = tpu.matmul %193, %1, %cst_60 {dimension_numbers = #tpu.dot_dimension_numbers<[1], [0], [0], [1], [0, 0, 1, 1], [], []>} : vector<8x32xf32>, vector<32x96xf32>, vector<8x96xf32> -> vector<8x96xf32>
    %195 = arith.addf %194, %9 : vector<8x96xf32>
    %cst_61 = arith.constant dense<0.000000e+00> : vector<8x96xf32>
    %196 = tpu.matmul %167, %3, %cst_61 {dimension_numbers = #tpu.dot_dimension_numbers<[1], [0], [0], [1], [0, 0, 1, 1], [], []>} : vector<8x32xf32>, vector<32x96xf32>, vector<8x96xf32> -> vector<8x96xf32>
    %197 = vector.extract_strided_slice %195 {offsets = [0, 0], sizes = [8, 64], strides = [1, 1]} : vector<8x96xf32> to vector<8x64xf32>
    %198 = vector.extract_strided_slice %196 {offsets = [0, 0], sizes = [8, 64], strides = [1, 1]} : vector<8x96xf32> to vector<8x64xf32>
    %199 = arith.addf %197, %198 : vector<8x64xf32>
    %cst_62 = arith.constant 5.000000e-01 : f32
    %200 = vector.broadcast %cst_62 : f32 to vector<8x64xf32>
    %201 = arith.mulf %200, %199 : vector<8x64xf32>
    %202 = math.tanh %201 : vector<8x64xf32>
    %cst_63 = arith.constant 5.000000e-01 : f32
    %203 = vector.broadcast %cst_63 : f32 to vector<8x64xf32>
    %204 = arith.mulf %203, %202 : vector<8x64xf32>
    %cst_64 = arith.constant 5.000000e-01 : f32
    %205 = vector.broadcast %cst_64 : f32 to vector<8x64xf32>
    %206 = arith.addf %204, %205 : vector<8x64xf32>
    %207 = vector.extract_strided_slice %206 {offsets = [0, 0], sizes = [8, 32], strides = [1, 1]} : vector<8x64xf32> to vector<8x32xf32>
    %208 = vector.extract_strided_slice %206 {offsets = [0, 32], sizes = [8, 32], strides = [1, 1]} : vector<8x64xf32> to vector<8x32xf32>
    %209 = vector.extract_strided_slice %195 {offsets = [0, 64], sizes = [8, 32], strides = [1, 1]} : vector<8x96xf32> to vector<8x32xf32>
    %210 = vector.extract_strided_slice %196 {offsets = [0, 64], sizes = [8, 32], strides = [1, 1]} : vector<8x96xf32> to vector<8x32xf32>
    %211 = arith.addf %210, %15 : vector<8x32xf32>
    %212 = arith.mulf %207, %211 : vector<8x32xf32>
    %213 = arith.addf %209, %212 : vector<8x32xf32>
    %214 = math.tanh %213 : vector<8x32xf32>
    %215 = arith.subf %167, %214 : vector<8x32xf32>
    %216 = arith.mulf %208, %215 : vector<8x32xf32>
    %217 = arith.addf %214, %216 : vector<8x32xf32>
    %c4 = arith.constant 4 : index
    %c0_65 = arith.constant 0 : index
    %c0_66 = arith.constant 0 : index
    %218 = vector.load %arg1[%c4, %c0_65, %c0_66] : memref<16x8x4xf32, #tpu.memory_space<vmem>>, vector<1x8x4xf32>
    %219 = vector.shape_cast %218 : vector<1x8x4xf32> to vector<8x4xf32>
    %cst_67 = arith.constant dense<0.000000e+00> : vector<8x96xf32>
    %220 = tpu.matmul %219, %0, %cst_67 {dimension_numbers = #tpu.dot_dimension_numbers<[1], [0], [0], [1], [0, 0, 1, 1], [], []>} : vector<8x4xf32>, vector<4x96xf32>, vector<8x96xf32> -> vector<8x96xf32>
    %221 = arith.addf %220, %6 : vector<8x96xf32>
    %cst_68 = arith.constant dense<0.000000e+00> : vector<8x96xf32>
    %222 = tpu.matmul %193, %2, %cst_68 {dimension_numbers = #tpu.dot_dimension_numbers<[1], [0], [0], [1], [0, 0, 1, 1], [], []>} : vector<8x32xf32>, vector<32x96xf32>, vector<8x96xf32> -> vector<8x96xf32>
    %223 = vector.extract_strided_slice %221 {offsets = [0, 0], sizes = [8, 64], strides = [1, 1]} : vector<8x96xf32> to vector<8x64xf32>
    %224 = vector.extract_strided_slice %222 {offsets = [0, 0], sizes = [8, 64], strides = [1, 1]} : vector<8x96xf32> to vector<8x64xf32>
    %225 = arith.addf %223, %224 : vector<8x64xf32>
    %cst_69 = arith.constant 5.000000e-01 : f32
    %226 = vector.broadcast %cst_69 : f32 to vector<8x64xf32>
    %227 = arith.mulf %226, %225 : vector<8x64xf32>
    %228 = math.tanh %227 : vector<8x64xf32>
    %cst_70 = arith.constant 5.000000e-01 : f32
    %229 = vector.broadcast %cst_70 : f32 to vector<8x64xf32>
    %230 = arith.mulf %229, %228 : vector<8x64xf32>
    %cst_71 = arith.constant 5.000000e-01 : f32
    %231 = vector.broadcast %cst_71 : f32 to vector<8x64xf32>
    %232 = arith.addf %230, %231 : vector<8x64xf32>
    %233 = vector.extract_strided_slice %232 {offsets = [0, 0], sizes = [8, 32], strides = [1, 1]} : vector<8x64xf32> to vector<8x32xf32>
    %234 = vector.extract_strided_slice %232 {offsets = [0, 32], sizes = [8, 32], strides = [1, 1]} : vector<8x64xf32> to vector<8x32xf32>
    %235 = vector.extract_strided_slice %221 {offsets = [0, 64], sizes = [8, 32], strides = [1, 1]} : vector<8x96xf32> to vector<8x32xf32>
    %236 = vector.extract_strided_slice %222 {offsets = [0, 64], sizes = [8, 32], strides = [1, 1]} : vector<8x96xf32> to vector<8x32xf32>
    %237 = arith.addf %236, %12 : vector<8x32xf32>
    %238 = arith.mulf %233, %237 : vector<8x32xf32>
    %239 = arith.addf %235, %238 : vector<8x32xf32>
    %240 = math.tanh %239 : vector<8x32xf32>
    %241 = arith.subf %193, %240 : vector<8x32xf32>
    %242 = arith.mulf %234, %241 : vector<8x32xf32>
    %243 = arith.addf %240, %242 : vector<8x32xf32>
    %cst_72 = arith.constant dense<0.000000e+00> : vector<8x96xf32>
    %244 = tpu.matmul %243, %1, %cst_72 {dimension_numbers = #tpu.dot_dimension_numbers<[1], [0], [0], [1], [0, 0, 1, 1], [], []>} : vector<8x32xf32>, vector<32x96xf32>, vector<8x96xf32> -> vector<8x96xf32>
    %245 = arith.addf %244, %9 : vector<8x96xf32>
    %cst_73 = arith.constant dense<0.000000e+00> : vector<8x96xf32>
    %246 = tpu.matmul %217, %3, %cst_73 {dimension_numbers = #tpu.dot_dimension_numbers<[1], [0], [0], [1], [0, 0, 1, 1], [], []>} : vector<8x32xf32>, vector<32x96xf32>, vector<8x96xf32> -> vector<8x96xf32>
    %247 = vector.extract_strided_slice %245 {offsets = [0, 0], sizes = [8, 64], strides = [1, 1]} : vector<8x96xf32> to vector<8x64xf32>
    %248 = vector.extract_strided_slice %246 {offsets = [0, 0], sizes = [8, 64], strides = [1, 1]} : vector<8x96xf32> to vector<8x64xf32>
    %249 = arith.addf %247, %248 : vector<8x64xf32>
    %cst_74 = arith.constant 5.000000e-01 : f32
    %250 = vector.broadcast %cst_74 : f32 to vector<8x64xf32>
    %251 = arith.mulf %250, %249 : vector<8x64xf32>
    %252 = math.tanh %251 : vector<8x64xf32>
    %cst_75 = arith.constant 5.000000e-01 : f32
    %253 = vector.broadcast %cst_75 : f32 to vector<8x64xf32>
    %254 = arith.mulf %253, %252 : vector<8x64xf32>
    %cst_76 = arith.constant 5.000000e-01 : f32
    %255 = vector.broadcast %cst_76 : f32 to vector<8x64xf32>
    %256 = arith.addf %254, %255 : vector<8x64xf32>
    %257 = vector.extract_strided_slice %256 {offsets = [0, 0], sizes = [8, 32], strides = [1, 1]} : vector<8x64xf32> to vector<8x32xf32>
    %258 = vector.extract_strided_slice %256 {offsets = [0, 32], sizes = [8, 32], strides = [1, 1]} : vector<8x64xf32> to vector<8x32xf32>
    %259 = vector.extract_strided_slice %245 {offsets = [0, 64], sizes = [8, 32], strides = [1, 1]} : vector<8x96xf32> to vector<8x32xf32>
    %260 = vector.extract_strided_slice %246 {offsets = [0, 64], sizes = [8, 32], strides = [1, 1]} : vector<8x96xf32> to vector<8x32xf32>
    %261 = arith.addf %260, %15 : vector<8x32xf32>
    %262 = arith.mulf %257, %261 : vector<8x32xf32>
    %263 = arith.addf %259, %262 : vector<8x32xf32>
    %264 = math.tanh %263 : vector<8x32xf32>
    %265 = arith.subf %217, %264 : vector<8x32xf32>
    %266 = arith.mulf %258, %265 : vector<8x32xf32>
    %267 = arith.addf %264, %266 : vector<8x32xf32>
    %c5 = arith.constant 5 : index
    %c0_77 = arith.constant 0 : index
    %c0_78 = arith.constant 0 : index
    %268 = vector.load %arg1[%c5, %c0_77, %c0_78] : memref<16x8x4xf32, #tpu.memory_space<vmem>>, vector<1x8x4xf32>
    %269 = vector.shape_cast %268 : vector<1x8x4xf32> to vector<8x4xf32>
    %cst_79 = arith.constant dense<0.000000e+00> : vector<8x96xf32>
    %270 = tpu.matmul %269, %0, %cst_79 {dimension_numbers = #tpu.dot_dimension_numbers<[1], [0], [0], [1], [0, 0, 1, 1], [], []>} : vector<8x4xf32>, vector<4x96xf32>, vector<8x96xf32> -> vector<8x96xf32>
    %271 = arith.addf %270, %6 : vector<8x96xf32>
    %cst_80 = arith.constant dense<0.000000e+00> : vector<8x96xf32>
    %272 = tpu.matmul %243, %2, %cst_80 {dimension_numbers = #tpu.dot_dimension_numbers<[1], [0], [0], [1], [0, 0, 1, 1], [], []>} : vector<8x32xf32>, vector<32x96xf32>, vector<8x96xf32> -> vector<8x96xf32>
    %273 = vector.extract_strided_slice %271 {offsets = [0, 0], sizes = [8, 64], strides = [1, 1]} : vector<8x96xf32> to vector<8x64xf32>
    %274 = vector.extract_strided_slice %272 {offsets = [0, 0], sizes = [8, 64], strides = [1, 1]} : vector<8x96xf32> to vector<8x64xf32>
    %275 = arith.addf %273, %274 : vector<8x64xf32>
    %cst_81 = arith.constant 5.000000e-01 : f32
    %276 = vector.broadcast %cst_81 : f32 to vector<8x64xf32>
    %277 = arith.mulf %276, %275 : vector<8x64xf32>
    %278 = math.tanh %277 : vector<8x64xf32>
    %cst_82 = arith.constant 5.000000e-01 : f32
    %279 = vector.broadcast %cst_82 : f32 to vector<8x64xf32>
    %280 = arith.mulf %279, %278 : vector<8x64xf32>
    %cst_83 = arith.constant 5.000000e-01 : f32
    %281 = vector.broadcast %cst_83 : f32 to vector<8x64xf32>
    %282 = arith.addf %280, %281 : vector<8x64xf32>
    %283 = vector.extract_strided_slice %282 {offsets = [0, 0], sizes = [8, 32], strides = [1, 1]} : vector<8x64xf32> to vector<8x32xf32>
    %284 = vector.extract_strided_slice %282 {offsets = [0, 32], sizes = [8, 32], strides = [1, 1]} : vector<8x64xf32> to vector<8x32xf32>
    %285 = vector.extract_strided_slice %271 {offsets = [0, 64], sizes = [8, 32], strides = [1, 1]} : vector<8x96xf32> to vector<8x32xf32>
    %286 = vector.extract_strided_slice %272 {offsets = [0, 64], sizes = [8, 32], strides = [1, 1]} : vector<8x96xf32> to vector<8x32xf32>
    %287 = arith.addf %286, %12 : vector<8x32xf32>
    %288 = arith.mulf %283, %287 : vector<8x32xf32>
    %289 = arith.addf %285, %288 : vector<8x32xf32>
    %290 = math.tanh %289 : vector<8x32xf32>
    %291 = arith.subf %243, %290 : vector<8x32xf32>
    %292 = arith.mulf %284, %291 : vector<8x32xf32>
    %293 = arith.addf %290, %292 : vector<8x32xf32>
    %cst_84 = arith.constant dense<0.000000e+00> : vector<8x96xf32>
    %294 = tpu.matmul %293, %1, %cst_84 {dimension_numbers = #tpu.dot_dimension_numbers<[1], [0], [0], [1], [0, 0, 1, 1], [], []>} : vector<8x32xf32>, vector<32x96xf32>, vector<8x96xf32> -> vector<8x96xf32>
    %295 = arith.addf %294, %9 : vector<8x96xf32>
    %cst_85 = arith.constant dense<0.000000e+00> : vector<8x96xf32>
    %296 = tpu.matmul %267, %3, %cst_85 {dimension_numbers = #tpu.dot_dimension_numbers<[1], [0], [0], [1], [0, 0, 1, 1], [], []>} : vector<8x32xf32>, vector<32x96xf32>, vector<8x96xf32> -> vector<8x96xf32>
    %297 = vector.extract_strided_slice %295 {offsets = [0, 0], sizes = [8, 64], strides = [1, 1]} : vector<8x96xf32> to vector<8x64xf32>
    %298 = vector.extract_strided_slice %296 {offsets = [0, 0], sizes = [8, 64], strides = [1, 1]} : vector<8x96xf32> to vector<8x64xf32>
    %299 = arith.addf %297, %298 : vector<8x64xf32>
    %cst_86 = arith.constant 5.000000e-01 : f32
    %300 = vector.broadcast %cst_86 : f32 to vector<8x64xf32>
    %301 = arith.mulf %300, %299 : vector<8x64xf32>
    %302 = math.tanh %301 : vector<8x64xf32>
    %cst_87 = arith.constant 5.000000e-01 : f32
    %303 = vector.broadcast %cst_87 : f32 to vector<8x64xf32>
    %304 = arith.mulf %303, %302 : vector<8x64xf32>
    %cst_88 = arith.constant 5.000000e-01 : f32
    %305 = vector.broadcast %cst_88 : f32 to vector<8x64xf32>
    %306 = arith.addf %304, %305 : vector<8x64xf32>
    %307 = vector.extract_strided_slice %306 {offsets = [0, 0], sizes = [8, 32], strides = [1, 1]} : vector<8x64xf32> to vector<8x32xf32>
    %308 = vector.extract_strided_slice %306 {offsets = [0, 32], sizes = [8, 32], strides = [1, 1]} : vector<8x64xf32> to vector<8x32xf32>
    %309 = vector.extract_strided_slice %295 {offsets = [0, 64], sizes = [8, 32], strides = [1, 1]} : vector<8x96xf32> to vector<8x32xf32>
    %310 = vector.extract_strided_slice %296 {offsets = [0, 64], sizes = [8, 32], strides = [1, 1]} : vector<8x96xf32> to vector<8x32xf32>
    %311 = arith.addf %310, %15 : vector<8x32xf32>
    %312 = arith.mulf %307, %311 : vector<8x32xf32>
    %313 = arith.addf %309, %312 : vector<8x32xf32>
    %314 = math.tanh %313 : vector<8x32xf32>
    %315 = arith.subf %267, %314 : vector<8x32xf32>
    %316 = arith.mulf %308, %315 : vector<8x32xf32>
    %317 = arith.addf %314, %316 : vector<8x32xf32>
    %c6 = arith.constant 6 : index
    %c0_89 = arith.constant 0 : index
    %c0_90 = arith.constant 0 : index
    %318 = vector.load %arg1[%c6, %c0_89, %c0_90] : memref<16x8x4xf32, #tpu.memory_space<vmem>>, vector<1x8x4xf32>
    %319 = vector.shape_cast %318 : vector<1x8x4xf32> to vector<8x4xf32>
    %cst_91 = arith.constant dense<0.000000e+00> : vector<8x96xf32>
    %320 = tpu.matmul %319, %0, %cst_91 {dimension_numbers = #tpu.dot_dimension_numbers<[1], [0], [0], [1], [0, 0, 1, 1], [], []>} : vector<8x4xf32>, vector<4x96xf32>, vector<8x96xf32> -> vector<8x96xf32>
    %321 = arith.addf %320, %6 : vector<8x96xf32>
    %cst_92 = arith.constant dense<0.000000e+00> : vector<8x96xf32>
    %322 = tpu.matmul %293, %2, %cst_92 {dimension_numbers = #tpu.dot_dimension_numbers<[1], [0], [0], [1], [0, 0, 1, 1], [], []>} : vector<8x32xf32>, vector<32x96xf32>, vector<8x96xf32> -> vector<8x96xf32>
    %323 = vector.extract_strided_slice %321 {offsets = [0, 0], sizes = [8, 64], strides = [1, 1]} : vector<8x96xf32> to vector<8x64xf32>
    %324 = vector.extract_strided_slice %322 {offsets = [0, 0], sizes = [8, 64], strides = [1, 1]} : vector<8x96xf32> to vector<8x64xf32>
    %325 = arith.addf %323, %324 : vector<8x64xf32>
    %cst_93 = arith.constant 5.000000e-01 : f32
    %326 = vector.broadcast %cst_93 : f32 to vector<8x64xf32>
    %327 = arith.mulf %326, %325 : vector<8x64xf32>
    %328 = math.tanh %327 : vector<8x64xf32>
    %cst_94 = arith.constant 5.000000e-01 : f32
    %329 = vector.broadcast %cst_94 : f32 to vector<8x64xf32>
    %330 = arith.mulf %329, %328 : vector<8x64xf32>
    %cst_95 = arith.constant 5.000000e-01 : f32
    %331 = vector.broadcast %cst_95 : f32 to vector<8x64xf32>
    %332 = arith.addf %330, %331 : vector<8x64xf32>
    %333 = vector.extract_strided_slice %332 {offsets = [0, 0], sizes = [8, 32], strides = [1, 1]} : vector<8x64xf32> to vector<8x32xf32>
    %334 = vector.extract_strided_slice %332 {offsets = [0, 32], sizes = [8, 32], strides = [1, 1]} : vector<8x64xf32> to vector<8x32xf32>
    %335 = vector.extract_strided_slice %321 {offsets = [0, 64], sizes = [8, 32], strides = [1, 1]} : vector<8x96xf32> to vector<8x32xf32>
    %336 = vector.extract_strided_slice %322 {offsets = [0, 64], sizes = [8, 32], strides = [1, 1]} : vector<8x96xf32> to vector<8x32xf32>
    %337 = arith.addf %336, %12 : vector<8x32xf32>
    %338 = arith.mulf %333, %337 : vector<8x32xf32>
    %339 = arith.addf %335, %338 : vector<8x32xf32>
    %340 = math.tanh %339 : vector<8x32xf32>
    %341 = arith.subf %293, %340 : vector<8x32xf32>
    %342 = arith.mulf %334, %341 : vector<8x32xf32>
    %343 = arith.addf %340, %342 : vector<8x32xf32>
    %cst_96 = arith.constant dense<0.000000e+00> : vector<8x96xf32>
    %344 = tpu.matmul %343, %1, %cst_96 {dimension_numbers = #tpu.dot_dimension_numbers<[1], [0], [0], [1], [0, 0, 1, 1], [], []>} : vector<8x32xf32>, vector<32x96xf32>, vector<8x96xf32> -> vector<8x96xf32>
    %345 = arith.addf %344, %9 : vector<8x96xf32>
    %cst_97 = arith.constant dense<0.000000e+00> : vector<8x96xf32>
    %346 = tpu.matmul %317, %3, %cst_97 {dimension_numbers = #tpu.dot_dimension_numbers<[1], [0], [0], [1], [0, 0, 1, 1], [], []>} : vector<8x32xf32>, vector<32x96xf32>, vector<8x96xf32> -> vector<8x96xf32>
    %347 = vector.extract_strided_slice %345 {offsets = [0, 0], sizes = [8, 64], strides = [1, 1]} : vector<8x96xf32> to vector<8x64xf32>
    %348 = vector.extract_strided_slice %346 {offsets = [0, 0], sizes = [8, 64], strides = [1, 1]} : vector<8x96xf32> to vector<8x64xf32>
    %349 = arith.addf %347, %348 : vector<8x64xf32>
    %cst_98 = arith.constant 5.000000e-01 : f32
    %350 = vector.broadcast %cst_98 : f32 to vector<8x64xf32>
    %351 = arith.mulf %350, %349 : vector<8x64xf32>
    %352 = math.tanh %351 : vector<8x64xf32>
    %cst_99 = arith.constant 5.000000e-01 : f32
    %353 = vector.broadcast %cst_99 : f32 to vector<8x64xf32>
    %354 = arith.mulf %353, %352 : vector<8x64xf32>
    %cst_100 = arith.constant 5.000000e-01 : f32
    %355 = vector.broadcast %cst_100 : f32 to vector<8x64xf32>
    %356 = arith.addf %354, %355 : vector<8x64xf32>
    %357 = vector.extract_strided_slice %356 {offsets = [0, 0], sizes = [8, 32], strides = [1, 1]} : vector<8x64xf32> to vector<8x32xf32>
    %358 = vector.extract_strided_slice %356 {offsets = [0, 32], sizes = [8, 32], strides = [1, 1]} : vector<8x64xf32> to vector<8x32xf32>
    %359 = vector.extract_strided_slice %345 {offsets = [0, 64], sizes = [8, 32], strides = [1, 1]} : vector<8x96xf32> to vector<8x32xf32>
    %360 = vector.extract_strided_slice %346 {offsets = [0, 64], sizes = [8, 32], strides = [1, 1]} : vector<8x96xf32> to vector<8x32xf32>
    %361 = arith.addf %360, %15 : vector<8x32xf32>
    %362 = arith.mulf %357, %361 : vector<8x32xf32>
    %363 = arith.addf %359, %362 : vector<8x32xf32>
    %364 = math.tanh %363 : vector<8x32xf32>
    %365 = arith.subf %317, %364 : vector<8x32xf32>
    %366 = arith.mulf %358, %365 : vector<8x32xf32>
    %367 = arith.addf %364, %366 : vector<8x32xf32>
    %c7 = arith.constant 7 : index
    %c0_101 = arith.constant 0 : index
    %c0_102 = arith.constant 0 : index
    %368 = vector.load %arg1[%c7, %c0_101, %c0_102] : memref<16x8x4xf32, #tpu.memory_space<vmem>>, vector<1x8x4xf32>
    %369 = vector.shape_cast %368 : vector<1x8x4xf32> to vector<8x4xf32>
    %cst_103 = arith.constant dense<0.000000e+00> : vector<8x96xf32>
    %370 = tpu.matmul %369, %0, %cst_103 {dimension_numbers = #tpu.dot_dimension_numbers<[1], [0], [0], [1], [0, 0, 1, 1], [], []>} : vector<8x4xf32>, vector<4x96xf32>, vector<8x96xf32> -> vector<8x96xf32>
    %371 = arith.addf %370, %6 : vector<8x96xf32>
    %cst_104 = arith.constant dense<0.000000e+00> : vector<8x96xf32>
    %372 = tpu.matmul %343, %2, %cst_104 {dimension_numbers = #tpu.dot_dimension_numbers<[1], [0], [0], [1], [0, 0, 1, 1], [], []>} : vector<8x32xf32>, vector<32x96xf32>, vector<8x96xf32> -> vector<8x96xf32>
    %373 = vector.extract_strided_slice %371 {offsets = [0, 0], sizes = [8, 64], strides = [1, 1]} : vector<8x96xf32> to vector<8x64xf32>
    %374 = vector.extract_strided_slice %372 {offsets = [0, 0], sizes = [8, 64], strides = [1, 1]} : vector<8x96xf32> to vector<8x64xf32>
    %375 = arith.addf %373, %374 : vector<8x64xf32>
    %cst_105 = arith.constant 5.000000e-01 : f32
    %376 = vector.broadcast %cst_105 : f32 to vector<8x64xf32>
    %377 = arith.mulf %376, %375 : vector<8x64xf32>
    %378 = math.tanh %377 : vector<8x64xf32>
    %cst_106 = arith.constant 5.000000e-01 : f32
    %379 = vector.broadcast %cst_106 : f32 to vector<8x64xf32>
    %380 = arith.mulf %379, %378 : vector<8x64xf32>
    %cst_107 = arith.constant 5.000000e-01 : f32
    %381 = vector.broadcast %cst_107 : f32 to vector<8x64xf32>
    %382 = arith.addf %380, %381 : vector<8x64xf32>
    %383 = vector.extract_strided_slice %382 {offsets = [0, 0], sizes = [8, 32], strides = [1, 1]} : vector<8x64xf32> to vector<8x32xf32>
    %384 = vector.extract_strided_slice %382 {offsets = [0, 32], sizes = [8, 32], strides = [1, 1]} : vector<8x64xf32> to vector<8x32xf32>
    %385 = vector.extract_strided_slice %371 {offsets = [0, 64], sizes = [8, 32], strides = [1, 1]} : vector<8x96xf32> to vector<8x32xf32>
    %386 = vector.extract_strided_slice %372 {offsets = [0, 64], sizes = [8, 32], strides = [1, 1]} : vector<8x96xf32> to vector<8x32xf32>
    %387 = arith.addf %386, %12 : vector<8x32xf32>
    %388 = arith.mulf %383, %387 : vector<8x32xf32>
    %389 = arith.addf %385, %388 : vector<8x32xf32>
    %390 = math.tanh %389 : vector<8x32xf32>
    %391 = arith.subf %343, %390 : vector<8x32xf32>
    %392 = arith.mulf %384, %391 : vector<8x32xf32>
    %393 = arith.addf %390, %392 : vector<8x32xf32>
    %cst_108 = arith.constant dense<0.000000e+00> : vector<8x96xf32>
    %394 = tpu.matmul %393, %1, %cst_108 {dimension_numbers = #tpu.dot_dimension_numbers<[1], [0], [0], [1], [0, 0, 1, 1], [], []>} : vector<8x32xf32>, vector<32x96xf32>, vector<8x96xf32> -> vector<8x96xf32>
    %395 = arith.addf %394, %9 : vector<8x96xf32>
    %cst_109 = arith.constant dense<0.000000e+00> : vector<8x96xf32>
    %396 = tpu.matmul %367, %3, %cst_109 {dimension_numbers = #tpu.dot_dimension_numbers<[1], [0], [0], [1], [0, 0, 1, 1], [], []>} : vector<8x32xf32>, vector<32x96xf32>, vector<8x96xf32> -> vector<8x96xf32>
    %397 = vector.extract_strided_slice %395 {offsets = [0, 0], sizes = [8, 64], strides = [1, 1]} : vector<8x96xf32> to vector<8x64xf32>
    %398 = vector.extract_strided_slice %396 {offsets = [0, 0], sizes = [8, 64], strides = [1, 1]} : vector<8x96xf32> to vector<8x64xf32>
    %399 = arith.addf %397, %398 : vector<8x64xf32>
    %cst_110 = arith.constant 5.000000e-01 : f32
    %400 = vector.broadcast %cst_110 : f32 to vector<8x64xf32>
    %401 = arith.mulf %400, %399 : vector<8x64xf32>
    %402 = math.tanh %401 : vector<8x64xf32>
    %cst_111 = arith.constant 5.000000e-01 : f32
    %403 = vector.broadcast %cst_111 : f32 to vector<8x64xf32>
    %404 = arith.mulf %403, %402 : vector<8x64xf32>
    %cst_112 = arith.constant 5.000000e-01 : f32
    %405 = vector.broadcast %cst_112 : f32 to vector<8x64xf32>
    %406 = arith.addf %404, %405 : vector<8x64xf32>
    %407 = vector.extract_strided_slice %406 {offsets = [0, 0], sizes = [8, 32], strides = [1, 1]} : vector<8x64xf32> to vector<8x32xf32>
    %408 = vector.extract_strided_slice %406 {offsets = [0, 32], sizes = [8, 32], strides = [1, 1]} : vector<8x64xf32> to vector<8x32xf32>
    %409 = vector.extract_strided_slice %395 {offsets = [0, 64], sizes = [8, 32], strides = [1, 1]} : vector<8x96xf32> to vector<8x32xf32>
    %410 = vector.extract_strided_slice %396 {offsets = [0, 64], sizes = [8, 32], strides = [1, 1]} : vector<8x96xf32> to vector<8x32xf32>
    %411 = arith.addf %410, %15 : vector<8x32xf32>
    %412 = arith.mulf %407, %411 : vector<8x32xf32>
    %413 = arith.addf %409, %412 : vector<8x32xf32>
    %414 = math.tanh %413 : vector<8x32xf32>
    %415 = arith.subf %367, %414 : vector<8x32xf32>
    %416 = arith.mulf %408, %415 : vector<8x32xf32>
    %417 = arith.addf %414, %416 : vector<8x32xf32>
    %c8 = arith.constant 8 : index
    %c0_113 = arith.constant 0 : index
    %c0_114 = arith.constant 0 : index
    %418 = vector.load %arg1[%c8, %c0_113, %c0_114] : memref<16x8x4xf32, #tpu.memory_space<vmem>>, vector<1x8x4xf32>
    %419 = vector.shape_cast %418 : vector<1x8x4xf32> to vector<8x4xf32>
    %cst_115 = arith.constant dense<0.000000e+00> : vector<8x96xf32>
    %420 = tpu.matmul %419, %0, %cst_115 {dimension_numbers = #tpu.dot_dimension_numbers<[1], [0], [0], [1], [0, 0, 1, 1], [], []>} : vector<8x4xf32>, vector<4x96xf32>, vector<8x96xf32> -> vector<8x96xf32>
    %421 = arith.addf %420, %6 : vector<8x96xf32>
    %cst_116 = arith.constant dense<0.000000e+00> : vector<8x96xf32>
    %422 = tpu.matmul %393, %2, %cst_116 {dimension_numbers = #tpu.dot_dimension_numbers<[1], [0], [0], [1], [0, 0, 1, 1], [], []>} : vector<8x32xf32>, vector<32x96xf32>, vector<8x96xf32> -> vector<8x96xf32>
    %423 = vector.extract_strided_slice %421 {offsets = [0, 0], sizes = [8, 64], strides = [1, 1]} : vector<8x96xf32> to vector<8x64xf32>
    %424 = vector.extract_strided_slice %422 {offsets = [0, 0], sizes = [8, 64], strides = [1, 1]} : vector<8x96xf32> to vector<8x64xf32>
    %425 = arith.addf %423, %424 : vector<8x64xf32>
    %cst_117 = arith.constant 5.000000e-01 : f32
    %426 = vector.broadcast %cst_117 : f32 to vector<8x64xf32>
    %427 = arith.mulf %426, %425 : vector<8x64xf32>
    %428 = math.tanh %427 : vector<8x64xf32>
    %cst_118 = arith.constant 5.000000e-01 : f32
    %429 = vector.broadcast %cst_118 : f32 to vector<8x64xf32>
    %430 = arith.mulf %429, %428 : vector<8x64xf32>
    %cst_119 = arith.constant 5.000000e-01 : f32
    %431 = vector.broadcast %cst_119 : f32 to vector<8x64xf32>
    %432 = arith.addf %430, %431 : vector<8x64xf32>
    %433 = vector.extract_strided_slice %432 {offsets = [0, 0], sizes = [8, 32], strides = [1, 1]} : vector<8x64xf32> to vector<8x32xf32>
    %434 = vector.extract_strided_slice %432 {offsets = [0, 32], sizes = [8, 32], strides = [1, 1]} : vector<8x64xf32> to vector<8x32xf32>
    %435 = vector.extract_strided_slice %421 {offsets = [0, 64], sizes = [8, 32], strides = [1, 1]} : vector<8x96xf32> to vector<8x32xf32>
    %436 = vector.extract_strided_slice %422 {offsets = [0, 64], sizes = [8, 32], strides = [1, 1]} : vector<8x96xf32> to vector<8x32xf32>
    %437 = arith.addf %436, %12 : vector<8x32xf32>
    %438 = arith.mulf %433, %437 : vector<8x32xf32>
    %439 = arith.addf %435, %438 : vector<8x32xf32>
    %440 = math.tanh %439 : vector<8x32xf32>
    %441 = arith.subf %393, %440 : vector<8x32xf32>
    %442 = arith.mulf %434, %441 : vector<8x32xf32>
    %443 = arith.addf %440, %442 : vector<8x32xf32>
    %cst_120 = arith.constant dense<0.000000e+00> : vector<8x96xf32>
    %444 = tpu.matmul %443, %1, %cst_120 {dimension_numbers = #tpu.dot_dimension_numbers<[1], [0], [0], [1], [0, 0, 1, 1], [], []>} : vector<8x32xf32>, vector<32x96xf32>, vector<8x96xf32> -> vector<8x96xf32>
    %445 = arith.addf %444, %9 : vector<8x96xf32>
    %cst_121 = arith.constant dense<0.000000e+00> : vector<8x96xf32>
    %446 = tpu.matmul %417, %3, %cst_121 {dimension_numbers = #tpu.dot_dimension_numbers<[1], [0], [0], [1], [0, 0, 1, 1], [], []>} : vector<8x32xf32>, vector<32x96xf32>, vector<8x96xf32> -> vector<8x96xf32>
    %447 = vector.extract_strided_slice %445 {offsets = [0, 0], sizes = [8, 64], strides = [1, 1]} : vector<8x96xf32> to vector<8x64xf32>
    %448 = vector.extract_strided_slice %446 {offsets = [0, 0], sizes = [8, 64], strides = [1, 1]} : vector<8x96xf32> to vector<8x64xf32>
    %449 = arith.addf %447, %448 : vector<8x64xf32>
    %cst_122 = arith.constant 5.000000e-01 : f32
    %450 = vector.broadcast %cst_122 : f32 to vector<8x64xf32>
    %451 = arith.mulf %450, %449 : vector<8x64xf32>
    %452 = math.tanh %451 : vector<8x64xf32>
    %cst_123 = arith.constant 5.000000e-01 : f32
    %453 = vector.broadcast %cst_123 : f32 to vector<8x64xf32>
    %454 = arith.mulf %453, %452 : vector<8x64xf32>
    %cst_124 = arith.constant 5.000000e-01 : f32
    %455 = vector.broadcast %cst_124 : f32 to vector<8x64xf32>
    %456 = arith.addf %454, %455 : vector<8x64xf32>
    %457 = vector.extract_strided_slice %456 {offsets = [0, 0], sizes = [8, 32], strides = [1, 1]} : vector<8x64xf32> to vector<8x32xf32>
    %458 = vector.extract_strided_slice %456 {offsets = [0, 32], sizes = [8, 32], strides = [1, 1]} : vector<8x64xf32> to vector<8x32xf32>
    %459 = vector.extract_strided_slice %445 {offsets = [0, 64], sizes = [8, 32], strides = [1, 1]} : vector<8x96xf32> to vector<8x32xf32>
    %460 = vector.extract_strided_slice %446 {offsets = [0, 64], sizes = [8, 32], strides = [1, 1]} : vector<8x96xf32> to vector<8x32xf32>
    %461 = arith.addf %460, %15 : vector<8x32xf32>
    %462 = arith.mulf %457, %461 : vector<8x32xf32>
    %463 = arith.addf %459, %462 : vector<8x32xf32>
    %464 = math.tanh %463 : vector<8x32xf32>
    %465 = arith.subf %417, %464 : vector<8x32xf32>
    %466 = arith.mulf %458, %465 : vector<8x32xf32>
    %467 = arith.addf %464, %466 : vector<8x32xf32>
    %c9 = arith.constant 9 : index
    %c0_125 = arith.constant 0 : index
    %c0_126 = arith.constant 0 : index
    %468 = vector.load %arg1[%c9, %c0_125, %c0_126] : memref<16x8x4xf32, #tpu.memory_space<vmem>>, vector<1x8x4xf32>
    %469 = vector.shape_cast %468 : vector<1x8x4xf32> to vector<8x4xf32>
    %cst_127 = arith.constant dense<0.000000e+00> : vector<8x96xf32>
    %470 = tpu.matmul %469, %0, %cst_127 {dimension_numbers = #tpu.dot_dimension_numbers<[1], [0], [0], [1], [0, 0, 1, 1], [], []>} : vector<8x4xf32>, vector<4x96xf32>, vector<8x96xf32> -> vector<8x96xf32>
    %471 = arith.addf %470, %6 : vector<8x96xf32>
    %cst_128 = arith.constant dense<0.000000e+00> : vector<8x96xf32>
    %472 = tpu.matmul %443, %2, %cst_128 {dimension_numbers = #tpu.dot_dimension_numbers<[1], [0], [0], [1], [0, 0, 1, 1], [], []>} : vector<8x32xf32>, vector<32x96xf32>, vector<8x96xf32> -> vector<8x96xf32>
    %473 = vector.extract_strided_slice %471 {offsets = [0, 0], sizes = [8, 64], strides = [1, 1]} : vector<8x96xf32> to vector<8x64xf32>
    %474 = vector.extract_strided_slice %472 {offsets = [0, 0], sizes = [8, 64], strides = [1, 1]} : vector<8x96xf32> to vector<8x64xf32>
    %475 = arith.addf %473, %474 : vector<8x64xf32>
    %cst_129 = arith.constant 5.000000e-01 : f32
    %476 = vector.broadcast %cst_129 : f32 to vector<8x64xf32>
    %477 = arith.mulf %476, %475 : vector<8x64xf32>
    %478 = math.tanh %477 : vector<8x64xf32>
    %cst_130 = arith.constant 5.000000e-01 : f32
    %479 = vector.broadcast %cst_130 : f32 to vector<8x64xf32>
    %480 = arith.mulf %479, %478 : vector<8x64xf32>
    %cst_131 = arith.constant 5.000000e-01 : f32
    %481 = vector.broadcast %cst_131 : f32 to vector<8x64xf32>
    %482 = arith.addf %480, %481 : vector<8x64xf32>
    %483 = vector.extract_strided_slice %482 {offsets = [0, 0], sizes = [8, 32], strides = [1, 1]} : vector<8x64xf32> to vector<8x32xf32>
    %484 = vector.extract_strided_slice %482 {offsets = [0, 32], sizes = [8, 32], strides = [1, 1]} : vector<8x64xf32> to vector<8x32xf32>
    %485 = vector.extract_strided_slice %471 {offsets = [0, 64], sizes = [8, 32], strides = [1, 1]} : vector<8x96xf32> to vector<8x32xf32>
    %486 = vector.extract_strided_slice %472 {offsets = [0, 64], sizes = [8, 32], strides = [1, 1]} : vector<8x96xf32> to vector<8x32xf32>
    %487 = arith.addf %486, %12 : vector<8x32xf32>
    %488 = arith.mulf %483, %487 : vector<8x32xf32>
    %489 = arith.addf %485, %488 : vector<8x32xf32>
    %490 = math.tanh %489 : vector<8x32xf32>
    %491 = arith.subf %443, %490 : vector<8x32xf32>
    %492 = arith.mulf %484, %491 : vector<8x32xf32>
    %493 = arith.addf %490, %492 : vector<8x32xf32>
    %cst_132 = arith.constant dense<0.000000e+00> : vector<8x96xf32>
    %494 = tpu.matmul %493, %1, %cst_132 {dimension_numbers = #tpu.dot_dimension_numbers<[1], [0], [0], [1], [0, 0, 1, 1], [], []>} : vector<8x32xf32>, vector<32x96xf32>, vector<8x96xf32> -> vector<8x96xf32>
    %495 = arith.addf %494, %9 : vector<8x96xf32>
    %cst_133 = arith.constant dense<0.000000e+00> : vector<8x96xf32>
    %496 = tpu.matmul %467, %3, %cst_133 {dimension_numbers = #tpu.dot_dimension_numbers<[1], [0], [0], [1], [0, 0, 1, 1], [], []>} : vector<8x32xf32>, vector<32x96xf32>, vector<8x96xf32> -> vector<8x96xf32>
    %497 = vector.extract_strided_slice %495 {offsets = [0, 0], sizes = [8, 64], strides = [1, 1]} : vector<8x96xf32> to vector<8x64xf32>
    %498 = vector.extract_strided_slice %496 {offsets = [0, 0], sizes = [8, 64], strides = [1, 1]} : vector<8x96xf32> to vector<8x64xf32>
    %499 = arith.addf %497, %498 : vector<8x64xf32>
    %cst_134 = arith.constant 5.000000e-01 : f32
    %500 = vector.broadcast %cst_134 : f32 to vector<8x64xf32>
    %501 = arith.mulf %500, %499 : vector<8x64xf32>
    %502 = math.tanh %501 : vector<8x64xf32>
    %cst_135 = arith.constant 5.000000e-01 : f32
    %503 = vector.broadcast %cst_135 : f32 to vector<8x64xf32>
    %504 = arith.mulf %503, %502 : vector<8x64xf32>
    %cst_136 = arith.constant 5.000000e-01 : f32
    %505 = vector.broadcast %cst_136 : f32 to vector<8x64xf32>
    %506 = arith.addf %504, %505 : vector<8x64xf32>
    %507 = vector.extract_strided_slice %506 {offsets = [0, 0], sizes = [8, 32], strides = [1, 1]} : vector<8x64xf32> to vector<8x32xf32>
    %508 = vector.extract_strided_slice %506 {offsets = [0, 32], sizes = [8, 32], strides = [1, 1]} : vector<8x64xf32> to vector<8x32xf32>
    %509 = vector.extract_strided_slice %495 {offsets = [0, 64], sizes = [8, 32], strides = [1, 1]} : vector<8x96xf32> to vector<8x32xf32>
    %510 = vector.extract_strided_slice %496 {offsets = [0, 64], sizes = [8, 32], strides = [1, 1]} : vector<8x96xf32> to vector<8x32xf32>
    %511 = arith.addf %510, %15 : vector<8x32xf32>
    %512 = arith.mulf %507, %511 : vector<8x32xf32>
    %513 = arith.addf %509, %512 : vector<8x32xf32>
    %514 = math.tanh %513 : vector<8x32xf32>
    %515 = arith.subf %467, %514 : vector<8x32xf32>
    %516 = arith.mulf %508, %515 : vector<8x32xf32>
    %517 = arith.addf %514, %516 : vector<8x32xf32>
    %c10 = arith.constant 10 : index
    %c0_137 = arith.constant 0 : index
    %c0_138 = arith.constant 0 : index
    %518 = vector.load %arg1[%c10, %c0_137, %c0_138] : memref<16x8x4xf32, #tpu.memory_space<vmem>>, vector<1x8x4xf32>
    %519 = vector.shape_cast %518 : vector<1x8x4xf32> to vector<8x4xf32>
    %cst_139 = arith.constant dense<0.000000e+00> : vector<8x96xf32>
    %520 = tpu.matmul %519, %0, %cst_139 {dimension_numbers = #tpu.dot_dimension_numbers<[1], [0], [0], [1], [0, 0, 1, 1], [], []>} : vector<8x4xf32>, vector<4x96xf32>, vector<8x96xf32> -> vector<8x96xf32>
    %521 = arith.addf %520, %6 : vector<8x96xf32>
    %cst_140 = arith.constant dense<0.000000e+00> : vector<8x96xf32>
    %522 = tpu.matmul %493, %2, %cst_140 {dimension_numbers = #tpu.dot_dimension_numbers<[1], [0], [0], [1], [0, 0, 1, 1], [], []>} : vector<8x32xf32>, vector<32x96xf32>, vector<8x96xf32> -> vector<8x96xf32>
    %523 = vector.extract_strided_slice %521 {offsets = [0, 0], sizes = [8, 64], strides = [1, 1]} : vector<8x96xf32> to vector<8x64xf32>
    %524 = vector.extract_strided_slice %522 {offsets = [0, 0], sizes = [8, 64], strides = [1, 1]} : vector<8x96xf32> to vector<8x64xf32>
    %525 = arith.addf %523, %524 : vector<8x64xf32>
    %cst_141 = arith.constant 5.000000e-01 : f32
    %526 = vector.broadcast %cst_141 : f32 to vector<8x64xf32>
    %527 = arith.mulf %526, %525 : vector<8x64xf32>
    %528 = math.tanh %527 : vector<8x64xf32>
    %cst_142 = arith.constant 5.000000e-01 : f32
    %529 = vector.broadcast %cst_142 : f32 to vector<8x64xf32>
    %530 = arith.mulf %529, %528 : vector<8x64xf32>
    %cst_143 = arith.constant 5.000000e-01 : f32
    %531 = vector.broadcast %cst_143 : f32 to vector<8x64xf32>
    %532 = arith.addf %530, %531 : vector<8x64xf32>
    %533 = vector.extract_strided_slice %532 {offsets = [0, 0], sizes = [8, 32], strides = [1, 1]} : vector<8x64xf32> to vector<8x32xf32>
    %534 = vector.extract_strided_slice %532 {offsets = [0, 32], sizes = [8, 32], strides = [1, 1]} : vector<8x64xf32> to vector<8x32xf32>
    %535 = vector.extract_strided_slice %521 {offsets = [0, 64], sizes = [8, 32], strides = [1, 1]} : vector<8x96xf32> to vector<8x32xf32>
    %536 = vector.extract_strided_slice %522 {offsets = [0, 64], sizes = [8, 32], strides = [1, 1]} : vector<8x96xf32> to vector<8x32xf32>
    %537 = arith.addf %536, %12 : vector<8x32xf32>
    %538 = arith.mulf %533, %537 : vector<8x32xf32>
    %539 = arith.addf %535, %538 : vector<8x32xf32>
    %540 = math.tanh %539 : vector<8x32xf32>
    %541 = arith.subf %493, %540 : vector<8x32xf32>
    %542 = arith.mulf %534, %541 : vector<8x32xf32>
    %543 = arith.addf %540, %542 : vector<8x32xf32>
    %cst_144 = arith.constant dense<0.000000e+00> : vector<8x96xf32>
    %544 = tpu.matmul %543, %1, %cst_144 {dimension_numbers = #tpu.dot_dimension_numbers<[1], [0], [0], [1], [0, 0, 1, 1], [], []>} : vector<8x32xf32>, vector<32x96xf32>, vector<8x96xf32> -> vector<8x96xf32>
    %545 = arith.addf %544, %9 : vector<8x96xf32>
    %cst_145 = arith.constant dense<0.000000e+00> : vector<8x96xf32>
    %546 = tpu.matmul %517, %3, %cst_145 {dimension_numbers = #tpu.dot_dimension_numbers<[1], [0], [0], [1], [0, 0, 1, 1], [], []>} : vector<8x32xf32>, vector<32x96xf32>, vector<8x96xf32> -> vector<8x96xf32>
    %547 = vector.extract_strided_slice %545 {offsets = [0, 0], sizes = [8, 64], strides = [1, 1]} : vector<8x96xf32> to vector<8x64xf32>
    %548 = vector.extract_strided_slice %546 {offsets = [0, 0], sizes = [8, 64], strides = [1, 1]} : vector<8x96xf32> to vector<8x64xf32>
    %549 = arith.addf %547, %548 : vector<8x64xf32>
    %cst_146 = arith.constant 5.000000e-01 : f32
    %550 = vector.broadcast %cst_146 : f32 to vector<8x64xf32>
    %551 = arith.mulf %550, %549 : vector<8x64xf32>
    %552 = math.tanh %551 : vector<8x64xf32>
    %cst_147 = arith.constant 5.000000e-01 : f32
    %553 = vector.broadcast %cst_147 : f32 to vector<8x64xf32>
    %554 = arith.mulf %553, %552 : vector<8x64xf32>
    %cst_148 = arith.constant 5.000000e-01 : f32
    %555 = vector.broadcast %cst_148 : f32 to vector<8x64xf32>
    %556 = arith.addf %554, %555 : vector<8x64xf32>
    %557 = vector.extract_strided_slice %556 {offsets = [0, 0], sizes = [8, 32], strides = [1, 1]} : vector<8x64xf32> to vector<8x32xf32>
    %558 = vector.extract_strided_slice %556 {offsets = [0, 32], sizes = [8, 32], strides = [1, 1]} : vector<8x64xf32> to vector<8x32xf32>
    %559 = vector.extract_strided_slice %545 {offsets = [0, 64], sizes = [8, 32], strides = [1, 1]} : vector<8x96xf32> to vector<8x32xf32>
    %560 = vector.extract_strided_slice %546 {offsets = [0, 64], sizes = [8, 32], strides = [1, 1]} : vector<8x96xf32> to vector<8x32xf32>
    %561 = arith.addf %560, %15 : vector<8x32xf32>
    %562 = arith.mulf %557, %561 : vector<8x32xf32>
    %563 = arith.addf %559, %562 : vector<8x32xf32>
    %564 = math.tanh %563 : vector<8x32xf32>
    %565 = arith.subf %517, %564 : vector<8x32xf32>
    %566 = arith.mulf %558, %565 : vector<8x32xf32>
    %567 = arith.addf %564, %566 : vector<8x32xf32>
    %c11 = arith.constant 11 : index
    %c0_149 = arith.constant 0 : index
    %c0_150 = arith.constant 0 : index
    %568 = vector.load %arg1[%c11, %c0_149, %c0_150] : memref<16x8x4xf32, #tpu.memory_space<vmem>>, vector<1x8x4xf32>
    %569 = vector.shape_cast %568 : vector<1x8x4xf32> to vector<8x4xf32>
    %cst_151 = arith.constant dense<0.000000e+00> : vector<8x96xf32>
    %570 = tpu.matmul %569, %0, %cst_151 {dimension_numbers = #tpu.dot_dimension_numbers<[1], [0], [0], [1], [0, 0, 1, 1], [], []>} : vector<8x4xf32>, vector<4x96xf32>, vector<8x96xf32> -> vector<8x96xf32>
    %571 = arith.addf %570, %6 : vector<8x96xf32>
    %cst_152 = arith.constant dense<0.000000e+00> : vector<8x96xf32>
    %572 = tpu.matmul %543, %2, %cst_152 {dimension_numbers = #tpu.dot_dimension_numbers<[1], [0], [0], [1], [0, 0, 1, 1], [], []>} : vector<8x32xf32>, vector<32x96xf32>, vector<8x96xf32> -> vector<8x96xf32>
    %573 = vector.extract_strided_slice %571 {offsets = [0, 0], sizes = [8, 64], strides = [1, 1]} : vector<8x96xf32> to vector<8x64xf32>
    %574 = vector.extract_strided_slice %572 {offsets = [0, 0], sizes = [8, 64], strides = [1, 1]} : vector<8x96xf32> to vector<8x64xf32>
    %575 = arith.addf %573, %574 : vector<8x64xf32>
    %cst_153 = arith.constant 5.000000e-01 : f32
    %576 = vector.broadcast %cst_153 : f32 to vector<8x64xf32>
    %577 = arith.mulf %576, %575 : vector<8x64xf32>
    %578 = math.tanh %577 : vector<8x64xf32>
    %cst_154 = arith.constant 5.000000e-01 : f32
    %579 = vector.broadcast %cst_154 : f32 to vector<8x64xf32>
    %580 = arith.mulf %579, %578 : vector<8x64xf32>
    %cst_155 = arith.constant 5.000000e-01 : f32
    %581 = vector.broadcast %cst_155 : f32 to vector<8x64xf32>
    %582 = arith.addf %580, %581 : vector<8x64xf32>
    %583 = vector.extract_strided_slice %582 {offsets = [0, 0], sizes = [8, 32], strides = [1, 1]} : vector<8x64xf32> to vector<8x32xf32>
    %584 = vector.extract_strided_slice %582 {offsets = [0, 32], sizes = [8, 32], strides = [1, 1]} : vector<8x64xf32> to vector<8x32xf32>
    %585 = vector.extract_strided_slice %571 {offsets = [0, 64], sizes = [8, 32], strides = [1, 1]} : vector<8x96xf32> to vector<8x32xf32>
    %586 = vector.extract_strided_slice %572 {offsets = [0, 64], sizes = [8, 32], strides = [1, 1]} : vector<8x96xf32> to vector<8x32xf32>
    %587 = arith.addf %586, %12 : vector<8x32xf32>
    %588 = arith.mulf %583, %587 : vector<8x32xf32>
    %589 = arith.addf %585, %588 : vector<8x32xf32>
    %590 = math.tanh %589 : vector<8x32xf32>
    %591 = arith.subf %543, %590 : vector<8x32xf32>
    %592 = arith.mulf %584, %591 : vector<8x32xf32>
    %593 = arith.addf %590, %592 : vector<8x32xf32>
    %cst_156 = arith.constant dense<0.000000e+00> : vector<8x96xf32>
    %594 = tpu.matmul %593, %1, %cst_156 {dimension_numbers = #tpu.dot_dimension_numbers<[1], [0], [0], [1], [0, 0, 1, 1], [], []>} : vector<8x32xf32>, vector<32x96xf32>, vector<8x96xf32> -> vector<8x96xf32>
    %595 = arith.addf %594, %9 : vector<8x96xf32>
    %cst_157 = arith.constant dense<0.000000e+00> : vector<8x96xf32>
    %596 = tpu.matmul %567, %3, %cst_157 {dimension_numbers = #tpu.dot_dimension_numbers<[1], [0], [0], [1], [0, 0, 1, 1], [], []>} : vector<8x32xf32>, vector<32x96xf32>, vector<8x96xf32> -> vector<8x96xf32>
    %597 = vector.extract_strided_slice %595 {offsets = [0, 0], sizes = [8, 64], strides = [1, 1]} : vector<8x96xf32> to vector<8x64xf32>
    %598 = vector.extract_strided_slice %596 {offsets = [0, 0], sizes = [8, 64], strides = [1, 1]} : vector<8x96xf32> to vector<8x64xf32>
    %599 = arith.addf %597, %598 : vector<8x64xf32>
    %cst_158 = arith.constant 5.000000e-01 : f32
    %600 = vector.broadcast %cst_158 : f32 to vector<8x64xf32>
    %601 = arith.mulf %600, %599 : vector<8x64xf32>
    %602 = math.tanh %601 : vector<8x64xf32>
    %cst_159 = arith.constant 5.000000e-01 : f32
    %603 = vector.broadcast %cst_159 : f32 to vector<8x64xf32>
    %604 = arith.mulf %603, %602 : vector<8x64xf32>
    %cst_160 = arith.constant 5.000000e-01 : f32
    %605 = vector.broadcast %cst_160 : f32 to vector<8x64xf32>
    %606 = arith.addf %604, %605 : vector<8x64xf32>
    %607 = vector.extract_strided_slice %606 {offsets = [0, 0], sizes = [8, 32], strides = [1, 1]} : vector<8x64xf32> to vector<8x32xf32>
    %608 = vector.extract_strided_slice %606 {offsets = [0, 32], sizes = [8, 32], strides = [1, 1]} : vector<8x64xf32> to vector<8x32xf32>
    %609 = vector.extract_strided_slice %595 {offsets = [0, 64], sizes = [8, 32], strides = [1, 1]} : vector<8x96xf32> to vector<8x32xf32>
    %610 = vector.extract_strided_slice %596 {offsets = [0, 64], sizes = [8, 32], strides = [1, 1]} : vector<8x96xf32> to vector<8x32xf32>
    %611 = arith.addf %610, %15 : vector<8x32xf32>
    %612 = arith.mulf %607, %611 : vector<8x32xf32>
    %613 = arith.addf %609, %612 : vector<8x32xf32>
    %614 = math.tanh %613 : vector<8x32xf32>
    %615 = arith.subf %567, %614 : vector<8x32xf32>
    %616 = arith.mulf %608, %615 : vector<8x32xf32>
    %617 = arith.addf %614, %616 : vector<8x32xf32>
    %c12 = arith.constant 12 : index
    %c0_161 = arith.constant 0 : index
    %c0_162 = arith.constant 0 : index
    %618 = vector.load %arg1[%c12, %c0_161, %c0_162] : memref<16x8x4xf32, #tpu.memory_space<vmem>>, vector<1x8x4xf32>
    %619 = vector.shape_cast %618 : vector<1x8x4xf32> to vector<8x4xf32>
    %cst_163 = arith.constant dense<0.000000e+00> : vector<8x96xf32>
    %620 = tpu.matmul %619, %0, %cst_163 {dimension_numbers = #tpu.dot_dimension_numbers<[1], [0], [0], [1], [0, 0, 1, 1], [], []>} : vector<8x4xf32>, vector<4x96xf32>, vector<8x96xf32> -> vector<8x96xf32>
    %621 = arith.addf %620, %6 : vector<8x96xf32>
    %cst_164 = arith.constant dense<0.000000e+00> : vector<8x96xf32>
    %622 = tpu.matmul %593, %2, %cst_164 {dimension_numbers = #tpu.dot_dimension_numbers<[1], [0], [0], [1], [0, 0, 1, 1], [], []>} : vector<8x32xf32>, vector<32x96xf32>, vector<8x96xf32> -> vector<8x96xf32>
    %623 = vector.extract_strided_slice %621 {offsets = [0, 0], sizes = [8, 64], strides = [1, 1]} : vector<8x96xf32> to vector<8x64xf32>
    %624 = vector.extract_strided_slice %622 {offsets = [0, 0], sizes = [8, 64], strides = [1, 1]} : vector<8x96xf32> to vector<8x64xf32>
    %625 = arith.addf %623, %624 : vector<8x64xf32>
    %cst_165 = arith.constant 5.000000e-01 : f32
    %626 = vector.broadcast %cst_165 : f32 to vector<8x64xf32>
    %627 = arith.mulf %626, %625 : vector<8x64xf32>
    %628 = math.tanh %627 : vector<8x64xf32>
    %cst_166 = arith.constant 5.000000e-01 : f32
    %629 = vector.broadcast %cst_166 : f32 to vector<8x64xf32>
    %630 = arith.mulf %629, %628 : vector<8x64xf32>
    %cst_167 = arith.constant 5.000000e-01 : f32
    %631 = vector.broadcast %cst_167 : f32 to vector<8x64xf32>
    %632 = arith.addf %630, %631 : vector<8x64xf32>
    %633 = vector.extract_strided_slice %632 {offsets = [0, 0], sizes = [8, 32], strides = [1, 1]} : vector<8x64xf32> to vector<8x32xf32>
    %634 = vector.extract_strided_slice %632 {offsets = [0, 32], sizes = [8, 32], strides = [1, 1]} : vector<8x64xf32> to vector<8x32xf32>
    %635 = vector.extract_strided_slice %621 {offsets = [0, 64], sizes = [8, 32], strides = [1, 1]} : vector<8x96xf32> to vector<8x32xf32>
    %636 = vector.extract_strided_slice %622 {offsets = [0, 64], sizes = [8, 32], strides = [1, 1]} : vector<8x96xf32> to vector<8x32xf32>
    %637 = arith.addf %636, %12 : vector<8x32xf32>
    %638 = arith.mulf %633, %637 : vector<8x32xf32>
    %639 = arith.addf %635, %638 : vector<8x32xf32>
    %640 = math.tanh %639 : vector<8x32xf32>
    %641 = arith.subf %593, %640 : vector<8x32xf32>
    %642 = arith.mulf %634, %641 : vector<8x32xf32>
    %643 = arith.addf %640, %642 : vector<8x32xf32>
    %cst_168 = arith.constant dense<0.000000e+00> : vector<8x96xf32>
    %644 = tpu.matmul %643, %1, %cst_168 {dimension_numbers = #tpu.dot_dimension_numbers<[1], [0], [0], [1], [0, 0, 1, 1], [], []>} : vector<8x32xf32>, vector<32x96xf32>, vector<8x96xf32> -> vector<8x96xf32>
    %645 = arith.addf %644, %9 : vector<8x96xf32>
    %cst_169 = arith.constant dense<0.000000e+00> : vector<8x96xf32>
    %646 = tpu.matmul %617, %3, %cst_169 {dimension_numbers = #tpu.dot_dimension_numbers<[1], [0], [0], [1], [0, 0, 1, 1], [], []>} : vector<8x32xf32>, vector<32x96xf32>, vector<8x96xf32> -> vector<8x96xf32>
    %647 = vector.extract_strided_slice %645 {offsets = [0, 0], sizes = [8, 64], strides = [1, 1]} : vector<8x96xf32> to vector<8x64xf32>
    %648 = vector.extract_strided_slice %646 {offsets = [0, 0], sizes = [8, 64], strides = [1, 1]} : vector<8x96xf32> to vector<8x64xf32>
    %649 = arith.addf %647, %648 : vector<8x64xf32>
    %cst_170 = arith.constant 5.000000e-01 : f32
    %650 = vector.broadcast %cst_170 : f32 to vector<8x64xf32>
    %651 = arith.mulf %650, %649 : vector<8x64xf32>
    %652 = math.tanh %651 : vector<8x64xf32>
    %cst_171 = arith.constant 5.000000e-01 : f32
    %653 = vector.broadcast %cst_171 : f32 to vector<8x64xf32>
    %654 = arith.mulf %653, %652 : vector<8x64xf32>
    %cst_172 = arith.constant 5.000000e-01 : f32
    %655 = vector.broadcast %cst_172 : f32 to vector<8x64xf32>
    %656 = arith.addf %654, %655 : vector<8x64xf32>
    %657 = vector.extract_strided_slice %656 {offsets = [0, 0], sizes = [8, 32], strides = [1, 1]} : vector<8x64xf32> to vector<8x32xf32>
    %658 = vector.extract_strided_slice %656 {offsets = [0, 32], sizes = [8, 32], strides = [1, 1]} : vector<8x64xf32> to vector<8x32xf32>
    %659 = vector.extract_strided_slice %645 {offsets = [0, 64], sizes = [8, 32], strides = [1, 1]} : vector<8x96xf32> to vector<8x32xf32>
    %660 = vector.extract_strided_slice %646 {offsets = [0, 64], sizes = [8, 32], strides = [1, 1]} : vector<8x96xf32> to vector<8x32xf32>
    %661 = arith.addf %660, %15 : vector<8x32xf32>
    %662 = arith.mulf %657, %661 : vector<8x32xf32>
    %663 = arith.addf %659, %662 : vector<8x32xf32>
    %664 = math.tanh %663 : vector<8x32xf32>
    %665 = arith.subf %617, %664 : vector<8x32xf32>
    %666 = arith.mulf %658, %665 : vector<8x32xf32>
    %667 = arith.addf %664, %666 : vector<8x32xf32>
    %c13 = arith.constant 13 : index
    %c0_173 = arith.constant 0 : index
    %c0_174 = arith.constant 0 : index
    %668 = vector.load %arg1[%c13, %c0_173, %c0_174] : memref<16x8x4xf32, #tpu.memory_space<vmem>>, vector<1x8x4xf32>
    %669 = vector.shape_cast %668 : vector<1x8x4xf32> to vector<8x4xf32>
    %cst_175 = arith.constant dense<0.000000e+00> : vector<8x96xf32>
    %670 = tpu.matmul %669, %0, %cst_175 {dimension_numbers = #tpu.dot_dimension_numbers<[1], [0], [0], [1], [0, 0, 1, 1], [], []>} : vector<8x4xf32>, vector<4x96xf32>, vector<8x96xf32> -> vector<8x96xf32>
    %671 = arith.addf %670, %6 : vector<8x96xf32>
    %cst_176 = arith.constant dense<0.000000e+00> : vector<8x96xf32>
    %672 = tpu.matmul %643, %2, %cst_176 {dimension_numbers = #tpu.dot_dimension_numbers<[1], [0], [0], [1], [0, 0, 1, 1], [], []>} : vector<8x32xf32>, vector<32x96xf32>, vector<8x96xf32> -> vector<8x96xf32>
    %673 = vector.extract_strided_slice %671 {offsets = [0, 0], sizes = [8, 64], strides = [1, 1]} : vector<8x96xf32> to vector<8x64xf32>
    %674 = vector.extract_strided_slice %672 {offsets = [0, 0], sizes = [8, 64], strides = [1, 1]} : vector<8x96xf32> to vector<8x64xf32>
    %675 = arith.addf %673, %674 : vector<8x64xf32>
    %cst_177 = arith.constant 5.000000e-01 : f32
    %676 = vector.broadcast %cst_177 : f32 to vector<8x64xf32>
    %677 = arith.mulf %676, %675 : vector<8x64xf32>
    %678 = math.tanh %677 : vector<8x64xf32>
    %cst_178 = arith.constant 5.000000e-01 : f32
    %679 = vector.broadcast %cst_178 : f32 to vector<8x64xf32>
    %680 = arith.mulf %679, %678 : vector<8x64xf32>
    %cst_179 = arith.constant 5.000000e-01 : f32
    %681 = vector.broadcast %cst_179 : f32 to vector<8x64xf32>
    %682 = arith.addf %680, %681 : vector<8x64xf32>
    %683 = vector.extract_strided_slice %682 {offsets = [0, 0], sizes = [8, 32], strides = [1, 1]} : vector<8x64xf32> to vector<8x32xf32>
    %684 = vector.extract_strided_slice %682 {offsets = [0, 32], sizes = [8, 32], strides = [1, 1]} : vector<8x64xf32> to vector<8x32xf32>
    %685 = vector.extract_strided_slice %671 {offsets = [0, 64], sizes = [8, 32], strides = [1, 1]} : vector<8x96xf32> to vector<8x32xf32>
    %686 = vector.extract_strided_slice %672 {offsets = [0, 64], sizes = [8, 32], strides = [1, 1]} : vector<8x96xf32> to vector<8x32xf32>
    %687 = arith.addf %686, %12 : vector<8x32xf32>
    %688 = arith.mulf %683, %687 : vector<8x32xf32>
    %689 = arith.addf %685, %688 : vector<8x32xf32>
    %690 = math.tanh %689 : vector<8x32xf32>
    %691 = arith.subf %643, %690 : vector<8x32xf32>
    %692 = arith.mulf %684, %691 : vector<8x32xf32>
    %693 = arith.addf %690, %692 : vector<8x32xf32>
    %cst_180 = arith.constant dense<0.000000e+00> : vector<8x96xf32>
    %694 = tpu.matmul %693, %1, %cst_180 {dimension_numbers = #tpu.dot_dimension_numbers<[1], [0], [0], [1], [0, 0, 1, 1], [], []>} : vector<8x32xf32>, vector<32x96xf32>, vector<8x96xf32> -> vector<8x96xf32>
    %695 = arith.addf %694, %9 : vector<8x96xf32>
    %cst_181 = arith.constant dense<0.000000e+00> : vector<8x96xf32>
    %696 = tpu.matmul %667, %3, %cst_181 {dimension_numbers = #tpu.dot_dimension_numbers<[1], [0], [0], [1], [0, 0, 1, 1], [], []>} : vector<8x32xf32>, vector<32x96xf32>, vector<8x96xf32> -> vector<8x96xf32>
    %697 = vector.extract_strided_slice %695 {offsets = [0, 0], sizes = [8, 64], strides = [1, 1]} : vector<8x96xf32> to vector<8x64xf32>
    %698 = vector.extract_strided_slice %696 {offsets = [0, 0], sizes = [8, 64], strides = [1, 1]} : vector<8x96xf32> to vector<8x64xf32>
    %699 = arith.addf %697, %698 : vector<8x64xf32>
    %cst_182 = arith.constant 5.000000e-01 : f32
    %700 = vector.broadcast %cst_182 : f32 to vector<8x64xf32>
    %701 = arith.mulf %700, %699 : vector<8x64xf32>
    %702 = math.tanh %701 : vector<8x64xf32>
    %cst_183 = arith.constant 5.000000e-01 : f32
    %703 = vector.broadcast %cst_183 : f32 to vector<8x64xf32>
    %704 = arith.mulf %703, %702 : vector<8x64xf32>
    %cst_184 = arith.constant 5.000000e-01 : f32
    %705 = vector.broadcast %cst_184 : f32 to vector<8x64xf32>
    %706 = arith.addf %704, %705 : vector<8x64xf32>
    %707 = vector.extract_strided_slice %706 {offsets = [0, 0], sizes = [8, 32], strides = [1, 1]} : vector<8x64xf32> to vector<8x32xf32>
    %708 = vector.extract_strided_slice %706 {offsets = [0, 32], sizes = [8, 32], strides = [1, 1]} : vector<8x64xf32> to vector<8x32xf32>
    %709 = vector.extract_strided_slice %695 {offsets = [0, 64], sizes = [8, 32], strides = [1, 1]} : vector<8x96xf32> to vector<8x32xf32>
    %710 = vector.extract_strided_slice %696 {offsets = [0, 64], sizes = [8, 32], strides = [1, 1]} : vector<8x96xf32> to vector<8x32xf32>
    %711 = arith.addf %710, %15 : vector<8x32xf32>
    %712 = arith.mulf %707, %711 : vector<8x32xf32>
    %713 = arith.addf %709, %712 : vector<8x32xf32>
    %714 = math.tanh %713 : vector<8x32xf32>
    %715 = arith.subf %667, %714 : vector<8x32xf32>
    %716 = arith.mulf %708, %715 : vector<8x32xf32>
    %717 = arith.addf %714, %716 : vector<8x32xf32>
    %c14 = arith.constant 14 : index
    %c0_185 = arith.constant 0 : index
    %c0_186 = arith.constant 0 : index
    %718 = vector.load %arg1[%c14, %c0_185, %c0_186] : memref<16x8x4xf32, #tpu.memory_space<vmem>>, vector<1x8x4xf32>
    %719 = vector.shape_cast %718 : vector<1x8x4xf32> to vector<8x4xf32>
    %cst_187 = arith.constant dense<0.000000e+00> : vector<8x96xf32>
    %720 = tpu.matmul %719, %0, %cst_187 {dimension_numbers = #tpu.dot_dimension_numbers<[1], [0], [0], [1], [0, 0, 1, 1], [], []>} : vector<8x4xf32>, vector<4x96xf32>, vector<8x96xf32> -> vector<8x96xf32>
    %721 = arith.addf %720, %6 : vector<8x96xf32>
    %cst_188 = arith.constant dense<0.000000e+00> : vector<8x96xf32>
    %722 = tpu.matmul %693, %2, %cst_188 {dimension_numbers = #tpu.dot_dimension_numbers<[1], [0], [0], [1], [0, 0, 1, 1], [], []>} : vector<8x32xf32>, vector<32x96xf32>, vector<8x96xf32> -> vector<8x96xf32>
    %723 = vector.extract_strided_slice %721 {offsets = [0, 0], sizes = [8, 64], strides = [1, 1]} : vector<8x96xf32> to vector<8x64xf32>
    %724 = vector.extract_strided_slice %722 {offsets = [0, 0], sizes = [8, 64], strides = [1, 1]} : vector<8x96xf32> to vector<8x64xf32>
    %725 = arith.addf %723, %724 : vector<8x64xf32>
    %cst_189 = arith.constant 5.000000e-01 : f32
    %726 = vector.broadcast %cst_189 : f32 to vector<8x64xf32>
    %727 = arith.mulf %726, %725 : vector<8x64xf32>
    %728 = math.tanh %727 : vector<8x64xf32>
    %cst_190 = arith.constant 5.000000e-01 : f32
    %729 = vector.broadcast %cst_190 : f32 to vector<8x64xf32>
    %730 = arith.mulf %729, %728 : vector<8x64xf32>
    %cst_191 = arith.constant 5.000000e-01 : f32
    %731 = vector.broadcast %cst_191 : f32 to vector<8x64xf32>
    %732 = arith.addf %730, %731 : vector<8x64xf32>
    %733 = vector.extract_strided_slice %732 {offsets = [0, 0], sizes = [8, 32], strides = [1, 1]} : vector<8x64xf32> to vector<8x32xf32>
    %734 = vector.extract_strided_slice %732 {offsets = [0, 32], sizes = [8, 32], strides = [1, 1]} : vector<8x64xf32> to vector<8x32xf32>
    %735 = vector.extract_strided_slice %721 {offsets = [0, 64], sizes = [8, 32], strides = [1, 1]} : vector<8x96xf32> to vector<8x32xf32>
    %736 = vector.extract_strided_slice %722 {offsets = [0, 64], sizes = [8, 32], strides = [1, 1]} : vector<8x96xf32> to vector<8x32xf32>
    %737 = arith.addf %736, %12 : vector<8x32xf32>
    %738 = arith.mulf %733, %737 : vector<8x32xf32>
    %739 = arith.addf %735, %738 : vector<8x32xf32>
    %740 = math.tanh %739 : vector<8x32xf32>
    %741 = arith.subf %693, %740 : vector<8x32xf32>
    %742 = arith.mulf %734, %741 : vector<8x32xf32>
    %743 = arith.addf %740, %742 : vector<8x32xf32>
    %cst_192 = arith.constant dense<0.000000e+00> : vector<8x96xf32>
    %744 = tpu.matmul %743, %1, %cst_192 {dimension_numbers = #tpu.dot_dimension_numbers<[1], [0], [0], [1], [0, 0, 1, 1], [], []>} : vector<8x32xf32>, vector<32x96xf32>, vector<8x96xf32> -> vector<8x96xf32>
    %745 = arith.addf %744, %9 : vector<8x96xf32>
    %cst_193 = arith.constant dense<0.000000e+00> : vector<8x96xf32>
    %746 = tpu.matmul %717, %3, %cst_193 {dimension_numbers = #tpu.dot_dimension_numbers<[1], [0], [0], [1], [0, 0, 1, 1], [], []>} : vector<8x32xf32>, vector<32x96xf32>, vector<8x96xf32> -> vector<8x96xf32>
    %747 = vector.extract_strided_slice %745 {offsets = [0, 0], sizes = [8, 64], strides = [1, 1]} : vector<8x96xf32> to vector<8x64xf32>
    %748 = vector.extract_strided_slice %746 {offsets = [0, 0], sizes = [8, 64], strides = [1, 1]} : vector<8x96xf32> to vector<8x64xf32>
    %749 = arith.addf %747, %748 : vector<8x64xf32>
    %cst_194 = arith.constant 5.000000e-01 : f32
    %750 = vector.broadcast %cst_194 : f32 to vector<8x64xf32>
    %751 = arith.mulf %750, %749 : vector<8x64xf32>
    %752 = math.tanh %751 : vector<8x64xf32>
    %cst_195 = arith.constant 5.000000e-01 : f32
    %753 = vector.broadcast %cst_195 : f32 to vector<8x64xf32>
    %754 = arith.mulf %753, %752 : vector<8x64xf32>
    %cst_196 = arith.constant 5.000000e-01 : f32
    %755 = vector.broadcast %cst_196 : f32 to vector<8x64xf32>
    %756 = arith.addf %754, %755 : vector<8x64xf32>
    %757 = vector.extract_strided_slice %756 {offsets = [0, 0], sizes = [8, 32], strides = [1, 1]} : vector<8x64xf32> to vector<8x32xf32>
    %758 = vector.extract_strided_slice %756 {offsets = [0, 32], sizes = [8, 32], strides = [1, 1]} : vector<8x64xf32> to vector<8x32xf32>
    %759 = vector.extract_strided_slice %745 {offsets = [0, 64], sizes = [8, 32], strides = [1, 1]} : vector<8x96xf32> to vector<8x32xf32>
    %760 = vector.extract_strided_slice %746 {offsets = [0, 64], sizes = [8, 32], strides = [1, 1]} : vector<8x96xf32> to vector<8x32xf32>
    %761 = arith.addf %760, %15 : vector<8x32xf32>
    %762 = arith.mulf %757, %761 : vector<8x32xf32>
    %763 = arith.addf %759, %762 : vector<8x32xf32>
    %764 = math.tanh %763 : vector<8x32xf32>
    %765 = arith.subf %717, %764 : vector<8x32xf32>
    %766 = arith.mulf %758, %765 : vector<8x32xf32>
    %767 = arith.addf %764, %766 : vector<8x32xf32>
    %c15 = arith.constant 15 : index
    %c0_197 = arith.constant 0 : index
    %c0_198 = arith.constant 0 : index
    %768 = vector.load %arg1[%c15, %c0_197, %c0_198] : memref<16x8x4xf32, #tpu.memory_space<vmem>>, vector<1x8x4xf32>
    %769 = vector.shape_cast %768 : vector<1x8x4xf32> to vector<8x4xf32>
    %cst_199 = arith.constant dense<0.000000e+00> : vector<8x96xf32>
    %770 = tpu.matmul %769, %0, %cst_199 {dimension_numbers = #tpu.dot_dimension_numbers<[1], [0], [0], [1], [0, 0, 1, 1], [], []>} : vector<8x4xf32>, vector<4x96xf32>, vector<8x96xf32> -> vector<8x96xf32>
    %771 = arith.addf %770, %6 : vector<8x96xf32>
    %cst_200 = arith.constant dense<0.000000e+00> : vector<8x96xf32>
    %772 = tpu.matmul %743, %2, %cst_200 {dimension_numbers = #tpu.dot_dimension_numbers<[1], [0], [0], [1], [0, 0, 1, 1], [], []>} : vector<8x32xf32>, vector<32x96xf32>, vector<8x96xf32> -> vector<8x96xf32>
    %773 = vector.extract_strided_slice %771 {offsets = [0, 0], sizes = [8, 64], strides = [1, 1]} : vector<8x96xf32> to vector<8x64xf32>
    %774 = vector.extract_strided_slice %772 {offsets = [0, 0], sizes = [8, 64], strides = [1, 1]} : vector<8x96xf32> to vector<8x64xf32>
    %775 = arith.addf %773, %774 : vector<8x64xf32>
    %cst_201 = arith.constant 5.000000e-01 : f32
    %776 = vector.broadcast %cst_201 : f32 to vector<8x64xf32>
    %777 = arith.mulf %776, %775 : vector<8x64xf32>
    %778 = math.tanh %777 : vector<8x64xf32>
    %cst_202 = arith.constant 5.000000e-01 : f32
    %779 = vector.broadcast %cst_202 : f32 to vector<8x64xf32>
    %780 = arith.mulf %779, %778 : vector<8x64xf32>
    %cst_203 = arith.constant 5.000000e-01 : f32
    %781 = vector.broadcast %cst_203 : f32 to vector<8x64xf32>
    %782 = arith.addf %780, %781 : vector<8x64xf32>
    %783 = vector.extract_strided_slice %782 {offsets = [0, 0], sizes = [8, 32], strides = [1, 1]} : vector<8x64xf32> to vector<8x32xf32>
    %784 = vector.extract_strided_slice %782 {offsets = [0, 32], sizes = [8, 32], strides = [1, 1]} : vector<8x64xf32> to vector<8x32xf32>
    %785 = vector.extract_strided_slice %771 {offsets = [0, 64], sizes = [8, 32], strides = [1, 1]} : vector<8x96xf32> to vector<8x32xf32>
    %786 = vector.extract_strided_slice %772 {offsets = [0, 64], sizes = [8, 32], strides = [1, 1]} : vector<8x96xf32> to vector<8x32xf32>
    %787 = arith.addf %786, %12 : vector<8x32xf32>
    %788 = arith.mulf %783, %787 : vector<8x32xf32>
    %789 = arith.addf %785, %788 : vector<8x32xf32>
    %790 = math.tanh %789 : vector<8x32xf32>
    %791 = arith.subf %743, %790 : vector<8x32xf32>
    %792 = arith.mulf %784, %791 : vector<8x32xf32>
    %793 = arith.addf %790, %792 : vector<8x32xf32>
    %cst_204 = arith.constant dense<0.000000e+00> : vector<8x96xf32>
    %794 = tpu.matmul %793, %1, %cst_204 {dimension_numbers = #tpu.dot_dimension_numbers<[1], [0], [0], [1], [0, 0, 1, 1], [], []>} : vector<8x32xf32>, vector<32x96xf32>, vector<8x96xf32> -> vector<8x96xf32>
    %795 = arith.addf %794, %9 : vector<8x96xf32>
    %cst_205 = arith.constant dense<0.000000e+00> : vector<8x96xf32>
    %796 = tpu.matmul %767, %3, %cst_205 {dimension_numbers = #tpu.dot_dimension_numbers<[1], [0], [0], [1], [0, 0, 1, 1], [], []>} : vector<8x32xf32>, vector<32x96xf32>, vector<8x96xf32> -> vector<8x96xf32>
    %797 = vector.extract_strided_slice %795 {offsets = [0, 0], sizes = [8, 64], strides = [1, 1]} : vector<8x96xf32> to vector<8x64xf32>
    %798 = vector.extract_strided_slice %796 {offsets = [0, 0], sizes = [8, 64], strides = [1, 1]} : vector<8x96xf32> to vector<8x64xf32>
    %799 = arith.addf %797, %798 : vector<8x64xf32>
    %cst_206 = arith.constant 5.000000e-01 : f32
    %800 = vector.broadcast %cst_206 : f32 to vector<8x64xf32>
    %801 = arith.mulf %800, %799 : vector<8x64xf32>
    %802 = math.tanh %801 : vector<8x64xf32>
    %cst_207 = arith.constant 5.000000e-01 : f32
    %803 = vector.broadcast %cst_207 : f32 to vector<8x64xf32>
    %804 = arith.mulf %803, %802 : vector<8x64xf32>
    %cst_208 = arith.constant 5.000000e-01 : f32
    %805 = vector.broadcast %cst_208 : f32 to vector<8x64xf32>
    %806 = arith.addf %804, %805 : vector<8x64xf32>
    %807 = vector.extract_strided_slice %806 {offsets = [0, 0], sizes = [8, 32], strides = [1, 1]} : vector<8x64xf32> to vector<8x32xf32>
    %808 = vector.extract_strided_slice %806 {offsets = [0, 32], sizes = [8, 32], strides = [1, 1]} : vector<8x64xf32> to vector<8x32xf32>
    %809 = vector.extract_strided_slice %795 {offsets = [0, 64], sizes = [8, 32], strides = [1, 1]} : vector<8x96xf32> to vector<8x32xf32>
    %810 = vector.extract_strided_slice %796 {offsets = [0, 64], sizes = [8, 32], strides = [1, 1]} : vector<8x96xf32> to vector<8x32xf32>
    %811 = arith.addf %810, %15 : vector<8x32xf32>
    %812 = arith.mulf %807, %811 : vector<8x32xf32>
    %813 = arith.addf %809, %812 : vector<8x32xf32>
    %814 = math.tanh %813 : vector<8x32xf32>
    %815 = arith.subf %767, %814 : vector<8x32xf32>
    %816 = arith.mulf %808, %815 : vector<8x32xf32>
    %817 = arith.addf %814, %816 : vector<8x32xf32>
    %c0_209 = arith.constant 0 : index
    %c0_210 = arith.constant 0 : index
    %818 = vector.load %arg10[%c0_209, %c0_210] : memref<32x32xf32, #tpu.memory_space<vmem>>, vector<32x32xf32>
    %c0_211 = arith.constant 0 : index
    %c0_212 = arith.constant 0 : index
    %819 = vector.load %arg11[%c0_211, %c0_212] : memref<1x32xf32, #tpu.memory_space<vmem>>, vector<1x32xf32>
    %cst_213 = arith.constant dense<0.000000e+00> : vector<8x32xf32>
    %820 = tpu.matmul %817, %818, %cst_213 {dimension_numbers = #tpu.dot_dimension_numbers<[1], [0], [0], [1], [0, 0, 1, 1], [], []>} : vector<8x32xf32>, vector<32x32xf32>, vector<8x32xf32> -> vector<8x32xf32>
    %821 = vector.broadcast %819 : vector<1x32xf32> to vector<8x32xf32>
    %822 = arith.addf %820, %821 : vector<8x32xf32>
    %cst_214 = arith.constant 0.000000e+00 : f32
    %823 = vector.broadcast %cst_214 : f32 to vector<8x32xf32>
    %824 = arith.maximumf %822, %823 : vector<8x32xf32>
    %c0_215 = arith.constant 0 : index
    %c0_216 = arith.constant 0 : index
    %825 = vector.load %arg12[%c0_215, %c0_216] : memref<32x16xf32, #tpu.memory_space<vmem>>, vector<32x16xf32>
    %c0_217 = arith.constant 0 : index
    %c0_218 = arith.constant 0 : index
    %826 = vector.load %arg13[%c0_217, %c0_218] : memref<1x16xf32, #tpu.memory_space<vmem>>, vector<1x16xf32>
    %cst_219 = arith.constant dense<0.000000e+00> : vector<8x16xf32>
    %827 = tpu.matmul %824, %825, %cst_219 {dimension_numbers = #tpu.dot_dimension_numbers<[1], [0], [0], [1], [0, 0, 1, 1], [], []>} : vector<8x32xf32>, vector<32x16xf32>, vector<8x16xf32> -> vector<8x16xf32>
    %828 = vector.broadcast %826 : vector<1x16xf32> to vector<8x16xf32>
    %829 = arith.addf %827, %828 : vector<8x16xf32>
    %cst_220 = arith.constant 0.000000e+00 : f32
    %830 = vector.broadcast %cst_220 : f32 to vector<8x16xf32>
    %831 = arith.maximumf %829, %830 : vector<8x16xf32>
    %c0_221 = arith.constant 0 : index
    %c0_222 = arith.constant 0 : index
    %832 = vector.load %arg14[%c0_221, %c0_222] : memref<16x5xf32, #tpu.memory_space<vmem>>, vector<16x5xf32>
    %c0_223 = arith.constant 0 : index
    %c0_224 = arith.constant 0 : index
    %833 = vector.load %arg15[%c0_223, %c0_224] : memref<1x5xf32, #tpu.memory_space<vmem>>, vector<1x5xf32>
    %cst_225 = arith.constant dense<0.000000e+00> : vector<8x5xf32>
    %834 = tpu.matmul %831, %832, %cst_225 {dimension_numbers = #tpu.dot_dimension_numbers<[1], [0], [0], [1], [0, 0, 1, 1], [], []>} : vector<8x16xf32>, vector<16x5xf32>, vector<8x5xf32> -> vector<8x5xf32>
    %835 = vector.broadcast %833 : vector<1x5xf32> to vector<8x5xf32>
    %836 = arith.addf %834, %835 : vector<8x5xf32>
    %c0_226 = arith.constant 0 : index
    %c0_227 = arith.constant 0 : index
    %837 = vector.load %arg16[%c0_226, %c0_227] : memref<8x5xf32, #tpu.memory_space<vmem>>, vector<8x5xf32>
    tpu.vector_store %arg16[%c0_226, %c0_227], %836 {strides = array<i32>} : memref<8x5xf32, #tpu.memory_space<vmem>>, vector<8x5xf32>,
    return
  }
  func.func @transform_0(%arg0: i32) -> (i32, i32, i32) {
    %c0_i32 = arith.constant 0 : i32
    %c0_i32_0 = arith.constant 0 : i32
    %c0_i32_1 = arith.constant 0 : i32
    return %c0_i32, %arg0, %c0_i32_0 : i32, i32, i32
  }
  func.func @transform_1(%arg0: i32) -> (i32, i32) {
    %c0_i32 = arith.constant 0 : i32
    %c0_i32_0 = arith.constant 0 : i32
    %c0_i32_1 = arith.constant 0 : i32
    return %c0_i32, %c0_i32_0 : i32, i32
  }
  func.func @transform_2(%arg0: i32) -> (i32, i32) {
    %c0_i32 = arith.constant 0 : i32
    %c0_i32_0 = arith.constant 0 : i32
    %c0_i32_1 = arith.constant 0 : i32
    return %c0_i32, %c0_i32_0 : i32, i32
  }
  func.func @transform_3(%arg0: i32) -> (i32, i32) {
    %c0_i32 = arith.constant 0 : i32
    %c0_i32_0 = arith.constant 0 : i32
    %c0_i32_1 = arith.constant 0 : i32
    return %c0_i32, %c0_i32_0 : i32, i32
  }
  func.func @transform_4(%arg0: i32) -> (i32, i32) {
    %c0_i32 = arith.constant 0 : i32
    %c0_i32_0 = arith.constant 0 : i32
    %c0_i32_1 = arith.constant 0 : i32
    return %c0_i32, %c0_i32_0 : i32, i32
  }
  func.func @transform_5(%arg0: i32) -> (i32, i32) {
    %c0_i32 = arith.constant 0 : i32
    %c0_i32_0 = arith.constant 0 : i32
    %c0_i32_1 = arith.constant 0 : i32
    return %c0_i32, %c0_i32_0 : i32, i32
  }
  func.func @transform_6(%arg0: i32) -> (i32, i32) {
    %c0_i32 = arith.constant 0 : i32
    %c0_i32_0 = arith.constant 0 : i32
    %c0_i32_1 = arith.constant 0 : i32
    return %c0_i32, %c0_i32_0 : i32, i32
  }
  func.func @transform_7(%arg0: i32) -> (i32, i32) {
    %c0_i32 = arith.constant 0 : i32
    %c0_i32_0 = arith.constant 0 : i32
    %c0_i32_1 = arith.constant 0 : i32
    return %c0_i32, %c0_i32_0 : i32, i32
  }
  func.func @transform_8(%arg0: i32) -> (i32, i32) {
    %c0_i32 = arith.constant 0 : i32
    %c0_i32_0 = arith.constant 0 : i32
    %c0_i32_1 = arith.constant 0 : i32
    return %c0_i32, %c0_i32_0 : i32, i32
  }
  func.func @transform_9(%arg0: i32) -> (i32, i32) {
    %c0_i32 = arith.constant 0 : i32
    %c0_i32_0 = arith.constant 0 : i32
    %c0_i32_1 = arith.constant 0 : i32
    return %c0_i32, %c0_i32_0 : i32, i32
  }
  func.func @transform_10(%arg0: i32) -> (i32, i32) {
    %c0_i32 = arith.constant 0 : i32
    %c0_i32_0 = arith.constant 0 : i32
    %c0_i32_1 = arith.constant 0 : i32
    return %c0_i32, %c0_i32_0 : i32, i32
  }
  func.func @transform_11(%arg0: i32) -> (i32, i32) {
    %c0_i32 = arith.constant 0 : i32
    %c0_i32_0 = arith.constant 0 : i32
    %c0_i32_1 = arith.constant 0 : i32
    return %c0_i32, %c0_i32_0 : i32, i32
  }
  func.func @transform_12(%arg0: i32) -> (i32, i32) {
    %c0_i32 = arith.constant 0 : i32
    %c0_i32_0 = arith.constant 0 : i32
    %c0_i32_1 = arith.constant 0 : i32
    return %c0_i32, %c0_i32_0 : i32, i32
  }
  func.func @transform_13(%arg0: i32) -> (i32, i32) {
    %c0_i32 = arith.constant 0 : i32
    %c0_i32_0 = arith.constant 0 : i32
    %c0_i32_1 = arith.constant 0 : i32
    return %c0_i32, %c0_i32_0 : i32, i32
  }
  func.func @transform_14(%arg0: i32) -> (i32, i32) {
    %c0_i32 = arith.constant 0 : i32
    %c0_i32_0 = arith.constant 0 : i32
    %c0_i32_1 = arith.constant 0 : i32
    return %c0_i32, %c0_i32_0 : i32, i32
  }
  func.func @transform_15(%arg0: i32) -> (i32, i32) {
    %c0_i32 = arith.constant 0 : i32
    %c0_i32_0 = arith.constant 0 : i32
    return %arg0, %c0_i32 : i32, i32
  }
}

</mosaic_0001>

<llo_original>
// kernel: rnn_dense_assembly_forward.1
$region0: #{rnn_dense_assembly_forward.1}
  #allocation0 [shape = 'u32[]', space=smem, size = 0x4, offset = 0x4, fixed_abs, tag = 'smem constant byte address 0x4 - core index']
  #allocation1 [shape = 'u32[72,128]{1,0:T(1,128)}', space=vmem, size = 0x9000, scoped, tag = 'internal scratch']
  %s0 = inlined_call_operand.vmem [shape: f32[16,8,4], index: 0, kind: input, shape index: {}]
  %s1 = inlined_call_operand.vmem [shape: f32[4,96], index: 1, kind: input, shape index: {}]
  %s2 = inlined_call_operand.vmem [shape: f32[32,96], index: 2, kind: input, shape index: {}]
  %s3 = inlined_call_operand.vmem [shape: f32[1,96], index: 3, kind: input, shape index: {}]
  %s4 = inlined_call_operand.vmem [shape: f32[1,32], index: 4, kind: input, shape index: {}]
  %s5 = inlined_call_operand.vmem [shape: f32[32,96], index: 5, kind: input, shape index: {}]
  %s6 = inlined_call_operand.vmem [shape: f32[32,96], index: 6, kind: input, shape index: {}]
  %s7 = inlined_call_operand.vmem [shape: f32[1,96], index: 7, kind: input, shape index: {}]
  %s8 = inlined_call_operand.vmem [shape: f32[1,32], index: 8, kind: input, shape index: {}]
  %s9 = inlined_call_operand.vmem [shape: f32[32,32], index: 9, kind: input, shape index: {}]
  %s10 = inlined_call_operand.vmem [shape: f32[1,32], index: 10, kind: input, shape index: {}]
  %s11 = inlined_call_operand.vmem [shape: f32[32,16], index: 11, kind: input, shape index: {}]
  %s12 = inlined_call_operand.vmem [shape: f32[1,16], index: 12, kind: input, shape index: {}]
  %s13 = inlined_call_operand.vmem [shape: f32[16,5], index: 13, kind: input, shape index: {}]
  %s14 = inlined_call_operand.vmem [shape: f32[1,5], index: 14, kind: input, shape index: {}]
  %s15 = inlined_call_operand.vmem [shape: f32[8,5], index: 15, kind: output, shape index: {}]
  %s16 = sld [smem:[#allocation0]]
  $region70: #{rnn_dense_assembly_forward.1} parent=0
    _
  %s18 = ssub.s32 1, %s16
  %s19 = scalar_select 0, %s18, %s16
  // Predicated region
  $region2: #{rnn_dense_assembly_forward.1} parent=0 // pred_check
    _
  $region3: #{rnn_dense_assembly_forward.1} parent=0 // pred_check_branch
    %21 = sbr.rel (0) target = $region5
  $region4: #{rnn_dense_assembly_forward.1} parent=0 // pred_region
    _
  $region5: #{rnn_dense_assembly_forward.1} parent=0 // pred_fallthru
    _
  // Predicated region
  $region6: #{rnn_dense_assembly_forward.1} parent=0 // pred_check
    _
  $region7: #{rnn_dense_assembly_forward.1} parent=0 // pred_check_branch
    %23 = sbr.rel (0) target = $region9
  $region8: #{rnn_dense_assembly_forward.1} parent=0 // pred_region
    _
  $region9: #{rnn_dense_assembly_forward.1} parent=0 // pred_fallthru
    _
  // Predicated region
  $region10: #{rnn_dense_assembly_forward.1} parent=0 // pred_check
    _
  $region11: #{rnn_dense_assembly_forward.1} parent=0 // pred_check_branch
    %25 = sbr.rel (0) target = $region13
  $region12: #{rnn_dense_assembly_forward.1} parent=0 // pred_region
    _
  $region13: #{rnn_dense_assembly_forward.1} parent=0 // pred_fallthru
    _
  // Predicated region
  $region14: #{rnn_dense_assembly_forward.1} parent=0 // pred_check
    _
  $region15: #{rnn_dense_assembly_forward.1} parent=0 // pred_check_branch
    %27 = sbr.rel (0) target = $region17
  $region16: #{rnn_dense_assembly_forward.1} parent=0 // pred_region
    _
  $region17: #{rnn_dense_assembly_forward.1} parent=0 // pred_fallthru
    _
  // Predicated region
  $region18: #{rnn_dense_assembly_forward.1} parent=0 // pred_check
    _
  $region19: #{rnn_dense_assembly_forward.1} parent=0 // pred_check_branch
    %29 = sbr.rel (0) target = $region21
  $region20: #{rnn_dense_assembly_forward.1} parent=0 // pred_region
    _
  $region21: #{rnn_dense_assembly_forward.1} parent=0 // pred_fallthru
    _
  // Predicated region
  $region22: #{rnn_dense_assembly_forward.1} parent=0 // pred_check
    _
  $region23: #{rnn_dense_assembly_forward.1} parent=0 // pred_check_branch
    %31 = sbr.rel (0) target = $region25
  $region24: #{rnn_dense_assembly_forward.1} parent=0 // pred_region
    _
  $region25: #{rnn_dense_assembly_forward.1} parent=0 // pred_fallthru
    _
  // Predicated region
  $region26: #{rnn_dense_assembly_forward.1} parent=0 // pred_check
    _
  $region27: #{rnn_dense_assembly_forward.1} parent=0 // pred_check_branch
    %33 = sbr.rel (0) target = $region29
  $region28: #{rnn_dense_assembly_forward.1} parent=0 // pred_region
    _
  $region29: #{rnn_dense_assembly_forward.1} parent=0 // pred_fallthru
    _
  // Predicated region
  $region30: #{rnn_dense_assembly_forward.1} parent=0 // pred_check
    _
  $region31: #{rnn_dense_assembly_forward.1} parent=0 // pred_check_branch
    %35 = sbr.rel (0) target = $region33
  $region32: #{rnn_dense_assembly_forward.1} parent=0 // pred_region
    _
  $region33: #{rnn_dense_assembly_forward.1} parent=0 // pred_fallthru
    _
  // Predicated region
  $region34: #{rnn_dense_assembly_forward.1} parent=0 // pred_check
    _
  $region35: #{rnn_dense_assembly_forward.1} parent=0 // pred_check_branch
    %37 = sbr.rel (0) target = $region37
  $region36: #{rnn_dense_assembly_forward.1} parent=0 // pred_region
    _
  $region37: #{rnn_dense_assembly_forward.1} parent=0 // pred_fallthru
    _
  // Predicated region
  $region38: #{rnn_dense_assembly_forward.1} parent=0 // pred_check
    _
  $region39: #{rnn_dense_assembly_forward.1} parent=0 // pred_check_branch
    %39 = sbr.rel (0) target = $region41
  $region40: #{rnn_dense_assembly_forward.1} parent=0 // pred_region
    _
  $region41: #{rnn_dense_assembly_forward.1} parent=0 // pred_fallthru
    _
  // Predicated region
  $region42: #{rnn_dense_assembly_forward.1} parent=0 // pred_check
    _
  $region43: #{rnn_dense_assembly_forward.1} parent=0 // pred_check_branch
    %41 = sbr.rel (0) target = $region45
  $region44: #{rnn_dense_assembly_forward.1} parent=0 // pred_region
    _
  $region45: #{rnn_dense_assembly_forward.1} parent=0 // pred_fallthru
    _
  // Predicated region
  $region46: #{rnn_dense_assembly_forward.1} parent=0 // pred_check
    _
  $region47: #{rnn_dense_assembly_forward.1} parent=0 // pred_check_branch
    %43 = sbr.rel (0) target = $region49
  $region48: #{rnn_dense_assembly_forward.1} parent=0 // pred_region
    _
  $region49: #{rnn_dense_assembly_forward.1} parent=0 // pred_fallthru
    _
  // Predicated region
  $region50: #{rnn_dense_assembly_forward.1} parent=0 // pred_check
    _
  $region51: #{rnn_dense_assembly_forward.1} parent=0 // pred_check_branch
    %45 = sbr.rel (0) target = $region53
  $region52: #{rnn_dense_assembly_forward.1} parent=0 // pred_region
    _
  $region53: #{rnn_dense_assembly_forward.1} parent=0 // pred_fallthru
    _
  // Predicated region
  $region54: #{rnn_dense_assembly_forward.1} parent=0 // pred_check
    _
  $region55: #{rnn_dense_assembly_forward.1} parent=0 // pred_check_branch
    %47 = sbr.rel (0) target = $region57
  $region56: #{rnn_dense_assembly_forward.1} parent=0 // pred_region
    _
  $region57: #{rnn_dense_assembly_forward.1} parent=0 // pred_fallthru
    _
  // Predicated region
  $region58: #{rnn_dense_assembly_forward.1} parent=0 // pred_check
    _
  $region59: #{rnn_dense_assembly_forward.1} parent=0 // pred_check_branch
    %49 = sbr.rel (0) target = $region61
  $region60: #{rnn_dense_assembly_forward.1} parent=0 // pred_region
    _
  $region61: #{rnn_dense_assembly_forward.1} parent=0 // pred_fallthru
    _
  %v50 = vld [vmem:[%s1] sm:$0xf]
  %v51 = vld [vmem:[%s5] sm:$0xff]
  %v52 = vld [vmem:[%s5 + $0x8] sm:$0xff]
  %v53 = vld [vmem:[%s5 + $0x10] sm:$0xff]
  %v54 = vld [vmem:[%s5 + $0x18] sm:$0xff]
  %v55 = vld [vmem:[%s2] sm:$0xff]
  %v56 = vld [vmem:[%s2 + $0x8] sm:$0xff]
  %v57 = vld [vmem:[%s2 + $0x10] sm:$0xff]
  %v58 = vld [vmem:[%s2 + $0x18] sm:$0xff]
  %v59 = vld [vmem:[%s6] sm:$0xff]
  %v60 = vld [vmem:[%s6 + $0x8] sm:$0xff]
  %v61 = vld [vmem:[%s6 + $0x10] sm:$0xff]
  %v62 = vld [vmem:[%s6 + $0x18] sm:$0xff]
  %v63 = vld [vmem:[%s3] sm:$0x1]
  %v65 = vperm.slane %v63, 0
  %v67 = vld [vmem:[%s7] sm:$0x1]
  %v69 = vperm.slane %v67, 0
  %v71 = vld [vmem:[%s4] sm:$0x1]
  %v73 = vperm.slane %v71, 0
  %v74 = vld [vmem:[%s8] sm:$0x1]
  %v76 = vperm.slane %v74, 0
  %v77 = vld [vmem:[%s0] sm:$0xff]
  %vm78 = vcmask 31744
  %v80 = vsel %vm78, %v77, 0
  %vm82 = vcmask 1043456
  %v84 = vsel %vm82, %v50, 0
  %86 = vmatpush.msra.mxu0 0.0
  %87 = vmatpush.msra.mxu0 0.0
  %88 = vmatpush.msra.mxu0 0.0
  %89 = vmatpush.msra.mxu0 0.0
  %90 = vmatpush.msra.mxu0 0.0
  %91 = vmatpush.msra.mxu0 0.0
  %92 = vmatpush.msra.mxu0 0.0
  %93 = vmatpush.msra.mxu0 0.0
  %94 = vmatpush.msra.mxu0 0.0
  %95 = vmatpush.msra.mxu0 0.0
  %96 = vmatpush.msra.mxu0 0.0
  %97 = vmatpush.msra.mxu0 0.0
  %98 = vmatpush.msra.mxu0 0.0
  %99 = vmatpush.msra.mxu0 0.0
  %100 = vmatpush.msra.mxu0 0.0
  %101 = vmatpush.msra.mxu0 %v84
  %102 = vmatmul.f32.gmra.mxu0 %v80
  %v103 = vpop.f32.mrf.mxu0
  %v104 = vadd.f32 %v65, %v103
  %105 = vdwg.mxu0
  %vm106 = vcmask 261120
  %v108 = vsel %vm106, 0.0, 0
  %110 = vmatpush.msra.mxu0 0.0
  %111 = vmatpush.msra.mxu0 0.0
  %112 = vmatpush.msra.mxu0 0.0
  %113 = vmatpush.msra.mxu0 0.0
  %114 = vmatpush.msra.mxu0 0.0
  %115 = vmatpush.msra.mxu0 0.0
  %116 = vmatpush.msra.mxu0 0.0
  %117 = vmatpush.msra.mxu0 0.0
  %118 = vmatpush.msra.mxu0 0.0
  %119 = vmatpush.msra.mxu0 0.0
  %120 = vmatpush.msra.mxu0 0.0
  %121 = vmatpush.msra.mxu0 0.0
  %122 = vmatpush.msra.mxu0 %v58
  %123 = vmatpush.msra.mxu0 %v57
  %124 = vmatpush.msra.mxu0 %v56
  %125 = vmatpush.msra.mxu0 %v55
  %126 = vmatmul.f32.gmra.mxu0 %v108
  %v127 = vpop.f32.mrf.mxu0
  %v128 = vadd.f32 0.0, %v127
  %129 = vdwg.mxu0
  %v130 = vadd.f32 %v104, %v128
  %v131 = vmul.f32 %v130, 0.5
  %v132 = vtanh.pop %v131
  %v133 = vmul.f32 %v132, 0.5
  %v134 = vadd.f32 %v133, 0.5
  %135 = vrot.lane.b32.xlu0 %v73, 64
  %v136 = vpop.permute.xlu0 %135
  %v138 = vadd.f32 %v128, %v136
  %140 = vrot.lane.b32.xlu0 %v138, 64
  %v141 = vpop.permute.xlu0 %140
  %v143 = vmul.f32 %v134, %v141
  %145 = vrot.lane.b32.xlu0 %v143, 64
  %v146 = vpop.permute.xlu0 %145
  %v148 = vadd.f32 %v104, %v146
  %v149 = vtanh.pop %v148
  %v150 = vsub.f32 0.0, %v149
  %152 = vrot.lane.b32.xlu0 %v150, 96
  %v153 = vpop.permute.xlu0 %152
  %v155 = vmul.f32 %v134, %v153
  %157 = vrot.lane.b32.xlu0 %v155, 32
  %v158 = vpop.permute.xlu0 %157
  %v160 = vadd.f32 %v149, %v158
  %162 = vrot.lane.b32.xlu0 %v160, 64
  %v163 = vpop.permute.xlu0 %162
  %v164 = vsel %vm106, %v163, 0
  %166 = vmatpush.msra.mxu0 0.0
  %167 = vmatpush.msra.mxu0 0.0
  %168 = vmatpush.msra.mxu0 0.0
  %169 = vmatpush.msra.mxu0 0.0
  %170 = vmatpush.msra.mxu0 0.0
  %171 = vmatpush.msra.mxu0 0.0
  %172 = vmatpush.msra.mxu0 0.0
  %173 = vmatpush.msra.mxu0 0.0
  %174 = vmatpush.msra.mxu0 0.0
  %175 = vmatpush.msra.mxu0 0.0
  %176 = vmatpush.msra.mxu0 0.0
  %177 = vmatpush.msra.mxu0 0.0
  %178 = vmatpush.msra.mxu0 %v54
  %179 = vmatpush.msra.mxu0 %v53
  %180 = vmatpush.msra.mxu0 %v52
  %181 = vmatpush.msra.mxu0 %v51
  %182 = vmatmul.f32.gmra.mxu0 %v164
  %v183 = vpop.f32.mrf.mxu0
  %v184 = vadd.f32 %v69, %v183
  %185 = vdwg.mxu0
  %186 = vmatpush.msra.mxu0 0.0
  %187 = vmatpush.msra.mxu0 0.0
  %188 = vmatpush.msra.mxu0 0.0
  %189 = vmatpush.msra.mxu0 0.0
  %190 = vmatpush.msra.mxu0 0.0
  %191 = vmatpush.msra.mxu0 0.0
  %192 = vmatpush.msra.mxu0 0.0
  %193 = vmatpush.msra.mxu0 0.0
  %194 = vmatpush.msra.mxu0 0.0
  %195 = vmatpush.msra.mxu0 0.0
  %196 = vmatpush.msra.mxu0 0.0
  %197 = vmatpush.msra.mxu0 0.0
  %198 = vmatpush.msra.mxu0 %v62
  %199 = vmatpush.msra.mxu0 %v61
  %200 = vmatpush.msra.mxu0 %v60
  %201 = vmatpush.msra.mxu0 %v59
  %202 = vmatmul.f32.gmra.mxu0 %v108
  %v203 = vpop.f32.mrf.mxu0
  %v204 = vadd.f32 0.0, %v203
  %205 = vdwg.mxu0
  %v206 = vadd.f32 %v184, %v204
  %v207 = vmul.f32 %v206, 0.5
  %v208 = vtanh.pop %v207
  %v209 = vmul.f32 %v208, 0.5
  %v210 = vadd.f32 %v209, 0.5
  %211 = vrot.lane.b32.xlu0 %v76, 64
  %v212 = vpop.permute.xlu0 %211
  %v214 = vadd.f32 %v204, %v212
  %216 = vrot.lane.b32.xlu0 %v214, 64
  %v217 = vpop.permute.xlu0 %216
  %v219 = vmul.f32 %v210, %v217
  %221 = vrot.lane.b32.xlu0 %v219, 64
  %v222 = vpop.permute.xlu0 %221
  %v224 = vadd.f32 %v184, %v222
  %v225 = vtanh.pop %v224
  %v226 = vsub.f32 0.0, %v225
  %228 = vrot.lane.b32.xlu0 %v226, 96
  %v229 = vpop.permute.xlu0 %228
  %v231 = vmul.f32 %v210, %v229
  %233 = vrot.lane.b32.xlu0 %v231, 32
  %v234 = vpop.permute.xlu0 %233
  %v236 = vadd.f32 %v225, %v234
  %s237 = scalar_lea.vmem %s0, 8
  %v238 = vld [vmem:[%s237] sm:$0xff]
  %v240 = vsel %vm78, %v238, 0
  %242 = vmatpush.msra.mxu0 0.0
  %243 = vmatpush.msra.mxu0 0.0
  %244 = vmatpush.msra.mxu0 0.0
  %245 = vmatpush.msra.mxu0 0.0
  %246 = vmatpush.msra.mxu0 0.0
  %247 = vmatpush.msra.mxu0 0.0
  %248 = vmatpush.msra.mxu0 0.0
  %249 = vmatpush.msra.mxu0 0.0
  %250 = vmatpush.msra.mxu0 0.0
  %251 = vmatpush.msra.mxu0 0.0
  %252 = vmatpush.msra.mxu0 0.0
  %253 = vmatpush.msra.mxu0 0.0
  %254 = vmatpush.msra.mxu0 0.0
  %255 = vmatpush.msra.mxu0 0.0
  %256 = vmatpush.msra.mxu0 0.0
  %257 = vmatpush.msra.mxu0 %v84
  %258 = vmatmul.f32.gmra.mxu0 %v240
  %v259 = vpop.f32.mrf.mxu0
  %v260 = vadd.f32 %v65, %v259
  %261 = vdwg.mxu0
  %262 = vmatpush.msra.mxu0 0.0
  %263 = vmatpush.msra.mxu0 0.0
  %264 = vmatpush.msra.mxu0 0.0
  %265 = vmatpush.msra.mxu0 0.0
  %266 = vmatpush.msra.mxu0 0.0
  %267 = vmatpush.msra.mxu0 0.0
  %268 = vmatpush.msra.mxu0 0.0
  %269 = vmatpush.msra.mxu0 0.0
  %270 = vmatpush.msra.mxu0 0.0
  %271 = vmatpush.msra.mxu0 0.0
  %272 = vmatpush.msra.mxu0 0.0
  %273 = vmatpush.msra.mxu0 0.0
  %274 = vmatpush.msra.mxu0 %v58
  %275 = vmatpush.msra.mxu0 %v57
  %276 = vmatpush.msra.mxu0 %v56
  %277 = vmatpush.msra.mxu0 %v55
  %278 = vmatmul.f32.gmra.mxu0 %v164
  %v279 = vpop.f32.mrf.mxu0
  %v280 = vadd.f32 0.0, %v279
  %281 = vdwg.mxu0
  %v282 = vadd.f32 %v260, %v280
  %v283 = vmul.f32 %v282, 0.5
  %v284 = vtanh.pop %v283
  %v285 = vmul.f32 %v284, 0.5
  %v286 = vadd.f32 %v285, 0.5
  %v287 = vadd.f32 %v280, %v136
  %289 = vrot.lane.b32.xlu0 %v287, 64
  %v290 = vpop.permute.xlu0 %289
  %v292 = vmul.f32 %v286, %v290
  %294 = vrot.lane.b32.xlu0 %v292, 64
  %v295 = vpop.permute.xlu0 %294
  %v297 = vadd.f32 %v260, %v295
  %v298 = vtanh.pop %v297
  %v299 = vsub.f32 %v160, %v298
  %301 = vrot.lane.b32.xlu0 %v299, 96
  %v302 = vpop.permute.xlu0 %301
  %v304 = vmul.f32 %v286, %v302
  %306 = vrot.lane.b32.xlu0 %v304, 32
  %v307 = vpop.permute.xlu0 %306
  %v309 = vadd.f32 %v298, %v307
  %311 = vrot.lane.b32.xlu0 %v309, 64
  %v312 = vpop.permute.xlu0 %311
  %v313 = vsel %vm106, %v312, 0
  %315 = vmatpush.msra.mxu0 0.0
  %316 = vmatpush.msra.mxu0 0.0
  %317 = vmatpush.msra.mxu0 0.0
  %318 = vmatpush.msra.mxu0 0.0
  %319 = vmatpush.msra.mxu0 0.0
  %320 = vmatpush.msra.mxu0 0.0
  %321 = vmatpush.msra.mxu0 0.0
  %322 = vmatpush.msra.mxu0 0.0
  %323 = vmatpush.msra.mxu0 0.0
  %324 = vmatpush.msra.mxu0 0.0
  %325 = vmatpush.msra.mxu0 0.0
  %326 = vmatpush.msra.mxu0 0.0
  %327 = vmatpush.msra.mxu0 %v54
  %328 = vmatpush.msra.mxu0 %v53
  %329 = vmatpush.msra.mxu0 %v52
  %330 = vmatpush.msra.mxu0 %v51
  %331 = vmatmul.f32.gmra.mxu0 %v313
  %v332 = vpop.f32.mrf.mxu0
  %v333 = vadd.f32 %v69, %v332
  %334 = vdwg.mxu0
  %336 = vrot.lane.b32.xlu0 %v236, 64
  %v337 = vpop.permute.xlu0 %336
  %v338 = vsel %vm106, %v337, 0
  %340 = vmatpush.msra.mxu0 0.0
  %341 = vmatpush.msra.mxu0 0.0
  %342 = vmatpush.msra.mxu0 0.0
  %343 = vmatpush.msra.mxu0 0.0
  %344 = vmatpush.msra.mxu0 0.0
  %345 = vmatpush.msra.mxu0 0.0
  %346 = vmatpush.msra.mxu0 0.0
  %347 = vmatpush.msra.mxu0 0.0
  %348 = vmatpush.msra.mxu0 0.0
  %349 = vmatpush.msra.mxu0 0.0
  %350 = vmatpush.msra.mxu0 0.0
  %351 = vmatpush.msra.mxu0 0.0
  %352 = vmatpush.msra.mxu0 %v62
  %353 = vmatpush.msra.mxu0 %v61
  %354 = vmatpush.msra.mxu0 %v60
  %355 = vmatpush.msra.mxu0 %v59
  %356 = vmatmul.f32.gmra.mxu0 %v338
  %v357 = vpop.f32.mrf.mxu0
  %v358 = vadd.f32 0.0, %v357
  %359 = vdwg.mxu0
  %v360 = vadd.f32 %v333, %v358
  %v361 = vmul.f32 %v360, 0.5
  %v362 = vtanh.pop %v361
  %v363 = vmul.f32 %v362, 0.5
  %v364 = vadd.f32 %v363, 0.5
  %v365 = vadd.f32 %v358, %v212
  %367 = vrot.lane.b32.xlu0 %v365, 64
  %v368 = vpop.permute.xlu0 %367
  %v370 = vmul.f32 %v364, %v368
  %372 = vrot.lane.b32.xlu0 %v370, 64
  %v373 = vpop.permute.xlu0 %372
  %v375 = vadd.f32 %v333, %v373
  %v376 = vtanh.pop %v375
  %v377 = vsub.f32 %v236, %v376
  %379 = vrot.lane.b32.xlu0 %v377, 96
  %v380 = vpop.permute.xlu0 %379
  %v382 = vmul.f32 %v364, %v380
  %384 = vrot.lane.b32.xlu0 %v382, 32
  %v385 = vpop.permute.xlu0 %384
  %v387 = vadd.f32 %v376, %v385
  %s388 = scalar_lea.vmem %s0, 16
  %v389 = vld [vmem:[%s388] sm:$0xff]
  %v391 = vsel %vm78, %v389, 0
  %393 = vmatpush.msra.mxu0 0.0
  %394 = vmatpush.msra.mxu0 0.0
  %395 = vmatpush.msra.mxu0 0.0
  %396 = vmatpush.msra.mxu0 0.0
  %397 = vmatpush.msra.mxu0 0.0
  %398 = vmatpush.msra.mxu0 0.0
  %399 = vmatpush.msra.mxu0 0.0
  %400 = vmatpush.msra.mxu0 0.0
  %401 = vmatpush.msra.mxu0 0.0
  %402 = vmatpush.msra.mxu0 0.0
  %403 = vmatpush.msra.mxu0 0.0
  %404 = vmatpush.msra.mxu0 0.0
  %405 = vmatpush.msra.mxu0 0.0
  %406 = vmatpush.msra.mxu0 0.0
  %407 = vmatpush.msra.mxu0 0.0
  %408 = vmatpush.msra.mxu0 %v84
  %409 = vmatmul.f32.gmra.mxu0 %v391
  %v410 = vpop.f32.mrf.mxu0
  %v411 = vadd.f32 %v65, %v410
  %412 = vdwg.mxu0
  %413 = vmatpush.msra.mxu0 0.0
  %414 = vmatpush.msra.mxu0 0.0
  %415 = vmatpush.msra.mxu0 0.0
  %416 = vmatpush.msra.mxu0 0.0
  %417 = vmatpush.msra.mxu0 0.0
  %418 = vmatpush.msra.mxu0 0.0
  %419 = vmatpush.msra.mxu0 0.0
  %420 = vmatpush.msra.mxu0 0.0
  %421 = vmatpush.msra.mxu0 0.0
  %422 = vmatpush.msra.mxu0 0.0
  %423 = vmatpush.msra.mxu0 0.0
  %424 = vmatpush.msra.mxu0 0.0
  %425 = vmatpush.msra.mxu0 %v58
  %426 = vmatpush.msra.mxu0 %v57
  %427 = vmatpush.msra.mxu0 %v56
  %428 = vmatpush.msra.mxu0 %v55
  %429 = vmatmul.f32.gmra.mxu0 %v313
  %v430 = vpop.f32.mrf.mxu0
  %v431 = vadd.f32 0.0, %v430
  %432 = vdwg.mxu0
  %v433 = vadd.f32 %v411, %v431
  %v434 = vmul.f32 %v433, 0.5
  %v435 = vtanh.pop %v434
  %v436 = vmul.f32 %v435, 0.5
  %v437 = vadd.f32 %v436, 0.5
  %v438 = vadd.f32 %v431, %v136
  %440 = vrot.lane.b32.xlu0 %v438, 64
  %v441 = vpop.permute.xlu0 %440
  %v443 = vmul.f32 %v437, %v441
  %445 = vrot.lane.b32.xlu0 %v443, 64
  %v446 = vpop.permute.xlu0 %445
  %v448 = vadd.f32 %v411, %v446
  %v449 = vtanh.pop %v448
  %v450 = vsub.f32 %v309, %v449
  %452 = vrot.lane.b32.xlu0 %v450, 96
  %v453 = vpop.permute.xlu0 %452
  %v455 = vmul.f32 %v437, %v453
  %457 = vrot.lane.b32.xlu0 %v455, 32
  %v458 = vpop.permute.xlu0 %457
  %v460 = vadd.f32 %v449, %v458
  %462 = vrot.lane.b32.xlu0 %v460, 64
  %v463 = vpop.permute.xlu0 %462
  %v464 = vsel %vm106, %v463, 0
  %466 = vmatpush.msra.mxu0 0.0
  %467 = vmatpush.msra.mxu0 0.0
  %468 = vmatpush.msra.mxu0 0.0
  %469 = vmatpush.msra.mxu0 0.0
  %470 = vmatpush.msra.mxu0 0.0
  %471 = vmatpush.msra.mxu0 0.0
  %472 = vmatpush.msra.mxu0 0.0
  %473 = vmatpush.msra.mxu0 0.0
  %474 = vmatpush.msra.mxu0 0.0
  %475 = vmatpush.msra.mxu0 0.0
  %476 = vmatpush.msra.mxu0 0.0
  %477 = vmatpush.msra.mxu0 0.0
  %478 = vmatpush.msra.mxu0 %v54
  %479 = vmatpush.msra.mxu0 %v53
  %480 = vmatpush.msra.mxu0 %v52
  %481 = vmatpush.msra.mxu0 %v51
  %482 = vmatmul.f32.gmra.mxu0 %v464
  %v483 = vpop.f32.mrf.mxu0
  %v484 = vadd.f32 %v69, %v483
  %485 = vdwg.mxu0
  %487 = vrot.lane.b32.xlu0 %v387, 64
  %v488 = vpop.permute.xlu0 %487
  %v489 = vsel %vm106, %v488, 0
  %491 = vmatpush.msra.mxu0 0.0
  %492 = vmatpush.msra.mxu0 0.0
  %493 = vmatpush.msra.mxu0 0.0
  %494 = vmatpush.msra.mxu0 0.0
  %495 = vmatpush.msra.mxu0 0.0
  %496 = vmatpush.msra.mxu0 0.0
  %497 = vmatpush.msra.mxu0 0.0
  %498 = vmatpush.msra.mxu0 0.0
  %499 = vmatpush.msra.mxu0 0.0
  %500 = vmatpush.msra.mxu0 0.0
  %501 = vmatpush.msra.mxu0 0.0
  %502 = vmatpush.msra.mxu0 0.0
  %503 = vmatpush.msra.mxu0 %v62
  %504 = vmatpush.msra.mxu0 %v61
  %505 = vmatpush.msra.mxu0 %v60
  %506 = vmatpush.msra.mxu0 %v59
  %507 = vmatmul.f32.gmra.mxu0 %v489
  %v508 = vpop.f32.mrf.mxu0
  %v509 = vadd.f32 0.0, %v508
  %510 = vdwg.mxu0
  %v511 = vadd.f32 %v484, %v509
  %v512 = vmul.f32 %v511, 0.5
  %v513 = vtanh.pop %v512
  %v514 = vmul.f32 %v513, 0.5
  %v515 = vadd.f32 %v514, 0.5
  %v516 = vadd.f32 %v509, %v212
  %518 = vrot.lane.b32.xlu0 %v516, 64
  %v519 = vpop.permute.xlu0 %518
  %v521 = vmul.f32 %v515, %v519
  %523 = vrot.lane.b32.xlu0 %v521, 64
  %v524 = vpop.permute.xlu0 %523
  %v526 = vadd.f32 %v484, %v524
  %v527 = vtanh.pop %v526
  %v528 = vsub.f32 %v387, %v527
  %530 = vrot.lane.b32.xlu0 %v528, 96
  %v531 = vpop.permute.xlu0 %530
  %v533 = vmul.f32 %v515, %v531
  %535 = vrot.lane.b32.xlu0 %v533, 32
  %v536 = vpop.permute.xlu0 %535
  %v538 = vadd.f32 %v527, %v536
  %s539 = scalar_lea.vmem %s0, 24
  %v540 = vld [vmem:[%s539] sm:$0xff]
  %v542 = vsel %vm78, %v540, 0
  %544 = vmatpush.msra.mxu0 0.0
  %545 = vmatpush.msra.mxu0 0.0
  %546 = vmatpush.msra.mxu0 0.0
  %547 = vmatpush.msra.mxu0 0.0
  %548 = vmatpush.msra.mxu0 0.0
  %549 = vmatpush.msra.mxu0 0.0
  %550 = vmatpush.msra.mxu0 0.0
  %551 = vmatpush.msra.mxu0 0.0
  %552 = vmatpush.msra.mxu0 0.0
  %553 = vmatpush.msra.mxu0 0.0
  %554 = vmatpush.msra.mxu0 0.0
  %555 = vmatpush.msra.mxu0 0.0
  %556 = vmatpush.msra.mxu0 0.0
  %557 = vmatpush.msra.mxu0 0.0
  %558 = vmatpush.msra.mxu0 0.0
  %559 = vmatpush.msra.mxu0 %v84
  %560 = vmatmul.f32.gmra.mxu0 %v542
  %v561 = vpop.f32.mrf.mxu0
  %v562 = vadd.f32 %v65, %v561
  %563 = vdwg.mxu0
  %564 = vmatpush.msra.mxu0 0.0
  %565 = vmatpush.msra.mxu0 0.0
  %566 = vmatpush.msra.mxu0 0.0
  %567 = vmatpush.msra.mxu0 0.0
  %568 = vmatpush.msra.mxu0 0.0
  %569 = vmatpush.msra.mxu0 0.0
  %570 = vmatpush.msra.mxu0 0.0
  %571 = vmatpush.msra.mxu0 0.0
  %572 = vmatpush.msra.mxu0 0.0
  %573 = vmatpush.msra.mxu0 0.0
  %574 = vmatpush.msra.mxu0 0.0
  %575 = vmatpush.msra.mxu0 0.0
  %576 = vmatpush.msra.mxu0 %v58
  %577 = vmatpush.msra.mxu0 %v57
  %578 = vmatpush.msra.mxu0 %v56
  %579 = vmatpush.msra.mxu0 %v55
  %580 = vmatmul.f32.gmra.mxu0 %v464
  %v581 = vpop.f32.mrf.mxu0
  %v582 = vadd.f32 0.0, %v581
  %583 = vdwg.mxu0
  %v584 = vadd.f32 %v562, %v582
  %v585 = vmul.f32 %v584, 0.5
  %v586 = vtanh.pop %v585
  %v587 = vmul.f32 %v586, 0.5
  %v588 = vadd.f32 %v587, 0.5
  %v589 = vadd.f32 %v582, %v136
  %591 = vrot.lane.b32.xlu0 %v589, 64
  %v592 = vpop.permute.xlu0 %591
  %v594 = vmul.f32 %v588, %v592
  %596 = vrot.lane.b32.xlu0 %v594, 64
  %v597 = vpop.permute.xlu0 %596
  %v599 = vadd.f32 %v562, %v597
  %v600 = vtanh.pop %v599
  %v601 = vsub.f32 %v460, %v600
  %603 = vrot.lane.b32.xlu0 %v601, 96
  %v604 = vpop.permute.xlu0 %603
  %v606 = vmul.f32 %v588, %v604
  %608 = vrot.lane.b32.xlu0 %v606, 32
  %v609 = vpop.permute.xlu0 %608
  %v611 = vadd.f32 %v600, %v609
  %613 = vrot.lane.b32.xlu0 %v611, 64
  %v614 = vpop.permute.xlu0 %613
  %v615 = vsel %vm106, %v614, 0
  %617 = vmatpush.msra.mxu0 0.0
  %618 = vmatpush.msra.mxu0 0.0
  %619 = vmatpush.msra.mxu0 0.0
  %620 = vmatpush.msra.mxu0 0.0
  %621 = vmatpush.msra.mxu0 0.0
  %622 = vmatpush.msra.mxu0 0.0
  %623 = vmatpush.msra.mxu0 0.0
  %624 = vmatpush.msra.mxu0 0.0
  %625 = vmatpush.msra.mxu0 0.0
  %626 = vmatpush.msra.mxu0 0.0
  %627 = vmatpush.msra.mxu0 0.0
  %628 = vmatpush.msra.mxu0 0.0
  %629 = vmatpush.msra.mxu0 %v54
  %630 = vmatpush.msra.mxu0 %v53
  %631 = vmatpush.msra.mxu0 %v52
  %632 = vmatpush.msra.mxu0 %v51
  %633 = vmatmul.f32.gmra.mxu0 %v615
  %v634 = vpop.f32.mrf.mxu0
  %v635 = vadd.f32 %v69, %v634
  %636 = vdwg.mxu0
  %638 = vrot.lane.b32.xlu0 %v538, 64
  %v639 = vpop.permute.xlu0 %638
  %v640 = vsel %vm106, %v639, 0
  %642 = vmatpush.msra.mxu0 0.0
  %643 = vmatpush.msra.mxu0 0.0
  %644 = vmatpush.msra.mxu0 0.0
  %645 = vmatpush.msra.mxu0 0.0
  %646 = vmatpush.msra.mxu0 0.0
  %647 = vmatpush.msra.mxu0 0.0
  %648 = vmatpush.msra.mxu0 0.0
  %649 = vmatpush.msra.mxu0 0.0
  %650 = vmatpush.msra.mxu0 0.0
  %651 = vmatpush.msra.mxu0 0.0
  %652 = vmatpush.msra.mxu0 0.0
  %653 = vmatpush.msra.mxu0 0.0
  %654 = vmatpush.msra.mxu0 %v62
  %655 = vmatpush.msra.mxu0 %v61
  %656 = vmatpush.msra.mxu0 %v60
  %657 = vmatpush.msra.mxu0 %v59
  %658 = vmatmul.f32.gmra.mxu0 %v640
  %v659 = vpop.f32.mrf.mxu0
  %v660 = vadd.f32 0.0, %v659
  %661 = vdwg.mxu0
  %v662 = vadd.f32 %v635, %v660
  %v663 = vmul.f32 %v662, 0.5
  %v664 = vtanh.pop %v663
  %v665 = vmul.f32 %v664, 0.5
  %v666 = vadd.f32 %v665, 0.5
  %v667 = vadd.f32 %v660, %v212
  %669 = vrot.lane.b32.xlu0 %v667, 64
  %v670 = vpop.permute.xlu0 %669
  %v672 = vmul.f32 %v666, %v670
  %674 = vrot.lane.b32.xlu0 %v672, 64
  %v675 = vpop.permute.xlu0 %674
  %v677 = vadd.f32 %v635, %v675
  %v678 = vtanh.pop %v677
  %v679 = vsub.f32 %v538, %v678
  %681 = vrot.lane.b32.xlu0 %v679, 96
  %v682 = vpop.permute.xlu0 %681
  %v684 = vmul.f32 %v666, %v682
  %686 = vrot.lane.b32.xlu0 %v684, 32
  %v687 = vpop.permute.xlu0 %686
  %v689 = vadd.f32 %v678, %v687
  %s690 = scalar_lea.vmem %s0, 32
  %v691 = vld [vmem:[%s690] sm:$0xff]
  %v693 = vsel %vm78, %v691, 0
  %695 = vmatpush.msra.mxu0 0.0
  %696 = vmatpush.msra.mxu0 0.0
  %697 = vmatpush.msra.mxu0 0.0
  %698 = vmatpush.msra.mxu0 0.0
  %699 = vmatpush.msra.mxu0 0.0
  %700 = vmatpush.msra.mxu0 0.0
  %701 = vmatpush.msra.mxu0 0.0
  %702 = vmatpush.msra.mxu0 0.0
  %703 = vmatpush.msra.mxu0 0.0
  %704 = vmatpush.msra.mxu0 0.0
  %705 = vmatpush.msra.mxu0 0.0
  %706 = vmatpush.msra.mxu0 0.0
  %707 = vmatpush.msra.mxu0 0.0
  %708 = vmatpush.msra.mxu0 0.0
  %709 = vmatpush.msra.mxu0 0.0
  %710 = vmatpush.msra.mxu0 %v84
  %711 = vmatmul.f32.gmra.mxu0 %v693
  %v712 = vpop.f32.mrf.mxu0
  %v713 = vadd.f32 %v65, %v712
  %714 = vdwg.mxu0
  %715 = vmatpush.msra.mxu0 0.0
  %716 = vmatpush.msra.mxu0 0.0
  %717 = vmatpush.msra.mxu0 0.0
  %718 = vmatpush.msra.mxu0 0.0
  %719 = vmatpush.msra.mxu0 0.0
  %720 = vmatpush.msra.mxu0 0.0
  %721 = vmatpush.msra.mxu0 0.0
  %722 = vmatpush.msra.mxu0 0.0
  %723 = vmatpush.msra.mxu0 0.0
  %724 = vmatpush.msra.mxu0 0.0
  %725 = vmatpush.msra.mxu0 0.0
  %726 = vmatpush.msra.mxu0 0.0
  %727 = vmatpush.msra.mxu0 %v58
  %728 = vmatpush.msra.mxu0 %v57
  %729 = vmatpush.msra.mxu0 %v56
  %730 = vmatpush.msra.mxu0 %v55
  %731 = vmatmul.f32.gmra.mxu0 %v615
  %v732 = vpop.f32.mrf.mxu0
  %v733 = vadd.f32 0.0, %v732
  %734 = vdwg.mxu0
  %v735 = vadd.f32 %v713, %v733
  %v736 = vmul.f32 %v735, 0.5
  %v737 = vtanh.pop %v736
  %v738 = vmul.f32 %v737, 0.5
  %v739 = vadd.f32 %v738, 0.5
  %v740 = vadd.f32 %v733, %v136
  %742 = vrot.lane.b32.xlu0 %v740, 64
  %v743 = vpop.permute.xlu0 %742
  %v745 = vmul.f32 %v739, %v743
  %747 = vrot.lane.b32.xlu0 %v745, 64
  %v748 = vpop.permute.xlu0 %747
  %v750 = vadd.f32 %v713, %v748
  %v751 = vtanh.pop %v750
  %v752 = vsub.f32 %v611, %v751
  %754 = vrot.lane.b32.xlu0 %v752, 96
  %v755 = vpop.permute.xlu0 %754
  %v757 = vmul.f32 %v739, %v755
  %759 = vrot.lane.b32.xlu0 %v757, 32
  %v760 = vpop.permute.xlu0 %759
  %v762 = vadd.f32 %v751, %v760
  %764 = vrot.lane.b32.xlu0 %v762, 64
  %v765 = vpop.permute.xlu0 %764
  %v766 = vsel %vm106, %v765, 0
  %768 = vmatpush.msra.mxu0 0.0
  %769 = vmatpush.msra.mxu0 0.0
  %770 = vmatpush.msra.mxu0 0.0
  %771 = vmatpush.msra.mxu0 0.0
  %772 = vmatpush.msra.mxu0 0.0
  %773 = vmatpush.msra.mxu0 0.0
  %774 = vmatpush.msra.mxu0 0.0
  %775 = vmatpush.msra.mxu0 0.0
  %776 = vmatpush.msra.mxu0 0.0
  %777 = vmatpush.msra.mxu0 0.0
  %778 = vmatpush.msra.mxu0 0.0
  %779 = vmatpush.msra.mxu0 0.0
  %780 = vmatpush.msra.mxu0 %v54
  %781 = vmatpush.msra.mxu0 %v53
  %782 = vmatpush.msra.mxu0 %v52
  %783 = vmatpush.msra.mxu0 %v51
  %784 = vmatmul.f32.gmra.mxu0 %v766
  %v785 = vpop.f32.mrf.mxu0
  %v786 = vadd.f32 %v69, %v785
  %787 = vdwg.mxu0
  %789 = vrot.lane.b32.xlu0 %v689, 64
  %v790 = vpop.permute.xlu0 %789
  %v791 = vsel %vm106, %v790, 0
  %793 = vmatpush.msra.mxu0 0.0
  %794 = vmatpush.msra.mxu0 0.0
  %795 = vmatpush.msra.mxu0 0.0
  %796 = vmatpush.msra.mxu0 0.0
  %797 = vmatpush.msra.mxu0 0.0
  %798 = vmatpush.msra.mxu0 0.0
  %799 = vmatpush.msra.mxu0 0.0
  %800 = vmatpush.msra.mxu0 0.0
  %801 = vmatpush.msra.mxu0 0.0
  %802 = vmatpush.msra.mxu0 0.0
  %803 = vmatpush.msra.mxu0 0.0
  %804 = vmatpush.msra.mxu0 0.0
  %805 = vmatpush.msra.mxu0 %v62
  %806 = vmatpush.msra.mxu0 %v61
  %807 = vmatpush.msra.mxu0 %v60
  %808 = vmatpush.msra.mxu0 %v59
  %809 = vmatmul.f32.gmra.mxu0 %v791
  %v810 = vpop.f32.mrf.mxu0
  %v811 = vadd.f32 0.0, %v810
  %812 = vdwg.mxu0
  %v813 = vadd.f32 %v786, %v811
  %v814 = vmul.f32 %v813, 0.5
  %v815 = vtanh.pop %v814
  %v816 = vmul.f32 %v815, 0.5
  %v817 = vadd.f32 %v816, 0.5
  %v818 = vadd.f32 %v811, %v212
  %820 = vrot.lane.b32.xlu0 %v818, 64
  %v821 = vpop.permute.xlu0 %820
  %v823 = vmul.f32 %v817, %v821
  %825 = vrot.lane.b32.xlu0 %v823, 64
  %v826 = vpop.permute.xlu0 %825
  %v828 = vadd.f32 %v786, %v826
  %v829 = vtanh.pop %v828
  %v830 = vsub.f32 %v689, %v829
  %832 = vrot.lane.b32.xlu0 %v830, 96
  %v833 = vpop.permute.xlu0 %832
  %v835 = vmul.f32 %v817, %v833
  %837 = vrot.lane.b32.xlu0 %v835, 32
  %v838 = vpop.permute.xlu0 %837
  %v840 = vadd.f32 %v829, %v838
  %s841 = scalar_lea.vmem %s0, 40
  %v842 = vld [vmem:[%s841] sm:$0xff]
  %v844 = vsel %vm78, %v842, 0
  %846 = vmatpush.msra.mxu0 0.0
  %847 = vmatpush.msra.mxu0 0.0
  %848 = vmatpush.msra.mxu0 0.0
  %849 = vmatpush.msra.mxu0 0.0
  %850 = vmatpush.msra.mxu0 0.0
  %851 = vmatpush.msra.mxu0 0.0
  %852 = vmatpush.msra.mxu0 0.0
  %853 = vmatpush.msra.mxu0 0.0
  %854 = vmatpush.msra.mxu0 0.0
  %855 = vmatpush.msra.mxu0 0.0
  %856 = vmatpush.msra.mxu0 0.0
  %857 = vmatpush.msra.mxu0 0.0
  %858 = vmatpush.msra.mxu0 0.0
  %859 = vmatpush.msra.mxu0 0.0
  %860 = vmatpush.msra.mxu0 0.0
  %861 = vmatpush.msra.mxu0 %v84
  %862 = vmatmul.f32.gmra.mxu0 %v844
  %v863 = vpop.f32.mrf.mxu0
  %v864 = vadd.f32 %v65, %v863
  %865 = vdwg.mxu0
  %866 = vmatpush.msra.mxu0 0.0
  %867 = vmatpush.msra.mxu0 0.0
  %868 = vmatpush.msra.mxu0 0.0
  %869 = vmatpush.msra.mxu0 0.0
  %870 = vmatpush.msra.mxu0 0.0
  %871 = vmatpush.msra.mxu0 0.0
  %872 = vmatpush.msra.mxu0 0.0
  %873 = vmatpush.msra.mxu0 0.0
  %874 = vmatpush.msra.mxu0 0.0
  %875 = vmatpush.msra.mxu0 0.0
  %876 = vmatpush.msra.mxu0 0.0
  %877 = vmatpush.msra.mxu0 0.0
  %878 = vmatpush.msra.mxu0 %v58
  %879 = vmatpush.msra.mxu0 %v57
  %880 = vmatpush.msra.mxu0 %v56
  %881 = vmatpush.msra.mxu0 %v55
  %882 = vmatmul.f32.gmra.mxu0 %v766
  %v883 = vpop.f32.mrf.mxu0
  %v884 = vadd.f32 0.0, %v883
  %885 = vdwg.mxu0
  %v886 = vadd.f32 %v864, %v884
  %v887 = vmul.f32 %v886, 0.5
  %v888 = vtanh.pop %v887
  %v889 = vmul.f32 %v888, 0.5
  %v890 = vadd.f32 %v889, 0.5
  %v891 = vadd.f32 %v884, %v136
  %893 = vrot.lane.b32.xlu0 %v891, 64
  %v894 = vpop.permute.xlu0 %893
  %v896 = vmul.f32 %v890, %v894
  %898 = vrot.lane.b32.xlu0 %v896, 64
  %v899 = vpop.permute.xlu0 %898
  %v901 = vadd.f32 %v864, %v899
  %v902 = vtanh.pop %v901
  %v903 = vsub.f32 %v762, %v902
  %905 = vrot.lane.b32.xlu0 %v903, 96
  %v906 = vpop.permute.xlu0 %905
  %v908 = vmul.f32 %v890, %v906
  %910 = vrot.lane.b32.xlu0 %v908, 32
  %v911 = vpop.permute.xlu0 %910
  %v913 = vadd.f32 %v902, %v911
  %915 = vrot.lane.b32.xlu0 %v913, 64
  %v916 = vpop.permute.xlu0 %915
  %v917 = vsel %vm106, %v916, 0
  %919 = vmatpush.msra.mxu0 0.0
  %920 = vmatpush.msra.mxu0 0.0
  %921 = vmatpush.msra.mxu0 0.0
  %922 = vmatpush.msra.mxu0 0.0
  %923 = vmatpush.msra.mxu0 0.0
  %924 = vmatpush.msra.mxu0 0.0
  %925 = vmatpush.msra.mxu0 0.0
  %926 = vmatpush.msra.mxu0 0.0
  %927 = vmatpush.msra.mxu0 0.0
  %928 = vmatpush.msra.mxu0 0.0
  %929 = vmatpush.msra.mxu0 0.0
  %930 = vmatpush.msra.mxu0 0.0
  %931 = vmatpush.msra.mxu0 %v54
  %932 = vmatpush.msra.mxu0 %v53
  %933 = vmatpush.msra.mxu0 %v52
  %934 = vmatpush.msra.mxu0 %v51
  %935 = vmatmul.f32.gmra.mxu0 %v917
  %v936 = vpop.f32.mrf.mxu0
  %v937 = vadd.f32 %v69, %v936
  %938 = vdwg.mxu0
  %940 = vrot.lane.b32.xlu0 %v840, 64
  %v941 = vpop.permute.xlu0 %940
  %v942 = vsel %vm106, %v941, 0
  %944 = vmatpush.msra.mxu0 0.0
  %945 = vmatpush.msra.mxu0 0.0
  %946 = vmatpush.msra.mxu0 0.0
  %947 = vmatpush.msra.mxu0 0.0
  %948 = vmatpush.msra.mxu0 0.0
  %949 = vmatpush.msra.mxu0 0.0
  %950 = vmatpush.msra.mxu0 0.0
  %951 = vmatpush.msra.mxu0 0.0
  %952 = vmatpush.msra.mxu0 0.0
  %953 = vmatpush.msra.mxu0 0.0
  %954 = vmatpush.msra.mxu0 0.0
  %955 = vmatpush.msra.mxu0 0.0
  %956 = vmatpush.msra.mxu0 %v62
  %957 = vmatpush.msra.mxu0 %v61
  %958 = vmatpush.msra.mxu0 %v60
  %959 = vmatpush.msra.mxu0 %v59
  %960 = vmatmul.f32.gmra.mxu0 %v942
  %v961 = vpop.f32.mrf.mxu0
  %v962 = vadd.f32 0.0, %v961
  %963 = vdwg.mxu0
  %v964 = vadd.f32 %v937, %v962
  %v965 = vmul.f32 %v964, 0.5
  %v966 = vtanh.pop %v965
  %v967 = vmul.f32 %v966, 0.5
  %v968 = vadd.f32 %v967, 0.5
  %v969 = vadd.f32 %v962, %v212
  %971 = vrot.lane.b32.xlu0 %v969, 64
  %v972 = vpop.permute.xlu0 %971
  %v974 = vmul.f32 %v968, %v972
  %976 = vrot.lane.b32.xlu0 %v974, 64
  %v977 = vpop.permute.xlu0 %976
  %v979 = vadd.f32 %v937, %v977
  %v980 = vtanh.pop %v979
  %v981 = vsub.f32 %v840, %v980
  %983 = vrot.lane.b32.xlu0 %v981, 96
  %v984 = vpop.permute.xlu0 %983
  %v986 = vmul.f32 %v968, %v984
  %988 = vrot.lane.b32.xlu0 %v986, 32
  %v989 = vpop.permute.xlu0 %988
  %v991 = vadd.f32 %v980, %v989
  %s992 = scalar_lea.vmem %s0, 48
  %v993 = vld [vmem:[%s992] sm:$0xff]
  %v995 = vsel %vm78, %v993, 0
  %997 = vmatpush.msra.mxu0 0.0
  %998 = vmatpush.msra.mxu0 0.0
  %999 = vmatpush.msra.mxu0 0.0
  %1000 = vmatpush.msra.mxu0 0.0
  %1001 = vmatpush.msra.mxu0 0.0
  %1002 = vmatpush.msra.mxu0 0.0
  %1003 = vmatpush.msra.mxu0 0.0
  %1004 = vmatpush.msra.mxu0 0.0
  %1005 = vmatpush.msra.mxu0 0.0
  %1006 = vmatpush.msra.mxu0 0.0
  %1007 = vmatpush.msra.mxu0 0.0
  %1008 = vmatpush.msra.mxu0 0.0
  %1009 = vmatpush.msra.mxu0 0.0
  %1010 = vmatpush.msra.mxu0 0.0
  %1011 = vmatpush.msra.mxu0 0.0
  %1012 = vmatpush.msra.mxu0 %v84
  %1013 = vmatmul.f32.gmra.mxu0 %v995
  %v1014 = vpop.f32.mrf.mxu0
  %v1015 = vadd.f32 %v65, %v1014
  %1016 = vdwg.mxu0
  %1017 = vmatpush.msra.mxu0 0.0
  %1018 = vmatpush.msra.mxu0 0.0
  %1019 = vmatpush.msra.mxu0 0.0
  %1020 = vmatpush.msra.mxu0 0.0
  %1021 = vmatpush.msra.mxu0 0.0
  %1022 = vmatpush.msra.mxu0 0.0
  %1023 = vmatpush.msra.mxu0 0.0
  %1024 = vmatpush.msra.mxu0 0.0
  %1025 = vmatpush.msra.mxu0 0.0
  %1026 = vmatpush.msra.mxu0 0.0
  %1027 = vmatpush.msra.mxu0 0.0
  %1028 = vmatpush.msra.mxu0 0.0
  %1029 = vmatpush.msra.mxu0 %v58
  %1030 = vmatpush.msra.mxu0 %v57
  %1031 = vmatpush.msra.mxu0 %v56
  %1032 = vmatpush.msra.mxu0 %v55
  %1033 = vmatmul.f32.gmra.mxu0 %v917
  %v1034 = vpop.f32.mrf.mxu0
  %v1035 = vadd.f32 0.0, %v1034
  %1036 = vdwg.mxu0
  %v1037 = vadd.f32 %v1015, %v1035
  %v1038 = vmul.f32 %v1037, 0.5
  %v1039 = vtanh.pop %v1038
  %v1040 = vmul.f32 %v1039, 0.5
  %v1041 = vadd.f32 %v1040, 0.5
  %v1042 = vadd.f32 %v1035, %v136
  %1044 = vrot.lane.b32.xlu0 %v1042, 64
  %v1045 = vpop.permute.xlu0 %1044
  %v1047 = vmul.f32 %v1041, %v1045
  %1049 = vrot.lane.b32.xlu0 %v1047, 64
  %v1050 = vpop.permute.xlu0 %1049
  %v1052 = vadd.f32 %v1015, %v1050
  %v1053 = vtanh.pop %v1052
  %v1054 = vsub.f32 %v913, %v1053
  %1056 = vrot.lane.b32.xlu0 %v1054, 96
  %v1057 = vpop.permute.xlu0 %1056
  %v1059 = vmul.f32 %v1041, %v1057
  %1061 = vrot.lane.b32.xlu0 %v1059, 32
  %v1062 = vpop.permute.xlu0 %1061
  %v1064 = vadd.f32 %v1053, %v1062
  %1066 = vrot.lane.b32.xlu0 %v1064, 64
  %v1067 = vpop.permute.xlu0 %1066
  %v1068 = vsel %vm106, %v1067, 0
  %1070 = vmatpush.msra.mxu0 0.0
  %1071 = vmatpush.msra.mxu0 0.0
  %1072 = vmatpush.msra.mxu0 0.0
  %1073 = vmatpush.msra.mxu0 0.0
  %1074 = vmatpush.msra.mxu0 0.0
  %1075 = vmatpush.msra.mxu0 0.0
  %1076 = vmatpush.msra.mxu0 0.0
  %1077 = vmatpush.msra.mxu0 0.0
  %1078 = vmatpush.msra.mxu0 0.0
  %1079 = vmatpush.msra.mxu0 0.0
  %1080 = vmatpush.msra.mxu0 0.0
  %1081 = vmatpush.msra.mxu0 0.0
  %1082 = vmatpush.msra.mxu0 %v54
  %1083 = vmatpush.msra.mxu0 %v53
  %1084 = vmatpush.msra.mxu0 %v52
  %1085 = vmatpush.msra.mxu0 %v51
  %1086 = vmatmul.f32.gmra.mxu0 %v1068
  %v1087 = vpop.f32.mrf.mxu0
  %v1088 = vadd.f32 %v69, %v1087
  %1089 = vdwg.mxu0
  %1091 = vrot.lane.b32.xlu0 %v991, 64
  %v1092 = vpop.permute.xlu0 %1091
  %v1093 = vsel %vm106, %v1092, 0
  %1095 = vmatpush.msra.mxu0 0.0
  %1096 = vmatpush.msra.mxu0 0.0
  %1097 = vmatpush.msra.mxu0 0.0
  %1098 = vmatpush.msra.mxu0 0.0
  %1099 = vmatpush.msra.mxu0 0.0
  %1100 = vmatpush.msra.mxu0 0.0
  %1101 = vmatpush.msra.mxu0 0.0
  %1102 = vmatpush.msra.mxu0 0.0
  %1103 = vmatpush.msra.mxu0 0.0
  %1104 = vmatpush.msra.mxu0 0.0
  %1105 = vmatpush.msra.mxu0 0.0
  %1106 = vmatpush.msra.mxu0 0.0
  %1107 = vmatpush.msra.mxu0 %v62
  %1108 = vmatpush.msra.mxu0 %v61
  %1109 = vmatpush.msra.mxu0 %v60
  %1110 = vmatpush.msra.mxu0 %v59
  %1111 = vmatmul.f32.gmra.mxu0 %v1093
  %v1112 = vpop.f32.mrf.mxu0
  %v1113 = vadd.f32 0.0, %v1112
  %1114 = vdwg.mxu0
  %v1115 = vadd.f32 %v1088, %v1113
  %v1116 = vmul.f32 %v1115, 0.5
  %v1117 = vtanh.pop %v1116
  %v1118 = vmul.f32 %v1117, 0.5
  %v1119 = vadd.f32 %v1118, 0.5
  %v1120 = vadd.f32 %v1113, %v212
  %1122 = vrot.lane.b32.xlu0 %v1120, 64
  %v1123 = vpop.permute.xlu0 %1122
  %v1125 = vmul.f32 %v1119, %v1123
  %1127 = vrot.lane.b32.xlu0 %v1125, 64
  %v1128 = vpop.permute.xlu0 %1127
  %v1130 = vadd.f32 %v1088, %v1128
  %v1131 = vtanh.pop %v1130
  %v1132 = vsub.f32 %v991, %v1131
  %1134 = vrot.lane.b32.xlu0 %v1132, 96
  %v1135 = vpop.permute.xlu0 %1134
  %v1137 = vmul.f32 %v1119, %v1135
  %1139 = vrot.lane.b32.xlu0 %v1137, 32
  %v1140 = vpop.permute.xlu0 %1139
  %v1142 = vadd.f32 %v1131, %v1140
  %s1143 = scalar_lea.vmem %s0, 56
  %v1144 = vld [vmem:[%s1143] sm:$0xff]
  %v1146 = vsel %vm78, %v1144, 0
  %1148 = vmatpush.msra.mxu0 0.0
  %1149 = vmatpush.msra.mxu0 0.0
  %1150 = vmatpush.msra.mxu0 0.0
  %1151 = vmatpush.msra.mxu0 0.0
  %1152 = vmatpush.msra.mxu0 0.0
  %1153 = vmatpush.msra.mxu0 0.0
  %1154 = vmatpush.msra.mxu0 0.0
  %1155 = vmatpush.msra.mxu0 0.0
  %1156 = vmatpush.msra.mxu0 0.0
  %1157 = vmatpush.msra.mxu0 0.0
  %1158 = vmatpush.msra.mxu0 0.0
  %1159 = vmatpush.msra.mxu0 0.0
  %1160 = vmatpush.msra.mxu0 0.0
  %1161 = vmatpush.msra.mxu0 0.0
  %1162 = vmatpush.msra.mxu0 0.0
  %1163 = vmatpush.msra.mxu0 %v84
  %1164 = vmatmul.f32.gmra.mxu0 %v1146
  %v1165 = vpop.f32.mrf.mxu0
  %v1166 = vadd.f32 %v65, %v1165
  %1167 = vdwg.mxu0
  %1168 = vmatpush.msra.mxu0 0.0
  %1169 = vmatpush.msra.mxu0 0.0
  %1170 = vmatpush.msra.mxu0 0.0
  %1171 = vmatpush.msra.mxu0 0.0
  %1172 = vmatpush.msra.mxu0 0.0
  %1173 = vmatpush.msra.mxu0 0.0
  %1174 = vmatpush.msra.mxu0 0.0
  %1175 = vmatpush.msra.mxu0 0.0
  %1176 = vmatpush.msra.mxu0 0.0
  %1177 = vmatpush.msra.mxu0 0.0
  %1178 = vmatpush.msra.mxu0 0.0
  %1179 = vmatpush.msra.mxu0 0.0
  %1180 = vmatpush.msra.mxu0 %v58
  %1181 = vmatpush.msra.mxu0 %v57
  %1182 = vmatpush.msra.mxu0 %v56
  %1183 = vmatpush.msra.mxu0 %v55
  %1184 = vmatmul.f32.gmra.mxu0 %v1068
  %v1185 = vpop.f32.mrf.mxu0
  %v1186 = vadd.f32 0.0, %v1185
  %1187 = vdwg.mxu0
  %v1188 = vadd.f32 %v1166, %v1186
  %v1189 = vmul.f32 %v1188, 0.5
  %v1190 = vtanh.pop %v1189
  %v1191 = vmul.f32 %v1190, 0.5
  %v1192 = vadd.f32 %v1191, 0.5
  %v1193 = vadd.f32 %v1186, %v136
  %1195 = vrot.lane.b32.xlu0 %v1193, 64
  %v1196 = vpop.permute.xlu0 %1195
  %v1198 = vmul.f32 %v1192, %v1196
  %1200 = vrot.lane.b32.xlu0 %v1198, 64
  %v1201 = vpop.permute.xlu0 %1200
  %v1203 = vadd.f32 %v1166, %v1201
  %v1204 = vtanh.pop %v1203
  %v1205 = vsub.f32 %v1064, %v1204
  %1207 = vrot.lane.b32.xlu0 %v1205, 96
  %v1208 = vpop.permute.xlu0 %1207
  %v1210 = vmul.f32 %v1192, %v1208
  %1212 = vrot.lane.b32.xlu0 %v1210, 32
  %v1213 = vpop.permute.xlu0 %1212
  %v1215 = vadd.f32 %v1204, %v1213
  %1217 = vrot.lane.b32.xlu0 %v1215, 64
  %v1218 = vpop.permute.xlu0 %1217
  %v1219 = vsel %vm106, %v1218, 0
  %1221 = vmatpush.msra.mxu0 0.0
  %1222 = vmatpush.msra.mxu0 0.0
  %1223 = vmatpush.msra.mxu0 0.0
  %1224 = vmatpush.msra.mxu0 0.0
  %1225 = vmatpush.msra.mxu0 0.0
  %1226 = vmatpush.msra.mxu0 0.0
  %1227 = vmatpush.msra.mxu0 0.0
  %1228 = vmatpush.msra.mxu0 0.0
  %1229 = vmatpush.msra.mxu0 0.0
  %1230 = vmatpush.msra.mxu0 0.0
  %1231 = vmatpush.msra.mxu0 0.0
  %1232 = vmatpush.msra.mxu0 0.0
  %1233 = vmatpush.msra.mxu0 %v54
  %1234 = vmatpush.msra.mxu0 %v53
  %1235 = vmatpush.msra.mxu0 %v52
  %1236 = vmatpush.msra.mxu0 %v51
  %1237 = vmatmul.f32.gmra.mxu0 %v1219
  %v1238 = vpop.f32.mrf.mxu0
  %v1239 = vadd.f32 %v69, %v1238
  %1240 = vdwg.mxu0
  %1242 = vrot.lane.b32.xlu0 %v1142, 64
  %v1243 = vpop.permute.xlu0 %1242
  %v1244 = vsel %vm106, %v1243, 0
  %1246 = vmatpush.msra.mxu0 0.0
  %1247 = vmatpush.msra.mxu0 0.0
  %1248 = vmatpush.msra.mxu0 0.0
  %1249 = vmatpush.msra.mxu0 0.0
  %1250 = vmatpush.msra.mxu0 0.0
  %1251 = vmatpush.msra.mxu0 0.0
  %1252 = vmatpush.msra.mxu0 0.0
  %1253 = vmatpush.msra.mxu0 0.0
  %1254 = vmatpush.msra.mxu0 0.0
  %1255 = vmatpush.msra.mxu0 0.0
  %1256 = vmatpush.msra.mxu0 0.0
  %1257 = vmatpush.msra.mxu0 0.0
  %1258 = vmatpush.msra.mxu0 %v62
  %1259 = vmatpush.msra.mxu0 %v61
  %1260 = vmatpush.msra.mxu0 %v60
  %1261 = vmatpush.msra.mxu0 %v59
  %1262 = vmatmul.f32.gmra.mxu0 %v1244
  %v1263 = vpop.f32.mrf.mxu0
  %v1264 = vadd.f32 0.0, %v1263
  %1265 = vdwg.mxu0
  %v1266 = vadd.f32 %v1239, %v1264
  %v1267 = vmul.f32 %v1266, 0.5
  %v1268 = vtanh.pop %v1267
  %v1269 = vmul.f32 %v1268, 0.5
  %v1270 = vadd.f32 %v1269, 0.5
  %v1271 = vadd.f32 %v1264, %v212
  %1273 = vrot.lane.b32.xlu0 %v1271, 64
  %v1274 = vpop.permute.xlu0 %1273
  %v1276 = vmul.f32 %v1270, %v1274
  %1278 = vrot.lane.b32.xlu0 %v1276, 64
  %v1279 = vpop.permute.xlu0 %1278
  %v1281 = vadd.f32 %v1239, %v1279
  %v1282 = vtanh.pop %v1281
  %v1283 = vsub.f32 %v1142, %v1282
  %1285 = vrot.lane.b32.xlu0 %v1283, 96
  %v1286 = vpop.permute.xlu0 %1285
  %v1288 = vmul.f32 %v1270, %v1286
  %1290 = vrot.lane.b32.xlu0 %v1288, 32
  %v1291 = vpop.permute.xlu0 %1290
  %v1293 = vadd.f32 %v1282, %v1291
  %s1294 = scalar_lea.vmem %s0, 64
  %v1295 = vld [vmem:[%s1294] sm:$0xff]
  %v1297 = vsel %vm78, %v1295, 0
  %1299 = vmatpush.msra.mxu0 0.0
  %1300 = vmatpush.msra.mxu0 0.0
  %1301 = vmatpush.msra.mxu0 0.0
  %1302 = vmatpush.msra.mxu0 0.0
  %1303 = vmatpush.msra.mxu0 0.0
  %1304 = vmatpush.msra.mxu0 0.0
  %1305 = vmatpush.msra.mxu0 0.0
  %1306 = vmatpush.msra.mxu0 0.0
  %1307 = vmatpush.msra.mxu0 0.0
  %1308 = vmatpush.msra.mxu0 0.0
  %1309 = vmatpush.msra.mxu0 0.0
  %1310 = vmatpush.msra.mxu0 0.0
  %1311 = vmatpush.msra.mxu0 0.0
  %1312 = vmatpush.msra.mxu0 0.0
  %1313 = vmatpush.msra.mxu0 0.0
  %1314 = vmatpush.msra.mxu0 %v84
  %1315 = vmatmul.f32.gmra.mxu0 %v1297
  %v1316 = vpop.f32.mrf.mxu0
  %v1317 = vadd.f32 %v65, %v1316
  %1318 = vdwg.mxu0
  %1319 = vmatpush.msra.mxu0 0.0
  %1320 = vmatpush.msra.mxu0 0.0
  %1321 = vmatpush.msra.mxu0 0.0
  %1322 = vmatpush.msra.mxu0 0.0
  %1323 = vmatpush.msra.mxu0 0.0
  %1324 = vmatpush.msra.mxu0 0.0
  %1325 = vmatpush.msra.mxu0 0.0
  %1326 = vmatpush.msra.mxu0 0.0
  %1327 = vmatpush.msra.mxu0 0.0
  %1328 = vmatpush.msra.mxu0 0.0
  %1329 = vmatpush.msra.mxu0 0.0
  %1330 = vmatpush.msra.mxu0 0.0
  %1331 = vmatpush.msra.mxu0 %v58
  %1332 = vmatpush.msra.mxu0 %v57
  %1333 = vmatpush.msra.mxu0 %v56
  %1334 = vmatpush.msra.mxu0 %v55
  %1335 = vmatmul.f32.gmra.mxu0 %v1219
  %v1336 = vpop.f32.mrf.mxu0
  %v1337 = vadd.f32 0.0, %v1336
  %1338 = vdwg.mxu0
  %v1339 = vadd.f32 %v1317, %v1337
  %v1340 = vmul.f32 %v1339, 0.5
  %v1341 = vtanh.pop %v1340
  %v1342 = vmul.f32 %v1341, 0.5
  %v1343 = vadd.f32 %v1342, 0.5
  %v1344 = vadd.f32 %v1337, %v136
  %1346 = vrot.lane.b32.xlu0 %v1344, 64
  %v1347 = vpop.permute.xlu0 %1346
  %v1349 = vmul.f32 %v1343, %v1347
  %1351 = vrot.lane.b32.xlu0 %v1349, 64
  %v1352 = vpop.permute.xlu0 %1351
  %v1354 = vadd.f32 %v1317, %v1352
  %v1355 = vtanh.pop %v1354
  %v1356 = vsub.f32 %v1215, %v1355
  %1358 = vrot.lane.b32.xlu0 %v1356, 96
  %v1359 = vpop.permute.xlu0 %1358
  %v1361 = vmul.f32 %v1343, %v1359
  %1363 = vrot.lane.b32.xlu0 %v1361, 32
  %v1364 = vpop.permute.xlu0 %1363
  %v1366 = vadd.f32 %v1355, %v1364
  %1368 = vrot.lane.b32.xlu0 %v1366, 64
  %v1369 = vpop.permute.xlu0 %1368
  %v1370 = vsel %vm106, %v1369, 0
  %1372 = vmatpush.msra.mxu0 0.0
  %1373 = vmatpush.msra.mxu0 0.0
  %1374 = vmatpush.msra.mxu0 0.0
  %1375 = vmatpush.msra.mxu0 0.0
  %1376 = vmatpush.msra.mxu0 0.0
  %1377 = vmatpush.msra.mxu0 0.0
  %1378 = vmatpush.msra.mxu0 0.0
  %1379 = vmatpush.msra.mxu0 0.0
  %1380 = vmatpush.msra.mxu0 0.0
  %1381 = vmatpush.msra.mxu0 0.0
  %1382 = vmatpush.msra.mxu0 0.0
  %1383 = vmatpush.msra.mxu0 0.0
  %1384 = vmatpush.msra.mxu0 %v54
  %1385 = vmatpush.msra.mxu0 %v53
  %1386 = vmatpush.msra.mxu0 %v52
  %1387 = vmatpush.msra.mxu0 %v51
  %1388 = vmatmul.f32.gmra.mxu0 %v1370
  %v1389 = vpop.f32.mrf.mxu0
  %v1390 = vadd.f32 %v69, %v1389
  %1391 = vdwg.mxu0
  %1393 = vrot.lane.b32.xlu0 %v1293, 64
  %v1394 = vpop.permute.xlu0 %1393
  %v1395 = vsel %vm106, %v1394, 0
  %1397 = vmatpush.msra.mxu0 0.0
  %1398 = vmatpush.msra.mxu0 0.0
  %1399 = vmatpush.msra.mxu0 0.0
  %1400 = vmatpush.msra.mxu0 0.0
  %1401 = vmatpush.msra.mxu0 0.0
  %1402 = vmatpush.msra.mxu0 0.0
  %1403 = vmatpush.msra.mxu0 0.0
  %1404 = vmatpush.msra.mxu0 0.0
  %1405 = vmatpush.msra.mxu0 0.0
  %1406 = vmatpush.msra.mxu0 0.0
  %1407 = vmatpush.msra.mxu0 0.0
  %1408 = vmatpush.msra.mxu0 0.0
  %1409 = vmatpush.msra.mxu0 %v62
  %1410 = vmatpush.msra.mxu0 %v61
  %1411 = vmatpush.msra.mxu0 %v60
  %1412 = vmatpush.msra.mxu0 %v59
  %1413 = vmatmul.f32.gmra.mxu0 %v1395
  %v1414 = vpop.f32.mrf.mxu0
  %v1415 = vadd.f32 0.0, %v1414
  %1416 = vdwg.mxu0
  %v1417 = vadd.f32 %v1390, %v1415
  %v1418 = vmul.f32 %v1417, 0.5
  %v1419 = vtanh.pop %v1418
  %v1420 = vmul.f32 %v1419, 0.5
  %v1421 = vadd.f32 %v1420, 0.5
  %v1422 = vadd.f32 %v1415, %v212
  %1424 = vrot.lane.b32.xlu0 %v1422, 64
  %v1425 = vpop.permute.xlu0 %1424
  %v1427 = vmul.f32 %v1421, %v1425
  %1429 = vrot.lane.b32.xlu0 %v1427, 64
  %v1430 = vpop.permute.xlu0 %1429
  %v1432 = vadd.f32 %v1390, %v1430
  %v1433 = vtanh.pop %v1432
  %v1434 = vsub.f32 %v1293, %v1433
  %1436 = vrot.lane.b32.xlu0 %v1434, 96
  %v1437 = vpop.permute.xlu0 %1436
  %v1439 = vmul.f32 %v1421, %v1437
  %1441 = vrot.lane.b32.xlu0 %v1439, 32
  %v1442 = vpop.permute.xlu0 %1441
  %v1444 = vadd.f32 %v1433, %v1442
  %s1445 = scalar_lea.vmem %s0, 72
  %v1446 = vld [vmem:[%s1445] sm:$0xff]
  %v1448 = vsel %vm78, %v1446, 0
  %1450 = vmatpush.msra.mxu0 0.0
  %1451 = vmatpush.msra.mxu0 0.0
  %1452 = vmatpush.msra.mxu0 0.0
  %1453 = vmatpush.msra.mxu0 0.0
  %1454 = vmatpush.msra.mxu0 0.0
  %1455 = vmatpush.msra.mxu0 0.0
  %1456 = vmatpush.msra.mxu0 0.0
  %1457 = vmatpush.msra.mxu0 0.0
  %1458 = vmatpush.msra.mxu0 0.0
  %1459 = vmatpush.msra.mxu0 0.0
  %1460 = vmatpush.msra.mxu0 0.0
  %1461 = vmatpush.msra.mxu0 0.0
  %1462 = vmatpush.msra.mxu0 0.0
  %1463 = vmatpush.msra.mxu0 0.0
  %1464 = vmatpush.msra.mxu0 0.0
  %1465 = vmatpush.msra.mxu0 %v84
  %1466 = vmatmul.f32.gmra.mxu0 %v1448
  %v1467 = vpop.f32.mrf.mxu0
  %v1468 = vadd.f32 %v65, %v1467
  %1469 = vdwg.mxu0
  %1470 = vmatpush.msra.mxu0 0.0
  %1471 = vmatpush.msra.mxu0 0.0
  %1472 = vmatpush.msra.mxu0 0.0
  %1473 = vmatpush.msra.mxu0 0.0
  %1474 = vmatpush.msra.mxu0 0.0
  %1475 = vmatpush.msra.mxu0 0.0
  %1476 = vmatpush.msra.mxu0 0.0
  %1477 = vmatpush.msra.mxu0 0.0
  %1478 = vmatpush.msra.mxu0 0.0
  %1479 = vmatpush.msra.mxu0 0.0
  %1480 = vmatpush.msra.mxu0 0.0
  %1481 = vmatpush.msra.mxu0 0.0
  %1482 = vmatpush.msra.mxu0 %v58
  %1483 = vmatpush.msra.mxu0 %v57
  %1484 = vmatpush.msra.mxu0 %v56
  %1485 = vmatpush.msra.mxu0 %v55
  %1486 = vmatmul.f32.gmra.mxu0 %v1370
  %v1487 = vpop.f32.mrf.mxu0
  %v1488 = vadd.f32 0.0, %v1487
  %1489 = vdwg.mxu0
  %v1490 = vadd.f32 %v1468, %v1488
  %v1491 = vmul.f32 %v1490, 0.5
  %v1492 = vtanh.pop %v1491
  %v1493 = vmul.f32 %v1492, 0.5
  %v1494 = vadd.f32 %v1493, 0.5
  %v1495 = vadd.f32 %v1488, %v136
  %1497 = vrot.lane.b32.xlu0 %v1495, 64
  %v1498 = vpop.permute.xlu0 %1497
  %v1500 = vmul.f32 %v1494, %v1498
  %1502 = vrot.lane.b32.xlu0 %v1500, 64
  %v1503 = vpop.permute.xlu0 %1502
  %v1505 = vadd.f32 %v1468, %v1503
  %v1506 = vtanh.pop %v1505
  %v1507 = vsub.f32 %v1366, %v1506
  %1509 = vrot.lane.b32.xlu0 %v1507, 96
  %v1510 = vpop.permute.xlu0 %1509
  %v1512 = vmul.f32 %v1494, %v1510
  %1514 = vrot.lane.b32.xlu0 %v1512, 32
  %v1515 = vpop.permute.xlu0 %1514
  %v1517 = vadd.f32 %v1506, %v1515
  %1519 = vrot.lane.b32.xlu0 %v1517, 64
  %v1520 = vpop.permute.xlu0 %1519
  %v1521 = vsel %vm106, %v1520, 0
  %1523 = vmatpush.msra.mxu0 0.0
  %1524 = vmatpush.msra.mxu0 0.0
  %1525 = vmatpush.msra.mxu0 0.0
  %1526 = vmatpush.msra.mxu0 0.0
  %1527 = vmatpush.msra.mxu0 0.0
  %1528 = vmatpush.msra.mxu0 0.0
  %1529 = vmatpush.msra.mxu0 0.0
  %1530 = vmatpush.msra.mxu0 0.0
  %1531 = vmatpush.msra.mxu0 0.0
  %1532 = vmatpush.msra.mxu0 0.0
  %1533 = vmatpush.msra.mxu0 0.0
  %1534 = vmatpush.msra.mxu0 0.0
  %1535 = vmatpush.msra.mxu0 %v54
  %1536 = vmatpush.msra.mxu0 %v53
  %1537 = vmatpush.msra.mxu0 %v52
  %1538 = vmatpush.msra.mxu0 %v51
  %1539 = vmatmul.f32.gmra.mxu0 %v1521
  %v1540 = vpop.f32.mrf.mxu0
  %v1541 = vadd.f32 %v69, %v1540
  %1542 = vdwg.mxu0
  %1544 = vrot.lane.b32.xlu0 %v1444, 64
  %v1545 = vpop.permute.xlu0 %1544
  %v1546 = vsel %vm106, %v1545, 0
  %1548 = vmatpush.msra.mxu0 0.0
  %1549 = vmatpush.msra.mxu0 0.0
  %1550 = vmatpush.msra.mxu0 0.0
  %1551 = vmatpush.msra.mxu0 0.0
  %1552 = vmatpush.msra.mxu0 0.0
  %1553 = vmatpush.msra.mxu0 0.0
  %1554 = vmatpush.msra.mxu0 0.0
  %1555 = vmatpush.msra.mxu0 0.0
  %1556 = vmatpush.msra.mxu0 0.0
  %1557 = vmatpush.msra.mxu0 0.0
  %1558 = vmatpush.msra.mxu0 0.0
  %1559 = vmatpush.msra.mxu0 0.0
  %1560 = vmatpush.msra.mxu0 %v62
  %1561 = vmatpush.msra.mxu0 %v61
  %1562 = vmatpush.msra.mxu0 %v60
  %1563 = vmatpush.msra.mxu0 %v59
  %1564 = vmatmul.f32.gmra.mxu0 %v1546
  %v1565 = vpop.f32.mrf.mxu0
  %v1566 = vadd.f32 0.0, %v1565
  %1567 = vdwg.mxu0
  %v1568 = vadd.f32 %v1541, %v1566
  %v1569 = vmul.f32 %v1568, 0.5
  %v1570 = vtanh.pop %v1569
  %v1571 = vmul.f32 %v1570, 0.5
  %v1572 = vadd.f32 %v1571, 0.5
  %v1573 = vadd.f32 %v1566, %v212
  %1575 = vrot.lane.b32.xlu0 %v1573, 64
  %v1576 = vpop.permute.xlu0 %1575
  %v1578 = vmul.f32 %v1572, %v1576
  %1580 = vrot.lane.b32.xlu0 %v1578, 64
  %v1581 = vpop.permute.xlu0 %1580
  %v1583 = vadd.f32 %v1541, %v1581
  %v1584 = vtanh.pop %v1583
  %v1585 = vsub.f32 %v1444, %v1584
  %1587 = vrot.lane.b32.xlu0 %v1585, 96
  %v1588 = vpop.permute.xlu0 %1587
  %v1590 = vmul.f32 %v1572, %v1588
  %1592 = vrot.lane.b32.xlu0 %v1590, 32
  %v1593 = vpop.permute.xlu0 %1592
  %v1595 = vadd.f32 %v1584, %v1593
  %s1596 = scalar_lea.vmem %s0, 80
  %v1597 = vld [vmem:[%s1596] sm:$0xff]
  %v1599 = vsel %vm78, %v1597, 0
  %1601 = vmatpush.msra.mxu0 0.0
  %1602 = vmatpush.msra.mxu0 0.0
  %1603 = vmatpush.msra.mxu0 0.0
  %1604 = vmatpush.msra.mxu0 0.0
  %1605 = vmatpush.msra.mxu0 0.0
  %1606 = vmatpush.msra.mxu0 0.0
  %1607 = vmatpush.msra.mxu0 0.0
  %1608 = vmatpush.msra.mxu0 0.0
  %1609 = vmatpush.msra.mxu0 0.0
  %1610 = vmatpush.msra.mxu0 0.0
  %1611 = vmatpush.msra.mxu0 0.0
  %1612 = vmatpush.msra.mxu0 0.0
  %1613 = vmatpush.msra.mxu0 0.0
  %1614 = vmatpush.msra.mxu0 0.0
  %1615 = vmatpush.msra.mxu0 0.0
  %1616 = vmatpush.msra.mxu0 %v84
  %1617 = vmatmul.f32.gmra.mxu0 %v1599
  %v1618 = vpop.f32.mrf.mxu0
  %v1619 = vadd.f32 %v65, %v1618
  %1620 = vdwg.mxu0
  %1621 = vmatpush.msra.mxu0 0.0
  %1622 = vmatpush.msra.mxu0 0.0
  %1623 = vmatpush.msra.mxu0 0.0
  %1624 = vmatpush.msra.mxu0 0.0
  %1625 = vmatpush.msra.mxu0 0.0
  %1626 = vmatpush.msra.mxu0 0.0
  %1627 = vmatpush.msra.mxu0 0.0
  %1628 = vmatpush.msra.mxu0 0.0
  %1629 = vmatpush.msra.mxu0 0.0
  %1630 = vmatpush.msra.mxu0 0.0
  %1631 = vmatpush.msra.mxu0 0.0
  %1632 = vmatpush.msra.mxu0 0.0
  %1633 = vmatpush.msra.mxu0 %v58
  %1634 = vmatpush.msra.mxu0 %v57
  %1635 = vmatpush.msra.mxu0 %v56
  %1636 = vmatpush.msra.mxu0 %v55
  %1637 = vmatmul.f32.gmra.mxu0 %v1521
  %v1638 = vpop.f32.mrf.mxu0
  %v1639 = vadd.f32 0.0, %v1638
  %1640 = vdwg.mxu0
  %v1641 = vadd.f32 %v1619, %v1639
  %v1642 = vmul.f32 %v1641, 0.5
  %v1643 = vtanh.pop %v1642
  %v1644 = vmul.f32 %v1643, 0.5
  %v1645 = vadd.f32 %v1644, 0.5
  %v1646 = vadd.f32 %v1639, %v136
  %1648 = vrot.lane.b32.xlu0 %v1646, 64
  %v1649 = vpop.permute.xlu0 %1648
  %v1651 = vmul.f32 %v1645, %v1649
  %1653 = vrot.lane.b32.xlu0 %v1651, 64
  %v1654 = vpop.permute.xlu0 %1653
  %v1656 = vadd.f32 %v1619, %v1654
  %v1657 = vtanh.pop %v1656
  %v1658 = vsub.f32 %v1517, %v1657
  %1660 = vrot.lane.b32.xlu0 %v1658, 96
  %v1661 = vpop.permute.xlu0 %1660
  %v1663 = vmul.f32 %v1645, %v1661
  %1665 = vrot.lane.b32.xlu0 %v1663, 32
  %v1666 = vpop.permute.xlu0 %1665
  %v1668 = vadd.f32 %v1657, %v1666
  %1670 = vrot.lane.b32.xlu0 %v1668, 64
  %v1671 = vpop.permute.xlu0 %1670
  %v1672 = vsel %vm106, %v1671, 0
  %1674 = vmatpush.msra.mxu0 0.0
  %1675 = vmatpush.msra.mxu0 0.0
  %1676 = vmatpush.msra.mxu0 0.0
  %1677 = vmatpush.msra.mxu0 0.0
  %1678 = vmatpush.msra.mxu0 0.0
  %1679 = vmatpush.msra.mxu0 0.0
  %1680 = vmatpush.msra.mxu0 0.0
  %1681 = vmatpush.msra.mxu0 0.0
  %1682 = vmatpush.msra.mxu0 0.0
  %1683 = vmatpush.msra.mxu0 0.0
  %1684 = vmatpush.msra.mxu0 0.0
  %1685 = vmatpush.msra.mxu0 0.0
  %1686 = vmatpush.msra.mxu0 %v54
  %1687 = vmatpush.msra.mxu0 %v53
  %1688 = vmatpush.msra.mxu0 %v52
  %1689 = vmatpush.msra.mxu0 %v51
  %1690 = vmatmul.f32.gmra.mxu0 %v1672
  %v1691 = vpop.f32.mrf.mxu0
  %v1692 = vadd.f32 %v69, %v1691
  %1693 = vdwg.mxu0
  %1695 = vrot.lane.b32.xlu0 %v1595, 64
  %v1696 = vpop.permute.xlu0 %1695
  %v1697 = vsel %vm106, %v1696, 0
  %1699 = vmatpush.msra.mxu0 0.0
  %1700 = vmatpush.msra.mxu0 0.0
  %1701 = vmatpush.msra.mxu0 0.0
  %1702 = vmatpush.msra.mxu0 0.0
  %1703 = vmatpush.msra.mxu0 0.0
  %1704 = vmatpush.msra.mxu0 0.0
  %1705 = vmatpush.msra.mxu0 0.0
  %1706 = vmatpush.msra.mxu0 0.0
  %1707 = vmatpush.msra.mxu0 0.0
  %1708 = vmatpush.msra.mxu0 0.0
  %1709 = vmatpush.msra.mxu0 0.0
  %1710 = vmatpush.msra.mxu0 0.0
  %1711 = vmatpush.msra.mxu0 %v62
  %1712 = vmatpush.msra.mxu0 %v61
  %1713 = vmatpush.msra.mxu0 %v60
  %1714 = vmatpush.msra.mxu0 %v59
  %1715 = vmatmul.f32.gmra.mxu0 %v1697
  %v1716 = vpop.f32.mrf.mxu0
  %v1717 = vadd.f32 0.0, %v1716
  %1718 = vdwg.mxu0
  %v1719 = vadd.f32 %v1692, %v1717
  %v1720 = vmul.f32 %v1719, 0.5
  %v1721 = vtanh.pop %v1720
  %v1722 = vmul.f32 %v1721, 0.5
  %v1723 = vadd.f32 %v1722, 0.5
  %v1724 = vadd.f32 %v1717, %v212
  %1726 = vrot.lane.b32.xlu0 %v1724, 64
  %v1727 = vpop.permute.xlu0 %1726
  %v1729 = vmul.f32 %v1723, %v1727
  %1731 = vrot.lane.b32.xlu0 %v1729, 64
  %v1732 = vpop.permute.xlu0 %1731
  %v1734 = vadd.f32 %v1692, %v1732
  %v1735 = vtanh.pop %v1734
  %v1736 = vsub.f32 %v1595, %v1735
  %1738 = vrot.lane.b32.xlu0 %v1736, 96
  %v1739 = vpop.permute.xlu0 %1738
  %v1741 = vmul.f32 %v1723, %v1739
  %1743 = vrot.lane.b32.xlu0 %v1741, 32
  %v1744 = vpop.permute.xlu0 %1743
  %v1746 = vadd.f32 %v1735, %v1744
  %s1747 = scalar_lea.vmem %s0, 88
  %v1748 = vld [vmem:[%s1747] sm:$0xff]
  %v1750 = vsel %vm78, %v1748, 0
  %1752 = vmatpush.msra.mxu0 0.0
  %1753 = vmatpush.msra.mxu0 0.0
  %1754 = vmatpush.msra.mxu0 0.0
  %1755 = vmatpush.msra.mxu0 0.0
  %1756 = vmatpush.msra.mxu0 0.0
  %1757 = vmatpush.msra.mxu0 0.0
  %1758 = vmatpush.msra.mxu0 0.0
  %1759 = vmatpush.msra.mxu0 0.0
  %1760 = vmatpush.msra.mxu0 0.0
  %1761 = vmatpush.msra.mxu0 0.0
  %1762 = vmatpush.msra.mxu0 0.0
  %1763 = vmatpush.msra.mxu0 0.0
  %1764 = vmatpush.msra.mxu0 0.0
  %1765 = vmatpush.msra.mxu0 0.0
  %1766 = vmatpush.msra.mxu0 0.0
  %1767 = vmatpush.msra.mxu0 %v84
  %1768 = vmatmul.f32.gmra.mxu0 %v1750
  %v1769 = vpop.f32.mrf.mxu0
  %v1770 = vadd.f32 %v65, %v1769
  %1771 = vdwg.mxu0
  %1772 = vmatpush.msra.mxu0 0.0
  %1773 = vmatpush.msra.mxu0 0.0
  %1774 = vmatpush.msra.mxu0 0.0
  %1775 = vmatpush.msra.mxu0 0.0
  %1776 = vmatpush.msra.mxu0 0.0
  %1777 = vmatpush.msra.mxu0 0.0
  %1778 = vmatpush.msra.mxu0 0.0
  %1779 = vmatpush.msra.mxu0 0.0
  %1780 = vmatpush.msra.mxu0 0.0
  %1781 = vmatpush.msra.mxu0 0.0
  %1782 = vmatpush.msra.mxu0 0.0
  %1783 = vmatpush.msra.mxu0 0.0
  %1784 = vmatpush.msra.mxu0 %v58
  %1785 = vmatpush.msra.mxu0 %v57
  %1786 = vmatpush.msra.mxu0 %v56
  %1787 = vmatpush.msra.mxu0 %v55
  %1788 = vmatmul.f32.gmra.mxu0 %v1672
  %v1789 = vpop.f32.mrf.mxu0
  %v1790 = vadd.f32 0.0, %v1789
  %1791 = vdwg.mxu0
  %v1792 = vadd.f32 %v1770, %v1790
  %v1793 = vmul.f32 %v1792, 0.5
  %v1794 = vtanh.pop %v1793
  %v1795 = vmul.f32 %v1794, 0.5
  %v1796 = vadd.f32 %v1795, 0.5
  %v1797 = vadd.f32 %v1790, %v136
  %1799 = vrot.lane.b32.xlu0 %v1797, 64
  %v1800 = vpop.permute.xlu0 %1799
  %v1802 = vmul.f32 %v1796, %v1800
  %1804 = vrot.lane.b32.xlu0 %v1802, 64
  %v1805 = vpop.permute.xlu0 %1804
  %v1807 = vadd.f32 %v1770, %v1805
  %v1808 = vtanh.pop %v1807
  %v1809 = vsub.f32 %v1668, %v1808
  %1811 = vrot.lane.b32.xlu0 %v1809, 96
  %v1812 = vpop.permute.xlu0 %1811
  %v1814 = vmul.f32 %v1796, %v1812
  %1816 = vrot.lane.b32.xlu0 %v1814, 32
  %v1817 = vpop.permute.xlu0 %1816
  %v1819 = vadd.f32 %v1808, %v1817
  %1821 = vrot.lane.b32.xlu0 %v1819, 64
  %v1822 = vpop.permute.xlu0 %1821
  %v1823 = vsel %vm106, %v1822, 0
  %1825 = vmatpush.msra.mxu0 0.0
  %1826 = vmatpush.msra.mxu0 0.0
  %1827 = vmatpush.msra.mxu0 0.0
  %1828 = vmatpush.msra.mxu0 0.0
  %1829 = vmatpush.msra.mxu0 0.0
  %1830 = vmatpush.msra.mxu0 0.0
  %1831 = vmatpush.msra.mxu0 0.0
  %1832 = vmatpush.msra.mxu0 0.0
  %1833 = vmatpush.msra.mxu0 0.0
  %1834 = vmatpush.msra.mxu0 0.0
  %1835 = vmatpush.msra.mxu0 0.0
  %1836 = vmatpush.msra.mxu0 0.0
  %1837 = vmatpush.msra.mxu0 %v54
  %1838 = vmatpush.msra.mxu0 %v53
  %1839 = vmatpush.msra.mxu0 %v52
  %1840 = vmatpush.msra.mxu0 %v51
  %1841 = vmatmul.f32.gmra.mxu0 %v1823
  %v1842 = vpop.f32.mrf.mxu0
  %v1843 = vadd.f32 %v69, %v1842
  %1844 = vdwg.mxu0
  %1846 = vrot.lane.b32.xlu0 %v1746, 64
  %v1847 = vpop.permute.xlu0 %1846
  %v1848 = vsel %vm106, %v1847, 0
  %1850 = vmatpush.msra.mxu0 0.0
  %1851 = vmatpush.msra.mxu0 0.0
  %1852 = vmatpush.msra.mxu0 0.0
  %1853 = vmatpush.msra.mxu0 0.0
  %1854 = vmatpush.msra.mxu0 0.0
  %1855 = vmatpush.msra.mxu0 0.0
  %1856 = vmatpush.msra.mxu0 0.0
  %1857 = vmatpush.msra.mxu0 0.0
  %1858 = vmatpush.msra.mxu0 0.0
  %1859 = vmatpush.msra.mxu0 0.0
  %1860 = vmatpush.msra.mxu0 0.0
  %1861 = vmatpush.msra.mxu0 0.0
  %1862 = vmatpush.msra.mxu0 %v62
  %1863 = vmatpush.msra.mxu0 %v61
  %1864 = vmatpush.msra.mxu0 %v60
  %1865 = vmatpush.msra.mxu0 %v59
  %1866 = vmatmul.f32.gmra.mxu0 %v1848
  %v1867 = vpop.f32.mrf.mxu0
  %v1868 = vadd.f32 0.0, %v1867
  %1869 = vdwg.mxu0
  %v1870 = vadd.f32 %v1843, %v1868
  %v1871 = vmul.f32 %v1870, 0.5
  %v1872 = vtanh.pop %v1871
  %v1873 = vmul.f32 %v1872, 0.5
  %v1874 = vadd.f32 %v1873, 0.5
  %v1875 = vadd.f32 %v1868, %v212
  %1877 = vrot.lane.b32.xlu0 %v1875, 64
  %v1878 = vpop.permute.xlu0 %1877
  %v1880 = vmul.f32 %v1874, %v1878
  %1882 = vrot.lane.b32.xlu0 %v1880, 64
  %v1883 = vpop.permute.xlu0 %1882
  %v1885 = vadd.f32 %v1843, %v1883
  %v1886 = vtanh.pop %v1885
  %v1887 = vsub.f32 %v1746, %v1886
  %1889 = vrot.lane.b32.xlu0 %v1887, 96
  %v1890 = vpop.permute.xlu0 %1889
  %v1892 = vmul.f32 %v1874, %v1890
  %1894 = vrot.lane.b32.xlu0 %v1892, 32
  %v1895 = vpop.permute.xlu0 %1894
  %v1897 = vadd.f32 %v1886, %v1895
  %s1898 = scalar_lea.vmem %s0, 96
  %v1899 = vld [vmem:[%s1898] sm:$0xff]
  %v1901 = vsel %vm78, %v1899, 0
  %1903 = vmatpush.msra.mxu0 0.0
  %1904 = vmatpush.msra.mxu0 0.0
  %1905 = vmatpush.msra.mxu0 0.0
  %1906 = vmatpush.msra.mxu0 0.0
  %1907 = vmatpush.msra.mxu0 0.0
  %1908 = vmatpush.msra.mxu0 0.0
  %1909 = vmatpush.msra.mxu0 0.0
  %1910 = vmatpush.msra.mxu0 0.0
  %1911 = vmatpush.msra.mxu0 0.0
  %1912 = vmatpush.msra.mxu0 0.0
  %1913 = vmatpush.msra.mxu0 0.0
  %1914 = vmatpush.msra.mxu0 0.0
  %1915 = vmatpush.msra.mxu0 0.0
  %1916 = vmatpush.msra.mxu0 0.0
  %1917 = vmatpush.msra.mxu0 0.0
  %1918 = vmatpush.msra.mxu0 %v84
  %1919 = vmatmul.f32.gmra.mxu0 %v1901
  %v1920 = vpop.f32.mrf.mxu0
  %v1921 = vadd.f32 %v65, %v1920
  %1922 = vdwg.mxu0
  %1923 = vmatpush.msra.mxu0 0.0
  %1924 = vmatpush.msra.mxu0 0.0
  %1925 = vmatpush.msra.mxu0 0.0
  %1926 = vmatpush.msra.mxu0 0.0
  %1927 = vmatpush.msra.mxu0 0.0
  %1928 = vmatpush.msra.mxu0 0.0
  %1929 = vmatpush.msra.mxu0 0.0
  %1930 = vmatpush.msra.mxu0 0.0
  %1931 = vmatpush.msra.mxu0 0.0
  %1932 = vmatpush.msra.mxu0 0.0
  %1933 = vmatpush.msra.mxu0 0.0
  %1934 = vmatpush.msra.mxu0 0.0
  %1935 = vmatpush.msra.mxu0 %v58
  %1936 = vmatpush.msra.mxu0 %v57
  %1937 = vmatpush.msra.mxu0 %v56
  %1938 = vmatpush.msra.mxu0 %v55
  %1939 = vmatmul.f32.gmra.mxu0 %v1823
  %v1940 = vpop.f32.mrf.mxu0
  %v1941 = vadd.f32 0.0, %v1940
  %1942 = vdwg.mxu0
  %v1943 = vadd.f32 %v1921, %v1941
  %v1944 = vmul.f32 %v1943, 0.5
  %v1945 = vtanh.pop %v1944
  %v1946 = vmul.f32 %v1945, 0.5
  %v1947 = vadd.f32 %v1946, 0.5
  %v1948 = vadd.f32 %v1941, %v136
  %1950 = vrot.lane.b32.xlu0 %v1948, 64
  %v1951 = vpop.permute.xlu0 %1950
  %v1953 = vmul.f32 %v1947, %v1951
  %1955 = vrot.lane.b32.xlu0 %v1953, 64
  %v1956 = vpop.permute.xlu0 %1955
  %v1958 = vadd.f32 %v1921, %v1956
  %v1959 = vtanh.pop %v1958
  %v1960 = vsub.f32 %v1819, %v1959
  %1962 = vrot.lane.b32.xlu0 %v1960, 96
  %v1963 = vpop.permute.xlu0 %1962
  %v1965 = vmul.f32 %v1947, %v1963
  %1967 = vrot.lane.b32.xlu0 %v1965, 32
  %v1968 = vpop.permute.xlu0 %1967
  %v1970 = vadd.f32 %v1959, %v1968
  %1972 = vrot.lane.b32.xlu0 %v1970, 64
  %v1973 = vpop.permute.xlu0 %1972
  %v1974 = vsel %vm106, %v1973, 0
  %1976 = vmatpush.msra.mxu0 0.0
  %1977 = vmatpush.msra.mxu0 0.0
  %1978 = vmatpush.msra.mxu0 0.0
  %1979 = vmatpush.msra.mxu0 0.0
  %1980 = vmatpush.msra.mxu0 0.0
  %1981 = vmatpush.msra.mxu0 0.0
  %1982 = vmatpush.msra.mxu0 0.0
  %1983 = vmatpush.msra.mxu0 0.0
  %1984 = vmatpush.msra.mxu0 0.0
  %1985 = vmatpush.msra.mxu0 0.0
  %1986 = vmatpush.msra.mxu0 0.0
  %1987 = vmatpush.msra.mxu0 0.0
  %1988 = vmatpush.msra.mxu0 %v54
  %1989 = vmatpush.msra.mxu0 %v53
  %1990 = vmatpush.msra.mxu0 %v52
  %1991 = vmatpush.msra.mxu0 %v51
  %1992 = vmatmul.f32.gmra.mxu0 %v1974
  %v1993 = vpop.f32.mrf.mxu0
  %v1994 = vadd.f32 %v69, %v1993
  %1995 = vdwg.mxu0
  %1997 = vrot.lane.b32.xlu0 %v1897, 64
  %v1998 = vpop.permute.xlu0 %1997
  %v1999 = vsel %vm106, %v1998, 0
  %2001 = vmatpush.msra.mxu0 0.0
  %2002 = vmatpush.msra.mxu0 0.0
  %2003 = vmatpush.msra.mxu0 0.0
  %2004 = vmatpush.msra.mxu0 0.0
  %2005 = vmatpush.msra.mxu0 0.0
  %2006 = vmatpush.msra.mxu0 0.0
  %2007 = vmatpush.msra.mxu0 0.0
  %2008 = vmatpush.msra.mxu0 0.0
  %2009 = vmatpush.msra.mxu0 0.0
  %2010 = vmatpush.msra.mxu0 0.0
  %2011 = vmatpush.msra.mxu0 0.0
  %2012 = vmatpush.msra.mxu0 0.0
  %2013 = vmatpush.msra.mxu0 %v62
  %2014 = vmatpush.msra.mxu0 %v61
  %2015 = vmatpush.msra.mxu0 %v60
  %2016 = vmatpush.msra.mxu0 %v59
  %2017 = vmatmul.f32.gmra.mxu0 %v1999
  %v2018 = vpop.f32.mrf.mxu0
  %v2019 = vadd.f32 0.0, %v2018
  %2020 = vdwg.mxu0
  %v2021 = vadd.f32 %v1994, %v2019
  %v2022 = vmul.f32 %v2021, 0.5
  %v2023 = vtanh.pop %v2022
  %v2024 = vmul.f32 %v2023, 0.5
  %v2025 = vadd.f32 %v2024, 0.5
  %v2026 = vadd.f32 %v2019, %v212
  %2028 = vrot.lane.b32.xlu0 %v2026, 64
  %v2029 = vpop.permute.xlu0 %2028
  %v2031 = vmul.f32 %v2025, %v2029
  %2033 = vrot.lane.b32.xlu0 %v2031, 64
  %v2034 = vpop.permute.xlu0 %2033
  %v2036 = vadd.f32 %v1994, %v2034
  %v2037 = vtanh.pop %v2036
  %v2038 = vsub.f32 %v1897, %v2037
  %2040 = vrot.lane.b32.xlu0 %v2038, 96
  %v2041 = vpop.permute.xlu0 %2040
  %v2043 = vmul.f32 %v2025, %v2041
  %2045 = vrot.lane.b32.xlu0 %v2043, 32
  %v2046 = vpop.permute.xlu0 %2045
  %v2048 = vadd.f32 %v2037, %v2046
  %s2049 = scalar_lea.vmem %s0, 104
  %v2050 = vld [vmem:[%s2049] sm:$0xff]
  %v2052 = vsel %vm78, %v2050, 0
  %2054 = vmatpush.msra.mxu0 0.0
  %2055 = vmatpush.msra.mxu0 0.0
  %2056 = vmatpush.msra.mxu0 0.0
  %2057 = vmatpush.msra.mxu0 0.0
  %2058 = vmatpush.msra.mxu0 0.0
  %2059 = vmatpush.msra.mxu0 0.0
  %2060 = vmatpush.msra.mxu0 0.0
  %2061 = vmatpush.msra.mxu0 0.0
  %2062 = vmatpush.msra.mxu0 0.0
  %2063 = vmatpush.msra.mxu0 0.0
  %2064 = vmatpush.msra.mxu0 0.0
  %2065 = vmatpush.msra.mxu0 0.0
  %2066 = vmatpush.msra.mxu0 0.0
  %2067 = vmatpush.msra.mxu0 0.0
  %2068 = vmatpush.msra.mxu0 0.0
  %2069 = vmatpush.msra.mxu0 %v84
  %2070 = vmatmul.f32.gmra.mxu0 %v2052
  %v2071 = vpop.f32.mrf.mxu0
  %v2072 = vadd.f32 %v65, %v2071
  %2073 = vdwg.mxu0
  %2074 = vmatpush.msra.mxu0 0.0
  %2075 = vmatpush.msra.mxu0 0.0
  %2076 = vmatpush.msra.mxu0 0.0
  %2077 = vmatpush.msra.mxu0 0.0
  %2078 = vmatpush.msra.mxu0 0.0
  %2079 = vmatpush.msra.mxu0 0.0
  %2080 = vmatpush.msra.mxu0 0.0
  %2081 = vmatpush.msra.mxu0 0.0
  %2082 = vmatpush.msra.mxu0 0.0
  %2083 = vmatpush.msra.mxu0 0.0
  %2084 = vmatpush.msra.mxu0 0.0
  %2085 = vmatpush.msra.mxu0 0.0
  %2086 = vmatpush.msra.mxu0 %v58
  %2087 = vmatpush.msra.mxu0 %v57
  %2088 = vmatpush.msra.mxu0 %v56
  %2089 = vmatpush.msra.mxu0 %v55
  %2090 = vmatmul.f32.gmra.mxu0 %v1974
  %v2091 = vpop.f32.mrf.mxu0
  %v2092 = vadd.f32 0.0, %v2091
  %2093 = vdwg.mxu0
  %v2094 = vadd.f32 %v2072, %v2092
  %v2095 = vmul.f32 %v2094, 0.5
  %v2096 = vtanh.pop %v2095
  %v2097 = vmul.f32 %v2096, 0.5
  %v2098 = vadd.f32 %v2097, 0.5
  %v2099 = vadd.f32 %v2092, %v136
  %2101 = vrot.lane.b32.xlu0 %v2099, 64
  %v2102 = vpop.permute.xlu0 %2101
  %v2104 = vmul.f32 %v2098, %v2102
  %2106 = vrot.lane.b32.xlu0 %v2104, 64
  %v2107 = vpop.permute.xlu0 %2106
  %v2109 = vadd.f32 %v2072, %v2107
  %v2110 = vtanh.pop %v2109
  %v2111 = vsub.f32 %v1970, %v2110
  %2113 = vrot.lane.b32.xlu0 %v2111, 96
  %v2114 = vpop.permute.xlu0 %2113
  %v2116 = vmul.f32 %v2098, %v2114
  %2118 = vrot.lane.b32.xlu0 %v2116, 32
  %v2119 = vpop.permute.xlu0 %2118
  %v2121 = vadd.f32 %v2110, %v2119
  %2123 = vrot.lane.b32.xlu0 %v2121, 64
  %v2124 = vpop.permute.xlu0 %2123
  %v2125 = vsel %vm106, %v2124, 0
  %2127 = vmatpush.msra.mxu0 0.0
  %2128 = vmatpush.msra.mxu0 0.0
  %2129 = vmatpush.msra.mxu0 0.0
  %2130 = vmatpush.msra.mxu0 0.0
  %2131 = vmatpush.msra.mxu0 0.0
  %2132 = vmatpush.msra.mxu0 0.0
  %2133 = vmatpush.msra.mxu0 0.0
  %2134 = vmatpush.msra.mxu0 0.0
  %2135 = vmatpush.msra.mxu0 0.0
  %2136 = vmatpush.msra.mxu0 0.0
  %2137 = vmatpush.msra.mxu0 0.0
  %2138 = vmatpush.msra.mxu0 0.0
  %2139 = vmatpush.msra.mxu0 %v54
  %2140 = vmatpush.msra.mxu0 %v53
  %2141 = vmatpush.msra.mxu0 %v52
  %2142 = vmatpush.msra.mxu0 %v51
  %2143 = vmatmul.f32.gmra.mxu0 %v2125
  %v2144 = vpop.f32.mrf.mxu0
  %v2145 = vadd.f32 %v69, %v2144
  %2146 = vdwg.mxu0
  %2148 = vrot.lane.b32.xlu0 %v2048, 64
  %v2149 = vpop.permute.xlu0 %2148
  %v2150 = vsel %vm106, %v2149, 0
  %2152 = vmatpush.msra.mxu0 0.0
  %2153 = vmatpush.msra.mxu0 0.0
  %2154 = vmatpush.msra.mxu0 0.0
  %2155 = vmatpush.msra.mxu0 0.0
  %2156 = vmatpush.msra.mxu0 0.0
  %2157 = vmatpush.msra.mxu0 0.0
  %2158 = vmatpush.msra.mxu0 0.0
  %2159 = vmatpush.msra.mxu0 0.0
  %2160 = vmatpush.msra.mxu0 0.0
  %2161 = vmatpush.msra.mxu0 0.0
  %2162 = vmatpush.msra.mxu0 0.0
  %2163 = vmatpush.msra.mxu0 0.0
  %2164 = vmatpush.msra.mxu0 %v62
  %2165 = vmatpush.msra.mxu0 %v61
  %2166 = vmatpush.msra.mxu0 %v60
  %2167 = vmatpush.msra.mxu0 %v59
  %2168 = vmatmul.f32.gmra.mxu0 %v2150
  %v2169 = vpop.f32.mrf.mxu0
  %v2170 = vadd.f32 0.0, %v2169
  %2171 = vdwg.mxu0
  %v2172 = vadd.f32 %v2145, %v2170
  %v2173 = vmul.f32 %v2172, 0.5
  %v2174 = vtanh.pop %v2173
  %v2175 = vmul.f32 %v2174, 0.5
  %v2176 = vadd.f32 %v2175, 0.5
  %v2177 = vadd.f32 %v2170, %v212
  %2179 = vrot.lane.b32.xlu0 %v2177, 64
  %v2180 = vpop.permute.xlu0 %2179
  %v2182 = vmul.f32 %v2176, %v2180
  %2184 = vrot.lane.b32.xlu0 %v2182, 64
  %v2185 = vpop.permute.xlu0 %2184
  %v2187 = vadd.f32 %v2145, %v2185
  %v2188 = vtanh.pop %v2187
  %v2189 = vsub.f32 %v2048, %v2188
  %2191 = vrot.lane.b32.xlu0 %v2189, 96
  %v2192 = vpop.permute.xlu0 %2191
  %v2194 = vmul.f32 %v2176, %v2192
  %2196 = vrot.lane.b32.xlu0 %v2194, 32
  %v2197 = vpop.permute.xlu0 %2196
  %v2199 = vadd.f32 %v2188, %v2197
  %s2200 = scalar_lea.vmem %s0, 112
  %v2201 = vld [vmem:[%s2200] sm:$0xff]
  %v2203 = vsel %vm78, %v2201, 0
  %2205 = vmatpush.msra.mxu0 0.0
  %2206 = vmatpush.msra.mxu0 0.0
  %2207 = vmatpush.msra.mxu0 0.0
  %2208 = vmatpush.msra.mxu0 0.0
  %2209 = vmatpush.msra.mxu0 0.0
  %2210 = vmatpush.msra.mxu0 0.0
  %2211 = vmatpush.msra.mxu0 0.0
  %2212 = vmatpush.msra.mxu0 0.0
  %2213 = vmatpush.msra.mxu0 0.0
  %2214 = vmatpush.msra.mxu0 0.0
  %2215 = vmatpush.msra.mxu0 0.0
  %2216 = vmatpush.msra.mxu0 0.0
  %2217 = vmatpush.msra.mxu0 0.0
  %2218 = vmatpush.msra.mxu0 0.0
  %2219 = vmatpush.msra.mxu0 0.0
  %2220 = vmatpush.msra.mxu0 %v84
  %2221 = vmatmul.f32.gmra.mxu0 %v2203
  %v2222 = vpop.f32.mrf.mxu0
  %v2223 = vadd.f32 %v65, %v2222
  %2224 = vdwg.mxu0
  %2225 = vmatpush.msra.mxu0 0.0
  %2226 = vmatpush.msra.mxu0 0.0
  %2227 = vmatpush.msra.mxu0 0.0
  %2228 = vmatpush.msra.mxu0 0.0
  %2229 = vmatpush.msra.mxu0 0.0
  %2230 = vmatpush.msra.mxu0 0.0
  %2231 = vmatpush.msra.mxu0 0.0
  %2232 = vmatpush.msra.mxu0 0.0
  %2233 = vmatpush.msra.mxu0 0.0
  %2234 = vmatpush.msra.mxu0 0.0
  %2235 = vmatpush.msra.mxu0 0.0
  %2236 = vmatpush.msra.mxu0 0.0
  %2237 = vmatpush.msra.mxu0 %v58
  %2238 = vmatpush.msra.mxu0 %v57
  %2239 = vmatpush.msra.mxu0 %v56
  %2240 = vmatpush.msra.mxu0 %v55
  %2241 = vmatmul.f32.gmra.mxu0 %v2125
  %v2242 = vpop.f32.mrf.mxu0
  %v2243 = vadd.f32 0.0, %v2242
  %2244 = vdwg.mxu0
  %v2245 = vadd.f32 %v2223, %v2243
  %v2246 = vmul.f32 %v2245, 0.5
  %v2247 = vtanh.pop %v2246
  %v2248 = vmul.f32 %v2247, 0.5
  %v2249 = vadd.f32 %v2248, 0.5
  %v2250 = vadd.f32 %v2243, %v136
  %2252 = vrot.lane.b32.xlu0 %v2250, 64
  %v2253 = vpop.permute.xlu0 %2252
  %v2255 = vmul.f32 %v2249, %v2253
  %2257 = vrot.lane.b32.xlu0 %v2255, 64
  %v2258 = vpop.permute.xlu0 %2257
  %v2260 = vadd.f32 %v2223, %v2258
  %v2261 = vtanh.pop %v2260
  %v2262 = vsub.f32 %v2121, %v2261
  %2264 = vrot.lane.b32.xlu0 %v2262, 96
  %v2265 = vpop.permute.xlu0 %2264
  %v2267 = vmul.f32 %v2249, %v2265
  %2269 = vrot.lane.b32.xlu0 %v2267, 32
  %v2270 = vpop.permute.xlu0 %2269
  %v2272 = vadd.f32 %v2261, %v2270
  %2274 = vrot.lane.b32.xlu0 %v2272, 64
  %v2275 = vpop.permute.xlu0 %2274
  %v2276 = vsel %vm106, %v2275, 0
  %2278 = vmatpush.msra.mxu0 0.0
  %2279 = vmatpush.msra.mxu0 0.0
  %2280 = vmatpush.msra.mxu0 0.0
  %2281 = vmatpush.msra.mxu0 0.0
  %2282 = vmatpush.msra.mxu0 0.0
  %2283 = vmatpush.msra.mxu0 0.0
  %2284 = vmatpush.msra.mxu0 0.0
  %2285 = vmatpush.msra.mxu0 0.0
  %2286 = vmatpush.msra.mxu0 0.0
  %2287 = vmatpush.msra.mxu0 0.0
  %2288 = vmatpush.msra.mxu0 0.0
  %2289 = vmatpush.msra.mxu0 0.0
  %2290 = vmatpush.msra.mxu0 %v54
  %2291 = vmatpush.msra.mxu0 %v53
  %2292 = vmatpush.msra.mxu0 %v52
  %2293 = vmatpush.msra.mxu0 %v51
  %2294 = vmatmul.f32.gmra.mxu0 %v2276
  %v2295 = vpop.f32.mrf.mxu0
  %v2296 = vadd.f32 %v69, %v2295
  %2297 = vdwg.mxu0
  %2299 = vrot.lane.b32.xlu0 %v2199, 64
  %v2300 = vpop.permute.xlu0 %2299
  %v2301 = vsel %vm106, %v2300, 0
  %2303 = vmatpush.msra.mxu0 0.0
  %2304 = vmatpush.msra.mxu0 0.0
  %2305 = vmatpush.msra.mxu0 0.0
  %2306 = vmatpush.msra.mxu0 0.0
  %2307 = vmatpush.msra.mxu0 0.0
  %2308 = vmatpush.msra.mxu0 0.0
  %2309 = vmatpush.msra.mxu0 0.0
  %2310 = vmatpush.msra.mxu0 0.0
  %2311 = vmatpush.msra.mxu0 0.0
  %2312 = vmatpush.msra.mxu0 0.0
  %2313 = vmatpush.msra.mxu0 0.0
  %2314 = vmatpush.msra.mxu0 0.0
  %2315 = vmatpush.msra.mxu0 %v62
  %2316 = vmatpush.msra.mxu0 %v61
  %2317 = vmatpush.msra.mxu0 %v60
  %2318 = vmatpush.msra.mxu0 %v59
  %2319 = vmatmul.f32.gmra.mxu0 %v2301
  %v2320 = vpop.f32.mrf.mxu0
  %v2321 = vadd.f32 0.0, %v2320
  %2322 = vdwg.mxu0
  %v2323 = vadd.f32 %v2296, %v2321
  %v2324 = vmul.f32 %v2323, 0.5
  %v2325 = vtanh.pop %v2324
  %v2326 = vmul.f32 %v2325, 0.5
  %v2327 = vadd.f32 %v2326, 0.5
  %v2328 = vadd.f32 %v2321, %v212
  %2330 = vrot.lane.b32.xlu0 %v2328, 64
  %v2331 = vpop.permute.xlu0 %2330
  %v2333 = vmul.f32 %v2327, %v2331
  %2335 = vrot.lane.b32.xlu0 %v2333, 64
  %v2336 = vpop.permute.xlu0 %2335
  %v2338 = vadd.f32 %v2296, %v2336
  %v2339 = vtanh.pop %v2338
  %v2340 = vsub.f32 %v2199, %v2339
  %2342 = vrot.lane.b32.xlu0 %v2340, 96
  %v2343 = vpop.permute.xlu0 %2342
  %v2345 = vmul.f32 %v2327, %v2343
  %2347 = vrot.lane.b32.xlu0 %v2345, 32
  %v2348 = vpop.permute.xlu0 %2347
  %v2350 = vadd.f32 %v2339, %v2348
  %s2351 = scalar_lea.vmem %s0, 120
  %v2352 = vld [vmem:[%s2351] sm:$0xff]
  %v2354 = vsel %vm78, %v2352, 0
  %2356 = vmatpush.msra.mxu0 0.0
  %2357 = vmatpush.msra.mxu0 0.0
  %2358 = vmatpush.msra.mxu0 0.0
  %2359 = vmatpush.msra.mxu0 0.0
  %2360 = vmatpush.msra.mxu0 0.0
  %2361 = vmatpush.msra.mxu0 0.0
  %2362 = vmatpush.msra.mxu0 0.0
  %2363 = vmatpush.msra.mxu0 0.0
  %2364 = vmatpush.msra.mxu0 0.0
  %2365 = vmatpush.msra.mxu0 0.0
  %2366 = vmatpush.msra.mxu0 0.0
  %2367 = vmatpush.msra.mxu0 0.0
  %2368 = vmatpush.msra.mxu0 0.0
  %2369 = vmatpush.msra.mxu0 0.0
  %2370 = vmatpush.msra.mxu0 0.0
  %2371 = vmatpush.msra.mxu0 %v84
  %2372 = vmatmul.f32.gmra.mxu0 %v2354
  %v2373 = vpop.f32.mrf.mxu0
  %v2374 = vadd.f32 %v65, %v2373
  %2375 = vdwg.mxu0
  %2376 = vmatpush.msra.mxu0 0.0
  %2377 = vmatpush.msra.mxu0 0.0
  %2378 = vmatpush.msra.mxu0 0.0
  %2379 = vmatpush.msra.mxu0 0.0
  %2380 = vmatpush.msra.mxu0 0.0
  %2381 = vmatpush.msra.mxu0 0.0
  %2382 = vmatpush.msra.mxu0 0.0
  %2383 = vmatpush.msra.mxu0 0.0
  %2384 = vmatpush.msra.mxu0 0.0
  %2385 = vmatpush.msra.mxu0 0.0
  %2386 = vmatpush.msra.mxu0 0.0
  %2387 = vmatpush.msra.mxu0 0.0
  %2388 = vmatpush.msra.mxu0 %v58
  %2389 = vmatpush.msra.mxu0 %v57
  %2390 = vmatpush.msra.mxu0 %v56
  %2391 = vmatpush.msra.mxu0 %v55
  %2392 = vmatmul.f32.gmra.mxu0 %v2276
  %v2393 = vpop.f32.mrf.mxu0
  %v2394 = vadd.f32 0.0, %v2393
  %2395 = vdwg.mxu0
  %v2396 = vadd.f32 %v2374, %v2394
  %v2397 = vmul.f32 %v2396, 0.5
  %v2398 = vtanh.pop %v2397
  %v2399 = vmul.f32 %v2398, 0.5
  %v2400 = vadd.f32 %v2399, 0.5
  %v2401 = vadd.f32 %v2394, %v136
  %2403 = vrot.lane.b32.xlu0 %v2401, 64
  %v2404 = vpop.permute.xlu0 %2403
  %v2406 = vmul.f32 %v2400, %v2404
  %2408 = vrot.lane.b32.xlu0 %v2406, 64
  %v2409 = vpop.permute.xlu0 %2408
  %v2411 = vadd.f32 %v2374, %v2409
  %v2412 = vtanh.pop %v2411
  %v2413 = vsub.f32 %v2272, %v2412
  %2415 = vrot.lane.b32.xlu0 %v2413, 96
  %v2416 = vpop.permute.xlu0 %2415
  %v2418 = vmul.f32 %v2400, %v2416
  %2420 = vrot.lane.b32.xlu0 %v2418, 32
  %v2421 = vpop.permute.xlu0 %2420
  %v2423 = vadd.f32 %v2412, %v2421
  %2425 = vrot.lane.b32.xlu0 %v2423, 64
  %v2426 = vpop.permute.xlu0 %2425
  %v2427 = vsel %vm106, %v2426, 0
  %2429 = vmatpush.msra.mxu0 0.0
  %2430 = vmatpush.msra.mxu0 0.0
  %2431 = vmatpush.msra.mxu0 0.0
  %2432 = vmatpush.msra.mxu0 0.0
  %2433 = vmatpush.msra.mxu0 0.0
  %2434 = vmatpush.msra.mxu0 0.0
  %2435 = vmatpush.msra.mxu0 0.0
  %2436 = vmatpush.msra.mxu0 0.0
  %2437 = vmatpush.msra.mxu0 0.0
  %2438 = vmatpush.msra.mxu0 0.0
  %2439 = vmatpush.msra.mxu0 0.0
  %2440 = vmatpush.msra.mxu0 0.0
  %2441 = vmatpush.msra.mxu0 %v54
  %2442 = vmatpush.msra.mxu0 %v53
  %2443 = vmatpush.msra.mxu0 %v52
  %2444 = vmatpush.msra.mxu0 %v51
  %2445 = vmatmul.f32.gmra.mxu0 %v2427
  %v2446 = vpop.f32.mrf.mxu0
  %v2447 = vadd.f32 %v69, %v2446
  %2448 = vdwg.mxu0
  %2450 = vrot.lane.b32.xlu0 %v2350, 64
  %v2451 = vpop.permute.xlu0 %2450
  %v2452 = vsel %vm106, %v2451, 0
  %2454 = vmatpush.msra.mxu0 0.0
  %2455 = vmatpush.msra.mxu0 0.0
  %2456 = vmatpush.msra.mxu0 0.0
  %2457 = vmatpush.msra.mxu0 0.0
  %2458 = vmatpush.msra.mxu0 0.0
  %2459 = vmatpush.msra.mxu0 0.0
  %2460 = vmatpush.msra.mxu0 0.0
  %2461 = vmatpush.msra.mxu0 0.0
  %2462 = vmatpush.msra.mxu0 0.0
  %2463 = vmatpush.msra.mxu0 0.0
  %2464 = vmatpush.msra.mxu0 0.0
  %2465 = vmatpush.msra.mxu0 0.0
  %2466 = vmatpush.msra.mxu0 %v62
  %2467 = vmatpush.msra.mxu0 %v61
  %2468 = vmatpush.msra.mxu0 %v60
  %2469 = vmatpush.msra.mxu0 %v59
  %2470 = vmatmul.f32.gmra.mxu0 %v2452
  %v2471 = vpop.f32.mrf.mxu0
  %v2472 = vadd.f32 0.0, %v2471
  %2473 = vdwg.mxu0
  %v2474 = vadd.f32 %v2447, %v2472
  %v2475 = vmul.f32 %v2474, 0.5
  %v2476 = vtanh.pop %v2475
  %v2477 = vmul.f32 %v2476, 0.5
  %v2478 = vadd.f32 %v2477, 0.5
  %v2479 = vadd.f32 %v2472, %v212
  %2481 = vrot.lane.b32.xlu0 %v2479, 64
  %v2482 = vpop.permute.xlu0 %2481
  %v2484 = vmul.f32 %v2478, %v2482
  %2486 = vrot.lane.b32.xlu0 %v2484, 64
  %v2487 = vpop.permute.xlu0 %2486
  %v2489 = vadd.f32 %v2447, %v2487
  %v2490 = vtanh.pop %v2489
  %v2491 = vsub.f32 %v2350, %v2490
  %2493 = vrot.lane.b32.xlu0 %v2491, 96
  %v2494 = vpop.permute.xlu0 %2493
  %v2496 = vmul.f32 %v2478, %v2494
  %2498 = vrot.lane.b32.xlu0 %v2496, 32
  %v2499 = vpop.permute.xlu0 %2498
  %v2501 = vadd.f32 %v2490, %v2499
  %v2502 = vld [vmem:[%s9] sm:$0xff]
  %v2503 = vld [vmem:[%s9 + $0x8] sm:$0xff]
  %v2504 = vld [vmem:[%s9 + $0x10] sm:$0xff]
  %v2505 = vld [vmem:[%s9 + $0x18] sm:$0xff]
  %v2506 = vld [vmem:[%s10] sm:$0x1]
  %v2508 = vperm.slane %v2506, 0
  %2511 = vrot.lane.b32.xlu0 %v2501, 64
  %v2512 = vpop.permute.xlu0 %2511
  %v2513 = vsel %vm106, %v2512, 0
  %2515 = vmatpush.msra.mxu0 0.0
  %2516 = vmatpush.msra.mxu0 0.0
  %2517 = vmatpush.msra.mxu0 0.0
  %2518 = vmatpush.msra.mxu0 0.0
  %2519 = vmatpush.msra.mxu0 0.0
  %2520 = vmatpush.msra.mxu0 0.0
  %2521 = vmatpush.msra.mxu0 0.0
  %2522 = vmatpush.msra.mxu0 0.0
  %2523 = vmatpush.msra.mxu0 0.0
  %2524 = vmatpush.msra.mxu0 0.0
  %2525 = vmatpush.msra.mxu0 0.0
  %2526 = vmatpush.msra.mxu0 0.0
  %2527 = vmatpush.msra.mxu0 %v2505
  %2528 = vmatpush.msra.mxu0 %v2504
  %2529 = vmatpush.msra.mxu0 %v2503
  %2530 = vmatpush.msra.mxu0 %v2502
  %2531 = vmatmul.f32.gmra.mxu0 %v2513
  %v2532 = vpop.f32.mrf.mxu0
  %v2533 = vadd.f32 %v2508, %v2532
  %2534 = vdwg.mxu0
  %v2535 = vmax.f32 %v2533, 0.0
  %v2536 = vld [vmem:[%s11] sm:$0xff]
  %v2537 = vld [vmem:[%s11 + $0x8] sm:$0xff]
  %v2538 = vld [vmem:[%s11 + $0x10] sm:$0xff]
  %v2539 = vld [vmem:[%s11 + $0x18] sm:$0xff]
  %v2540 = vld [vmem:[%s12] sm:$0x1]
  %v2542 = vperm.slane %v2540, 0
  %v2545 = vsel %vm106, %v2535, 0
  %2547 = vmatpush.msra.mxu0 0.0
  %2548 = vmatpush.msra.mxu0 0.0
  %2549 = vmatpush.msra.mxu0 0.0
  %2550 = vmatpush.msra.mxu0 0.0
  %2551 = vmatpush.msra.mxu0 0.0
  %2552 = vmatpush.msra.mxu0 0.0
  %2553 = vmatpush.msra.mxu0 0.0
  %2554 = vmatpush.msra.mxu0 0.0
  %2555 = vmatpush.msra.mxu0 0.0
  %2556 = vmatpush.msra.mxu0 0.0
  %2557 = vmatpush.msra.mxu0 0.0
  %2558 = vmatpush.msra.mxu0 0.0
  %2559 = vmatpush.msra.mxu0 %v2539
  %2560 = vmatpush.msra.mxu0 %v2538
  %2561 = vmatpush.msra.mxu0 %v2537
  %2562 = vmatpush.msra.mxu0 %v2536
  %2563 = vmatmul.f32.gmra.mxu0 %v2545
  %v2564 = vpop.f32.mrf.mxu0
  %v2565 = vadd.f32 %v2542, %v2564
  %2566 = vdwg.mxu0
  %v2567 = vmax.f32 %v2565, 0.0
  %v2568 = vld [vmem:[%s13] sm:$0xff]
  %v2569 = vld [vmem:[%s13 + $0x8] sm:$0xff]
  %v2570 = vld [vmem:[%s14] sm:$0x1]
  %v2572 = vperm.slane %v2570, 0
  %vm2574 = vcmask 130048
  %v2576 = vsel %vm2574, %v2567, 0
  %2578 = vmatpush.msra.mxu0 0.0
  %2579 = vmatpush.msra.mxu0 0.0
  %2580 = vmatpush.msra.mxu0 0.0
  %2581 = vmatpush.msra.mxu0 0.0
  %2582 = vmatpush.msra.mxu0 0.0
  %2583 = vmatpush.msra.mxu0 0.0
  %2584 = vmatpush.msra.mxu0 0.0
  %2585 = vmatpush.msra.mxu0 0.0
  %2586 = vmatpush.msra.mxu0 0.0
  %2587 = vmatpush.msra.mxu0 0.0
  %2588 = vmatpush.msra.mxu0 0.0
  %2589 = vmatpush.msra.mxu0 0.0
  %2590 = vmatpush.msra.mxu0 0.0
  %2591 = vmatpush.msra.mxu0 0.0
  %2592 = vmatpush.msra.mxu0 %v2569
  %2593 = vmatpush.msra.mxu0 %v2568
  %2594 = vmatmul.f32.gmra.mxu0 %v2576
  %v2595 = vpop.f32.mrf.mxu0
  %v2596 = vadd.f32 %v2572, %v2595
  %2597 = vdwg.mxu0
  %vm2598 = vcmask 39936
  %2599 = vst.msk [vmem:[%s15] sm:$0xff] %vm2598, %v2596
  // Predicated region
  $region62: #{rnn_dense_assembly_forward.1} parent=0 // pred_check
    _
  $region63: #{rnn_dense_assembly_forward.1} parent=0 // pred_check_branch
    %2601 = sbr.rel (0) target = $region65
  $region64: #{rnn_dense_assembly_forward.1} parent=0 // pred_region
    _
  $region65: #{rnn_dense_assembly_forward.1} parent=0 // pred_fallthru
    _
  // Predicated region
  $region66: #{rnn_dense_assembly_forward.1} parent=0 // pred_check
    _
  $region67: #{rnn_dense_assembly_forward.1} parent=0 // pred_check_branch
    %2603 = sbr.rel (0) target = $region69
  $region68: #{rnn_dense_assembly_forward.1} parent=0 // pred_region
    _
  $region69: #{rnn_dense_assembly_forward.1} parent=0 // pred_fallthru
    _

</llo_original>
